<compile_context>
chip_gen: v7x
topology: tpu7x:2x2x1
jax: 0.10.0
libtpu: 0.0.40
codegen_flags: <defaults>
</compile_context>

<pallas_src>
import functools

import jax
import jax.numpy as jnp
from jax.experimental import pallas as pl
from jax.experimental.pallas import tpu as pltpu

BN_EPS = 1e-5
IN_FEATURES = 128 * 5 * 5       # 3200
HIDDEN = 128


def _round_up(x, m):
    return (x + m - 1) // m * m


# ---------------------------------------------------------------------------
# Pass 1: Linear(3200 -> 128) per row tile + per-tile partial BN statistics.
#   x_ref   : (tm, 3200)      f32/bf16 (cast to bf16 in-kernel for the MXU)
#   w1_ref  : (3200, 128)     bf16     (VMEM resident across the grid)
#   b1_ref  : (1, 128)        f32
#   ht_ref  : (128, tm)       bf16     hidden activations, stored TRANSPOSED
#   sum_ref : (1, 1, 128)     f32      per-tile per-channel sum
#   sq_ref  : (1, 1, 128)     f32      per-tile per-channel sum of squares
# ---------------------------------------------------------------------------
def linear1_stats_kernel(x_ref, w1_ref, b1_ref, ht_ref, sum_ref, sq_ref, *,
                         n_rows):
    tm = x_ref.shape[0]
    xb = x_ref[...].astype(jnp.bfloat16)                 # in-kernel cast (no HBM copy)
    acc = jnp.dot(xb, w1_ref[...], preferred_element_type=jnp.float32)
    acc = acc + b1_ref[...]                              # Linear1 bias

    # Store hidden activations transposed so pass 2 is lane-major over batch.
    ht_ref[...] = jnp.transpose(acc).astype(ht_ref.dtype)

    # Mask rows beyond the true batch size (ragged last tile) out of BN stats.
    rows = pl.program_id(0) * tm + jax.lax.broadcasted_iota(jnp.int32, (tm, 1), 0)
    valid = rows < n_rows
    accm = jnp.where(valid, acc, 0.0)
    sum_ref[...] = jnp.sum(accm, axis=0).reshape(1, 1, HIDDEN)
    sq_ref[...] = jnp.sum(accm * accm, axis=0).reshape(1, 1, HIDDEN)


# ---------------------------------------------------------------------------
# Pass 2: BN (pre-folded scale/shift) + ReLU + Linear(128,1) + Sigmoid.
#   ht_ref    : (128, tm2)   bf16   transposed hidden activations
#   scale_ref : (128, 1)     f32    gamma / sqrt(var + eps)
#   shift_ref : (128, 1)     f32    beta - mean * scale
#   w2_ref    : (128, 1)     f32
#   b2_ref    : (1, 1)       f32
#   o_ref     : (1, tm2)     f32    lane-dense output row
# ---------------------------------------------------------------------------
def bn_relu_head_kernel(ht_ref, scale_ref, shift_ref, w2_ref, b2_ref, o_ref):
    y = ht_ref[...].astype(jnp.float32) * scale_ref[...] + shift_ref[...]
    y = jnp.maximum(y, 0.0)                              # ReLU
    z = jnp.sum(y * w2_ref[...], axis=0, keepdims=True) + b2_ref[...]   # (1, tm2)
    o_ref[...] = 1.0 / (1.0 + jnp.exp(-z))               # Sigmoid


# ---------------------------------------------------------------------------
# Gd forward
# ---------------------------------------------------------------------------
def gd_forward(features, params, *, row_tile=512, head_tile=2048):
    # RevGrad: identity in the forward pass.
    w1 = params["w1"]                 # (3200, 128)  == PyTorch weight.T
    b1 = params["b1"]                 # (128,)
    gamma = params["bn_gamma"]        # (128,)
    beta = params["bn_beta"]          # (128,)
    w2 = params["w2"]                 # (128,)       == PyTorch weight row
    b2 = params["b2"]                 # (1,)

    n, k = features.shape
    assert k == IN_FEATURES, (n, k)

    # Row tile must be a multiple of 128 (batch axis becomes the lane axis of
    # the transposed hidden activations). Prefer >=2 tiles when the batch
    # allows so the "parallel" grid axis can feed both v7x TensorCores.
    tm = min(_round_up(row_tile, 128), _round_up(n, 128))
    if tm > 128 and pl.cdiv(n, tm) == 1:
        tm = max(128, min(tm, _round_up(pl.cdiv(n, 2), 128)))
    grid1 = pl.cdiv(n, tm)
    m_pad = grid1 * tm

    w1_bf16 = w1.astype(jnp.bfloat16)     # tiny (0.8 MiB), one-time cast

    cparams = pltpu.CompilerParams(
        dimension_semantics=("parallel",),
        vmem_limit_bytes=32 * 1024 * 1024,
    )

    ht, psum, psq = pl.pallas_call(
        functools.partial(linear1_stats_kernel, n_rows=n),
        out_shape=(
            jax.ShapeDtypeStruct((HIDDEN, m_pad), jnp.bfloat16),
            jax.ShapeDtypeStruct((grid1, 1, HIDDEN), jnp.float32),
            jax.ShapeDtypeStruct((grid1, 1, HIDDEN), jnp.float32),
        ),
        grid=(grid1,),
        in_specs=[
            pl.BlockSpec((tm, k), lambda i: (i, 0)),        # x rows (cast in-kernel)
            pl.BlockSpec((k, HIDDEN), lambda i: (0, 0)),    # w1, VMEM resident
            pl.BlockSpec((1, HIDDEN), lambda i: (0, 0)),    # b1
        ],
        out_specs=(
            pl.BlockSpec((HIDDEN, tm), lambda i: (0, i)),   # h^T (bf16)
            pl.BlockSpec((1, 1, HIDDEN), lambda i: (i, 0, 0)),
            pl.BlockSpec((1, 1, HIDDEN), lambda i: (i, 0, 0)),
        ),
        compiler_params=cparams,
    )(features, w1_bf16, b1.reshape(1, HIDDEN))

    # BN(train) finalization hoisted out of the per-tile kernel: fold global
    # mean / var and gamma / beta into a single per-channel scale & shift.
    inv_n = 1.0 / float(n)
    total = jnp.sum(psum[:, 0, :], axis=0)
    total_sq = jnp.sum(psq[:, 0, :], axis=0)
    mean = total * inv_n
    var = total_sq * inv_n - mean * mean            # biased variance (training BN)
    inv_std = jax.lax.rsqrt(var + BN_EPS)
    scale = gamma * inv_std
    shift = beta - mean * scale

    tm2 = min(_round_up(head_tile, 128), m_pad)
    grid2 = pl.cdiv(m_pad, tm2)
    m_out = grid2 * tm2                             # lane-dense, exact output blocks

    out = pl.pallas_call(
        bn_relu_head_kernel,
        out_shape=jax.ShapeDtypeStruct((1, m_out), jnp.float32),
        grid=(grid2,),
        in_specs=[
            pl.BlockSpec((HIDDEN, tm2), lambda i: (0, i)),
            pl.BlockSpec((HIDDEN, 1), lambda i: (0, 0)),
            pl.BlockSpec((HIDDEN, 1), lambda i: (0, 0)),
            pl.BlockSpec((HIDDEN, 1), lambda i: (0, 0)),
            pl.BlockSpec((1, 1), lambda i: (0, 0)),
        ],
        out_specs=pl.BlockSpec((1, tm2), lambda i: (0, i)),
        compiler_params=cparams,
    )(ht, scale.reshape(HIDDEN, 1), shift.reshape(HIDDEN, 1),
      w2.reshape(HIDDEN, 1), b2.reshape(1, 1))

    # .squeeze() on (N, 1) -> (N,).  (PyTorch returns a 0-d tensor when N==1.)
    return out[0, :n]


# ---------------------------------------------------------------------------
# Pure-JAX reference (PyTorch forward semantics, BatchNorm in training mode).
# ---------------------------------------------------------------------------
def gd_reference(features, params):
    x = features.astype(jnp.float32)
    h = x @ params["w1"] + params["b1"]
    mean = jnp.mean(h, axis=0)
    var = jnp.mean(jnp.square(h - mean), axis=0)    # biased, matches BN training
    y = (h - mean) * jax.lax.rsqrt(var + BN_EPS) * params["bn_gamma"] + params["bn_beta"]
    y = jnp.maximum(y, 0.0)
    z = y @ params["w2"] + params["b2"][0]
    return jax.nn.sigmoid(z)


# ---------------------------------------------------------------------------
# Deterministic synthetic params mirroring Gd.__init__ + init_paras.
# (init_paras only touches Conv/BN; Linears keep PyTorch's default init.)
# ---------------------------------------------------------------------------
def init_params(key):
    k1, kb1, k2, k3 = jax.random.split(key, 4)
    bound1 = 1.0 / (IN_FEATURES ** 0.5)
    w1 = jax.random.uniform(k1, (IN_FEATURES, HIDDEN), jnp.float32, -bound1, bound1)
    b1 = jax.random.uniform(kb1, (HIDDEN,), jnp.float32, -bound1, bound1)
    gamma = jnp.ones((HIDDEN,), jnp.float32)        # BN weight = 1 (init_paras)
    beta = jnp.zeros((HIDDEN,), jnp.float32)        # BN bias   = 0 (init_paras)
    bound2 = 1.0 / (HIDDEN ** 0.5)
    w2 = jax.random.uniform(k2, (HIDDEN,), jnp.float32, -bound2, bound2)
    b2 = jax.random.uniform(k3, (1,), jnp.float32, -bound2, bound2)
    return {"w1": w1, "b1": b1, "bn_gamma": gamma, "bn_beta": beta,
            "w2": w2, "b2": b2}


if __name__ == "__main__":
    key = jax.random.PRNGKey(0)
    kx, kp = jax.random.split(key)
    n = 8                                            # small batch (ragged vs tile)
    features = jax.random.normal(kx, (n, IN_FEATURES), jnp.float32)
    params = init_params(kp)

    out = jax.jit(gd_forward)(features, params)
    out = jax.block_until_ready(out)
    assert out.shape == (n,), out.shape
    assert bool(jnp.all(jnp.isfinite(out)))
    assert bool(jnp.all((out >= 0.0) & (out <= 1.0)))   # sigmoid range

    ref = gd_reference(features, params)
    err = float(jnp.max(jnp.abs(out - ref)))
    assert err < 3e-2, err                           # bf16-MXU tolerance

    print("KERNEL_OK")
</pallas_src>

<mosaic_0001>
module attributes {stable_mosaic.version = 11 : i64} {
  func.func @linear1_stats_kernel(%arg0: i32, %arg1: memref<128x3200xf32, #tpu.memory_space<vmem>>, %arg2: memref<3200x128xbf16, #tpu.memory_space<vmem>>, %arg3: memref<1x128xf32, #tpu.memory_space<vmem>>, %arg4: memref<128x128xbf16, #tpu.memory_space<vmem>>, %arg5: memref<1x1x128xf32, #tpu.memory_space<vmem>>, %arg6: memref<1x1x128xf32, #tpu.memory_space<vmem>>) attributes {dimension_semantics = [#tpu.dimension_semantics<parallel>], iteration_bounds = array<i64: 1>, scalar_prefetch = 0 : i64, scratch_operands = 0 : i64, tpu.core_type = #tpu.core_type<tc>, window_params = [{transform_indices = @transform_0, window_bounds = array<i64: 128, 3200>}, {pipeline_mode = #tpu.pipeline_mode<synchronous>, transform_indices = @transform_1, window_bounds = array<i64: 3200, 128>}, {pipeline_mode = #tpu.pipeline_mode<synchronous>, transform_indices = @transform_2, window_bounds = array<i64: 1, 128>}, {transform_indices = @transform_3, window_bounds = array<i64: 128, 128>}, {transform_indices = @transform_4, window_bounds = array<i64: 1, 1, 128>}, {transform_indices = @transform_5, window_bounds = array<i64: 1, 1, 128>}]} {
    %c0 = arith.constant 0 : index
    %c0_0 = arith.constant 0 : index
    %0 = vector.load %arg1[%c0, %c0_0] : memref<128x3200xf32, #tpu.memory_space<vmem>>, vector<128x3200xf32>
    %1 = arith.truncf %0 : vector<128x3200xf32> to vector<128x3200xbf16>
    %c0_1 = arith.constant 0 : index
    %c0_2 = arith.constant 0 : index
    %2 = vector.load %arg2[%c0_1, %c0_2] : memref<3200x128xbf16, #tpu.memory_space<vmem>>, vector<3200x128xbf16>
    %cst = arith.constant dense<0.000000e+00> : vector<128x128xf32>
    %3 = tpu.matmul %1, %2, %cst {dimension_numbers = #tpu.dot_dimension_numbers<[1], [0], [0], [1], [0, 0, 1, 1], [], []>} : vector<128x3200xbf16>, vector<3200x128xbf16>, vector<128x128xf32> -> vector<128x128xf32>
    %c0_3 = arith.constant 0 : index
    %c0_4 = arith.constant 0 : index
    %4 = vector.load %arg3[%c0_3, %c0_4] : memref<1x128xf32, #tpu.memory_space<vmem>>, vector<1x128xf32>
    %5 = vector.broadcast %4 : vector<1x128xf32> to vector<128x128xf32>
    %6 = arith.addf %3, %5 : vector<128x128xf32>
    %7 = tpu.transpose %6, [1, 0] : vector<128x128xf32> -> vector<128x128xf32>
    %8 = arith.truncf %7 : vector<128x128xf32> to vector<128x128xbf16>
    %c0_5 = arith.constant 0 : index
    %c0_6 = arith.constant 0 : index
    %9 = vector.load %arg4[%c0_5, %c0_6] : memref<128x128xbf16, #tpu.memory_space<vmem>>, vector<128x128xbf16>
    tpu.vector_store %arg4[%c0_5, %c0_6], %8 {strides = array<i32>} : memref<128x128xbf16, #tpu.memory_space<vmem>>, vector<128x128xbf16>,
    %c128_i32 = arith.constant 128 : i32
    %10 = arith.muli %arg0, %c128_i32 : i32
    %11 = tpu.iota {dimensions = array<i32: 0>} : vector<128x1xi32>
    %12 = vector.broadcast %10 : i32 to vector<128x1xi32>
    %13 = arith.addi %12, %11 : vector<128x1xi32>
    %c8_i32 = arith.constant 8 : i32
    %14 = vector.broadcast %c8_i32 : i32 to vector<128x1xi32>
    %15 = arith.cmpi slt, %13, %14 : vector<128x1xi32>
    %cst_7 = arith.constant 0.000000e+00 : f32
    %16 = vector.shape_cast %15 : vector<128x1xi1> to vector<128x1xi1>
    %17 = vector.broadcast %16 : vector<128x1xi1> to vector<128x128xi1>
    %18 = vector.broadcast %cst_7 : f32 to vector<128x128xf32>
    %19 = arith.select %17, %6, %18 : vector<128x128xi1>, vector<128x128xf32>
    %cst_8 = arith.constant dense<0.000000e+00> : vector<128xf32>
    %20 = vector.multi_reduction <add>, %19, %cst_8 [0] : vector<128x128xf32> to vector<128xf32>
    %21 = vector.shape_cast %20 : vector<128xf32> to vector<1x1x128xf32>
    %c0_9 = arith.constant 0 : index
    %c0_10 = arith.constant 0 : index
    %c0_11 = arith.constant 0 : index
    %22 = vector.load %arg5[%c0_9, %c0_10, %c0_11] : memref<1x1x128xf32, #tpu.memory_space<vmem>>, vector<1x1x128xf32>
    tpu.vector_store %arg5[%c0_9, %c0_10, %c0_11], %21 {strides = array<i32>} : memref<1x1x128xf32, #tpu.memory_space<vmem>>, vector<1x1x128xf32>,
    %23 = arith.mulf %19, %19 : vector<128x128xf32>
    %cst_12 = arith.constant dense<0.000000e+00> : vector<128xf32>
    %24 = vector.multi_reduction <add>, %23, %cst_12 [0] : vector<128x128xf32> to vector<128xf32>
    %25 = vector.shape_cast %24 : vector<128xf32> to vector<1x1x128xf32>
    %c0_13 = arith.constant 0 : index
    %c0_14 = arith.constant 0 : index
    %c0_15 = arith.constant 0 : index
    %26 = vector.load %arg6[%c0_13, %c0_14, %c0_15] : memref<1x1x128xf32, #tpu.memory_space<vmem>>, vector<1x1x128xf32>
    tpu.vector_store %arg6[%c0_13, %c0_14, %c0_15], %25 {strides = array<i32>} : memref<1x1x128xf32, #tpu.memory_space<vmem>>, vector<1x1x128xf32>,
    return
  }
  func.func @transform_0(%arg0: i32) -> (i32, i32) {
    %c0_i32 = arith.constant 0 : i32
    %c0_i32_0 = arith.constant 0 : i32
    return %arg0, %c0_i32 : i32, i32
  }
  func.func @transform_1(%arg0: i32) -> (i32, i32) {
    %c0_i32 = arith.constant 0 : i32
    %c0_i32_0 = arith.constant 0 : i32
    %c0_i32_1 = arith.constant 0 : i32
    return %c0_i32, %c0_i32_0 : i32, i32
  }
  func.func @transform_2(%arg0: i32) -> (i32, i32) {
    %c0_i32 = arith.constant 0 : i32
    %c0_i32_0 = arith.constant 0 : i32
    %c0_i32_1 = arith.constant 0 : i32
    return %c0_i32, %c0_i32_0 : i32, i32
  }
  func.func @transform_3(%arg0: i32) -> (i32, i32) {
    %c0_i32 = arith.constant 0 : i32
    %c0_i32_0 = arith.constant 0 : i32
    return %c0_i32, %arg0 : i32, i32
  }
  func.func @transform_4(%arg0: i32) -> (i32, i32, i32) {
    %c0_i32 = arith.constant 0 : i32
    %c0_i32_0 = arith.constant 0 : i32
    %c0_i32_1 = arith.constant 0 : i32
    return %arg0, %c0_i32, %c0_i32_0 : i32, i32, i32
  }
  func.func @transform_5(%arg0: i32) -> (i32, i32, i32) {
    %c0_i32 = arith.constant 0 : i32
    %c0_i32_0 = arith.constant 0 : i32
    %c0_i32_1 = arith.constant 0 : i32
    return %arg0, %c0_i32, %c0_i32_0 : i32, i32, i32
  }
}

module attributes {stable_mosaic.version = 11 : i64} {
  func.func @bn_relu_head_kernel(%arg0: i32, %arg1: memref<128x128xbf16, #tpu.memory_space<vmem>>, %arg2: memref<128x1xf32, #tpu.memory_space<vmem>>, %arg3: memref<128x1xf32, #tpu.memory_space<vmem>>, %arg4: memref<128x1xf32, #tpu.memory_space<vmem>>, %arg5: memref<1x1xf32, #tpu.memory_space<vmem>>, %arg6: memref<1x128xf32, #tpu.memory_space<vmem>>) attributes {dimension_semantics = [#tpu.dimension_semantics<parallel>], iteration_bounds = array<i64: 1>, scalar_prefetch = 0 : i64, scratch_operands = 0 : i64, tpu.core_type = #tpu.core_type<tc>, window_params = [{transform_indices = @transform_0, window_bounds = array<i64: 128, 128>}, {pipeline_mode = #tpu.pipeline_mode<synchronous>, transform_indices = @transform_1, window_bounds = array<i64: 128, 1>}, {pipeline_mode = #tpu.pipeline_mode<synchronous>, transform_indices = @transform_2, window_bounds = array<i64: 128, 1>}, {pipeline_mode = #tpu.pipeline_mode<synchronous>, transform_indices = @transform_3, window_bounds = array<i64: 128, 1>}, {pipeline_mode = #tpu.pipeline_mode<synchronous>, transform_indices = @transform_4, window_bounds = array<i64: 1, 1>}, {transform_indices = @transform_5, window_bounds = array<i64: 1, 128>}]} {
    %c0 = arith.constant 0 : index
    %c0_0 = arith.constant 0 : index
    %0 = vector.load %arg1[%c0, %c0_0] : memref<128x128xbf16, #tpu.memory_space<vmem>>, vector<128x128xbf16>
    %1 = arith.extf %0 : vector<128x128xbf16> to vector<128x128xf32>
    %c0_1 = arith.constant 0 : index
    %c0_2 = arith.constant 0 : index
    %2 = vector.load %arg2[%c0_1, %c0_2] : memref<128x1xf32, #tpu.memory_space<vmem>>, vector<128x1xf32>
    %3 = vector.broadcast %2 : vector<128x1xf32> to vector<128x128xf32>
    %4 = arith.mulf %1, %3 : vector<128x128xf32>
    %c0_3 = arith.constant 0 : index
    %c0_4 = arith.constant 0 : index
    %5 = vector.load %arg3[%c0_3, %c0_4] : memref<128x1xf32, #tpu.memory_space<vmem>>, vector<128x1xf32>
    %6 = vector.broadcast %5 : vector<128x1xf32> to vector<128x128xf32>
    %7 = arith.addf %4, %6 : vector<128x128xf32>
    %cst = arith.constant 0.000000e+00 : f32
    %8 = vector.broadcast %cst : f32 to vector<128x128xf32>
    %9 = arith.maximumf %7, %8 : vector<128x128xf32>
    %c0_5 = arith.constant 0 : index
    %c0_6 = arith.constant 0 : index
    %10 = vector.load %arg4[%c0_5, %c0_6] : memref<128x1xf32, #tpu.memory_space<vmem>>, vector<128x1xf32>
    %11 = vector.broadcast %10 : vector<128x1xf32> to vector<128x128xf32>
    %12 = arith.mulf %9, %11 : vector<128x128xf32>
    %cst_7 = arith.constant dense<0.000000e+00> : vector<128xf32>
    %13 = vector.multi_reduction <add>, %12, %cst_7 [0] : vector<128x128xf32> to vector<128xf32>
    %14 = vector.shape_cast %13 : vector<128xf32> to vector<1x128xf32>
    %c0_8 = arith.constant 0 : index
    %c0_9 = arith.constant 0 : index
    %15 = vector.load %arg5[%c0_8, %c0_9] : memref<1x1xf32, #tpu.memory_space<vmem>>, vector<1x1xf32>
    %16 = vector.broadcast %15 : vector<1x1xf32> to vector<1x128xf32>
    %17 = arith.addf %14, %16 : vector<1x128xf32>
    %cst_10 = arith.constant 0.000000e+00 : f32
    %18 = vector.broadcast %cst_10 : f32 to vector<1x128xf32>
    %19 = arith.subf %18, %17 : vector<1x128xf32>
    %20 = math.exp %19 : vector<1x128xf32>
    %cst_11 = arith.constant 1.000000e+00 : f32
    %21 = vector.broadcast %cst_11 : f32 to vector<1x128xf32>
    %22 = arith.addf %21, %20 : vector<1x128xf32>
    %cst_12 = arith.constant 1.000000e+00 : f32
    %23 = vector.broadcast %cst_12 : f32 to vector<1x128xf32>
    %24 = arith.divf %23, %22 : vector<1x128xf32>
    %c0_13 = arith.constant 0 : index
    %c0_14 = arith.constant 0 : index
    %25 = vector.load %arg6[%c0_13, %c0_14] : memref<1x128xf32, #tpu.memory_space<vmem>>, vector<1x128xf32>
    tpu.vector_store %arg6[%c0_13, %c0_14], %24 {strides = array<i32>} : memref<1x128xf32, #tpu.memory_space<vmem>>, vector<1x128xf32>,
    return
  }
  func.func @transform_0(%arg0: i32) -> (i32, i32) {
    %c0_i32 = arith.constant 0 : i32
    %c0_i32_0 = arith.constant 0 : i32
    return %c0_i32, %arg0 : i32, i32
  }
  func.func @transform_1(%arg0: i32) -> (i32, i32) {
    %c0_i32 = arith.constant 0 : i32
    %c0_i32_0 = arith.constant 0 : i32
    %c0_i32_1 = arith.constant 0 : i32
    return %c0_i32, %c0_i32_0 : i32, i32
  }
  func.func @transform_2(%arg0: i32) -> (i32, i32) {
    %c0_i32 = arith.constant 0 : i32
    %c0_i32_0 = arith.constant 0 : i32
    %c0_i32_1 = arith.constant 0 : i32
    return %c0_i32, %c0_i32_0 : i32, i32
  }
  func.func @transform_3(%arg0: i32) -> (i32, i32) {
    %c0_i32 = arith.constant 0 : i32
    %c0_i32_0 = arith.constant 0 : i32
    %c0_i32_1 = arith.constant 0 : i32
    return %c0_i32, %c0_i32_0 : i32, i32
  }
  func.func @transform_4(%arg0: i32) -> (i32, i32) {
    %c0_i32 = arith.constant 0 : i32
    %c0_i32_0 = arith.constant 0 : i32
    %c0_i32_1 = arith.constant 0 : i32
    return %c0_i32, %c0_i32_0 : i32, i32
  }
  func.func @transform_5(%arg0: i32) -> (i32, i32) {
    %c0_i32 = arith.constant 0 : i32
    %c0_i32_0 = arith.constant 0 : i32
    return %c0_i32, %arg0 : i32, i32
  }
}

</mosaic_0001>

<llo_original>
// kernel: gd_forward.3
$region0: #{gd_forward.3}
  #allocation0 [shape = 'u32[]', space=smem, size = 0x4, offset = 0x4, fixed_abs, tag = 'smem constant byte address 0x4 - core index']
  #allocation1 [shape = 'u32[144,128]{1,0:T(1,128)}', space=vmem, size = 0x12000, scoped, tag = 'internal scratch']
  #allocation2 [shape = 'f32[1,1]{1,0:T(1,128)S(1)}', space=vmem, size = 0x200, scoped, tag = 'scoped memory for gd_forward.3']
  %s0 = inlined_call_operand.vmem [shape: bf16[128,128], index: 0, kind: input, shape index: {}]
  %s1 = inlined_call_operand.vmem [shape: f32[128,1], index: 1, kind: input, shape index: {}]
  %s2 = inlined_call_operand.vmem [shape: f32[128,1], index: 2, kind: input, shape index: {}]
  %s3 = inlined_call_operand.vmem [shape: f32[128,1], index: 3, kind: input, shape index: {}]
  %s4 = inlined_call_operand.<no memory space> [shape: f32[1,1], index: 4, kind: input, shape index: {}]
  %s5 = inlined_call_operand.vmem [shape: f32[1,128], index: 5, kind: output, shape index: {}]
  %s6 = sld [smem:[#allocation0]]
  $region30: #{gd_forward.3} parent=0
    _
  %s8 = ssub.s32 1, %s6
  %s9 = scalar_select 0, %s8, %s6
  %v10 = vstv %s4
  %11 = vst [vmem:[#allocation2] sm:$0x1] %v10
  // Predicated region
  $region2: #{gd_forward.3} parent=0 // pred_check
    _
  $region3: #{gd_forward.3} parent=0 // pred_check_branch
    %13 = sbr.rel (0) target = $region5
  $region4: #{gd_forward.3} parent=0 // pred_region
    _
  $region5: #{gd_forward.3} parent=0 // pred_fallthru
    _
  // Predicated region
  $region6: #{gd_forward.3} parent=0 // pred_check
    _
  $region7: #{gd_forward.3} parent=0 // pred_check_branch
    %15 = sbr.rel (0) target = $region9
  $region8: #{gd_forward.3} parent=0 // pred_region
    _
  $region9: #{gd_forward.3} parent=0 // pred_fallthru
    _
  // Predicated region
  $region10: #{gd_forward.3} parent=0 // pred_check
    _
  $region11: #{gd_forward.3} parent=0 // pred_check_branch
    %17 = sbr.rel (0) target = $region13
  $region12: #{gd_forward.3} parent=0 // pred_region
    _
  $region13: #{gd_forward.3} parent=0 // pred_fallthru
    _
  // Predicated region
  $region14: #{gd_forward.3} parent=0 // pred_check
    _
  $region15: #{gd_forward.3} parent=0 // pred_check_branch
    %19 = sbr.rel (0) target = $region17
  $region16: #{gd_forward.3} parent=0 // pred_region
    _
  $region17: #{gd_forward.3} parent=0 // pred_fallthru
    _
  // Predicated region
  $region18: #{gd_forward.3} parent=0 // pred_check
    _
  $region19: #{gd_forward.3} parent=0 // pred_check_branch
    %21 = sbr.rel (0) target = $region21
  $region20: #{gd_forward.3} parent=0 // pred_region
    _
  $region21: #{gd_forward.3} parent=0 // pred_fallthru
    _
  %v22 = vld [vmem:[%s0] sm:$0xf]
  %v23 = vld [vmem:[%s0 + $0x4] sm:$0xf]
  %v24 = vld [vmem:[%s0 + $0x8] sm:$0xf]
  %v25 = vld [vmem:[%s0 + $0xc] sm:$0xf]
  %v26 = vld [vmem:[%s0 + $0x10] sm:$0xf]
  %v27 = vld [vmem:[%s0 + $0x14] sm:$0xf]
  %v28 = vld [vmem:[%s0 + $0x18] sm:$0xf]
  %v29 = vld [vmem:[%s0 + $0x1c] sm:$0xf]
  %v30 = vld [vmem:[%s0 + $0x20] sm:$0xf]
  %v31 = vld [vmem:[%s0 + $0x24] sm:$0xf]
  %v32 = vld [vmem:[%s0 + $0x28] sm:$0xf]
  %v33 = vld [vmem:[%s0 + $0x2c] sm:$0xf]
  %v34 = vld [vmem:[%s0 + $0x30] sm:$0xf]
  %v35 = vld [vmem:[%s0 + $0x34] sm:$0xf]
  %v36 = vld [vmem:[%s0 + $0x38] sm:$0xf]
  %v37 = vld [vmem:[%s0 + $0x3c] sm:$0xf]
  %v38 = vunpack.c.l.bf16 %v22
  %v39 = vunpack.c.l.bf16 %v23
  %v40 = vunpack.c.l.bf16 %v24
  %v41 = vunpack.c.l.bf16 %v25
  %v42 = vunpack.c.l.bf16 %v26
  %v43 = vunpack.c.l.bf16 %v27
  %v44 = vunpack.c.l.bf16 %v28
  %v45 = vunpack.c.l.bf16 %v29
  %v46 = vunpack.c.l.bf16 %v30
  %v47 = vunpack.c.l.bf16 %v31
  %v48 = vunpack.c.l.bf16 %v32
  %v49 = vunpack.c.l.bf16 %v33
  %v50 = vunpack.c.l.bf16 %v34
  %v51 = vunpack.c.l.bf16 %v35
  %v52 = vunpack.c.l.bf16 %v36
  %v53 = vunpack.c.l.bf16 %v37
  %v54 = vld [vmem:[%s1] sm:$0xff]
  %v55 = vld [vmem:[%s1 + $0x8] sm:$0xff]
  %v56 = vld [vmem:[%s1 + $0x10] sm:$0xff]
  %v57 = vld [vmem:[%s1 + $0x18] sm:$0xff]
  %v58 = vld [vmem:[%s1 + $0x20] sm:$0xff]
  %v59 = vld [vmem:[%s1 + $0x28] sm:$0xff]
  %v60 = vld [vmem:[%s1 + $0x30] sm:$0xff]
  %v61 = vld [vmem:[%s1 + $0x38] sm:$0xff]
  %v62 = vld [vmem:[%s1 + $0x40] sm:$0xff]
  %v63 = vld [vmem:[%s1 + $0x48] sm:$0xff]
  %v64 = vld [vmem:[%s1 + $0x50] sm:$0xff]
  %v65 = vld [vmem:[%s1 + $0x58] sm:$0xff]
  %v66 = vld [vmem:[%s1 + $0x60] sm:$0xff]
  %v67 = vld [vmem:[%s1 + $0x68] sm:$0xff]
  %v68 = vld [vmem:[%s1 + $0x70] sm:$0xff]
  %v69 = vld [vmem:[%s1 + $0x78] sm:$0xff]
  %71 = vset.pattern.permute.xlu0 0
  %72 = vperm.xlu0 %71, %v54
  %v73 = vpop.permute.xlu0 %72
  %76 = vset.pattern.permute.xlu0 0
  %77 = vperm.xlu0 %76, %v55
  %v78 = vpop.permute.xlu0 %77
  %81 = vset.pattern.permute.xlu0 0
  %82 = vperm.xlu0 %81, %v56
  %v83 = vpop.permute.xlu0 %82
  %86 = vset.pattern.permute.xlu0 0
  %87 = vperm.xlu0 %86, %v57
  %v88 = vpop.permute.xlu0 %87
  %91 = vset.pattern.permute.xlu0 0
  %92 = vperm.xlu0 %91, %v58
  %v93 = vpop.permute.xlu0 %92
  %96 = vset.pattern.permute.xlu0 0
  %97 = vperm.xlu0 %96, %v59
  %v98 = vpop.permute.xlu0 %97
  %101 = vset.pattern.permute.xlu0 0
  %102 = vperm.xlu0 %101, %v60
  %v103 = vpop.permute.xlu0 %102
  %106 = vset.pattern.permute.xlu0 0
  %107 = vperm.xlu0 %106, %v61
  %v108 = vpop.permute.xlu0 %107
  %111 = vset.pattern.permute.xlu0 0
  %112 = vperm.xlu0 %111, %v62
  %v113 = vpop.permute.xlu0 %112
  %116 = vset.pattern.permute.xlu0 0
  %117 = vperm.xlu0 %116, %v63
  %v118 = vpop.permute.xlu0 %117
  %121 = vset.pattern.permute.xlu0 0
  %122 = vperm.xlu0 %121, %v64
  %v123 = vpop.permute.xlu0 %122
  %126 = vset.pattern.permute.xlu0 0
  %127 = vperm.xlu0 %126, %v65
  %v128 = vpop.permute.xlu0 %127
  %131 = vset.pattern.permute.xlu0 0
  %132 = vperm.xlu0 %131, %v66
  %v133 = vpop.permute.xlu0 %132
  %136 = vset.pattern.permute.xlu0 0
  %137 = vperm.xlu0 %136, %v67
  %v138 = vpop.permute.xlu0 %137
  %141 = vset.pattern.permute.xlu0 0
  %142 = vperm.xlu0 %141, %v68
  %v143 = vpop.permute.xlu0 %142
  %146 = vset.pattern.permute.xlu0 0
  %147 = vperm.xlu0 %146, %v69
  %v148 = vpop.permute.xlu0 %147
  %v150 = vmul.f32 %v38, %v73
  %v151 = vmul.f32 %v39, %v78
  %v152 = vmul.f32 %v40, %v83
  %v153 = vmul.f32 %v41, %v88
  %v154 = vmul.f32 %v42, %v93
  %v155 = vmul.f32 %v43, %v98
  %v156 = vmul.f32 %v44, %v103
  %v157 = vmul.f32 %v45, %v108
  %v158 = vmul.f32 %v46, %v113
  %v159 = vmul.f32 %v47, %v118
  %v160 = vmul.f32 %v48, %v123
  %v161 = vmul.f32 %v49, %v128
  %v162 = vmul.f32 %v50, %v133
  %v163 = vmul.f32 %v51, %v138
  %v164 = vmul.f32 %v52, %v143
  %v165 = vmul.f32 %v53, %v148
  %v166 = vld [vmem:[%s2] sm:$0xff]
  %v167 = vld [vmem:[%s2 + $0x8] sm:$0xff]
  %v168 = vld [vmem:[%s2 + $0x10] sm:$0xff]
  %v169 = vld [vmem:[%s2 + $0x18] sm:$0xff]
  %v170 = vld [vmem:[%s2 + $0x20] sm:$0xff]
  %v171 = vld [vmem:[%s2 + $0x28] sm:$0xff]
  %v172 = vld [vmem:[%s2 + $0x30] sm:$0xff]
  %v173 = vld [vmem:[%s2 + $0x38] sm:$0xff]
  %v174 = vld [vmem:[%s2 + $0x40] sm:$0xff]
  %v175 = vld [vmem:[%s2 + $0x48] sm:$0xff]
  %v176 = vld [vmem:[%s2 + $0x50] sm:$0xff]
  %v177 = vld [vmem:[%s2 + $0x58] sm:$0xff]
  %v178 = vld [vmem:[%s2 + $0x60] sm:$0xff]
  %v179 = vld [vmem:[%s2 + $0x68] sm:$0xff]
  %v180 = vld [vmem:[%s2 + $0x70] sm:$0xff]
  %v181 = vld [vmem:[%s2 + $0x78] sm:$0xff]
  %183 = vset.pattern.permute.xlu0 0
  %184 = vperm.xlu0 %183, %v166
  %v185 = vpop.permute.xlu0 %184
  %188 = vset.pattern.permute.xlu0 0
  %189 = vperm.xlu0 %188, %v167
  %v190 = vpop.permute.xlu0 %189
  %193 = vset.pattern.permute.xlu0 0
  %194 = vperm.xlu0 %193, %v168
  %v195 = vpop.permute.xlu0 %194
  %198 = vset.pattern.permute.xlu0 0
  %199 = vperm.xlu0 %198, %v169
  %v200 = vpop.permute.xlu0 %199
  %203 = vset.pattern.permute.xlu0 0
  %204 = vperm.xlu0 %203, %v170
  %v205 = vpop.permute.xlu0 %204
  %208 = vset.pattern.permute.xlu0 0
  %209 = vperm.xlu0 %208, %v171
  %v210 = vpop.permute.xlu0 %209
  %213 = vset.pattern.permute.xlu0 0
  %214 = vperm.xlu0 %213, %v172
  %v215 = vpop.permute.xlu0 %214
  %218 = vset.pattern.permute.xlu0 0
  %219 = vperm.xlu0 %218, %v173
  %v220 = vpop.permute.xlu0 %219
  %223 = vset.pattern.permute.xlu0 0
  %224 = vperm.xlu0 %223, %v174
  %v225 = vpop.permute.xlu0 %224
  %228 = vset.pattern.permute.xlu0 0
  %229 = vperm.xlu0 %228, %v175
  %v230 = vpop.permute.xlu0 %229
  %233 = vset.pattern.permute.xlu0 0
  %234 = vperm.xlu0 %233, %v176
  %v235 = vpop.permute.xlu0 %234
  %238 = vset.pattern.permute.xlu0 0
  %239 = vperm.xlu0 %238, %v177
  %v240 = vpop.permute.xlu0 %239
  %243 = vset.pattern.permute.xlu0 0
  %244 = vperm.xlu0 %243, %v178
  %v245 = vpop.permute.xlu0 %244
  %248 = vset.pattern.permute.xlu0 0
  %249 = vperm.xlu0 %248, %v179
  %v250 = vpop.permute.xlu0 %249
  %253 = vset.pattern.permute.xlu0 0
  %254 = vperm.xlu0 %253, %v180
  %v255 = vpop.permute.xlu0 %254
  %258 = vset.pattern.permute.xlu0 0
  %259 = vperm.xlu0 %258, %v181
  %v260 = vpop.permute.xlu0 %259
  %v262 = vadd.f32 %v150, %v185
  %v263 = vadd.f32 %v151, %v190
  %v264 = vadd.f32 %v152, %v195
  %v265 = vadd.f32 %v153, %v200
  %v266 = vadd.f32 %v154, %v205
  %v267 = vadd.f32 %v155, %v210
  %v268 = vadd.f32 %v156, %v215
  %v269 = vadd.f32 %v157, %v220
  %v270 = vadd.f32 %v158, %v225
  %v271 = vadd.f32 %v159, %v230
  %v272 = vadd.f32 %v160, %v235
  %v273 = vadd.f32 %v161, %v240
  %v274 = vadd.f32 %v162, %v245
  %v275 = vadd.f32 %v163, %v250
  %v276 = vadd.f32 %v164, %v255
  %v277 = vadd.f32 %v165, %v260
  %v278 = vmax.f32 %v262, 0.0
  %v279 = vmax.f32 %v263, 0.0
  %v280 = vmax.f32 %v264, 0.0
  %v281 = vmax.f32 %v265, 0.0
  %v282 = vmax.f32 %v266, 0.0
  %v283 = vmax.f32 %v267, 0.0
  %v284 = vmax.f32 %v268, 0.0
  %v285 = vmax.f32 %v269, 0.0
  %v286 = vmax.f32 %v270, 0.0
  %v287 = vmax.f32 %v271, 0.0
  %v288 = vmax.f32 %v272, 0.0
  %v289 = vmax.f32 %v273, 0.0
  %v290 = vmax.f32 %v274, 0.0
  %v291 = vmax.f32 %v275, 0.0
  %v292 = vmax.f32 %v276, 0.0
  %v293 = vmax.f32 %v277, 0.0
  %v294 = vld [vmem:[%s3] sm:$0xff]
  %v295 = vld [vmem:[%s3 + $0x8] sm:$0xff]
  %v296 = vld [vmem:[%s3 + $0x10] sm:$0xff]
  %v297 = vld [vmem:[%s3 + $0x18] sm:$0xff]
  %v298 = vld [vmem:[%s3 + $0x20] sm:$0xff]
  %v299 = vld [vmem:[%s3 + $0x28] sm:$0xff]
  %v300 = vld [vmem:[%s3 + $0x30] sm:$0xff]
  %v301 = vld [vmem:[%s3 + $0x38] sm:$0xff]
  %v302 = vld [vmem:[%s3 + $0x40] sm:$0xff]
  %v303 = vld [vmem:[%s3 + $0x48] sm:$0xff]
  %v304 = vld [vmem:[%s3 + $0x50] sm:$0xff]
  %v305 = vld [vmem:[%s3 + $0x58] sm:$0xff]
  %v306 = vld [vmem:[%s3 + $0x60] sm:$0xff]
  %v307 = vld [vmem:[%s3 + $0x68] sm:$0xff]
  %v308 = vld [vmem:[%s3 + $0x70] sm:$0xff]
  %v309 = vld [vmem:[%s3 + $0x78] sm:$0xff]
  %311 = vset.pattern.permute.xlu0 0
  %312 = vperm.xlu0 %311, %v294
  %v313 = vpop.permute.xlu0 %312
  %316 = vset.pattern.permute.xlu0 0
  %317 = vperm.xlu0 %316, %v295
  %v318 = vpop.permute.xlu0 %317
  %321 = vset.pattern.permute.xlu0 0
  %322 = vperm.xlu0 %321, %v296
  %v323 = vpop.permute.xlu0 %322
  %326 = vset.pattern.permute.xlu0 0
  %327 = vperm.xlu0 %326, %v297
  %v328 = vpop.permute.xlu0 %327
  %331 = vset.pattern.permute.xlu0 0
  %332 = vperm.xlu0 %331, %v298
  %v333 = vpop.permute.xlu0 %332
  %336 = vset.pattern.permute.xlu0 0
  %337 = vperm.xlu0 %336, %v299
  %v338 = vpop.permute.xlu0 %337
  %341 = vset.pattern.permute.xlu0 0
  %342 = vperm.xlu0 %341, %v300
  %v343 = vpop.permute.xlu0 %342
  %346 = vset.pattern.permute.xlu0 0
  %347 = vperm.xlu0 %346, %v301
  %v348 = vpop.permute.xlu0 %347
  %351 = vset.pattern.permute.xlu0 0
  %352 = vperm.xlu0 %351, %v302
  %v353 = vpop.permute.xlu0 %352
  %356 = vset.pattern.permute.xlu0 0
  %357 = vperm.xlu0 %356, %v303
  %v358 = vpop.permute.xlu0 %357
  %361 = vset.pattern.permute.xlu0 0
  %362 = vperm.xlu0 %361, %v304
  %v363 = vpop.permute.xlu0 %362
  %366 = vset.pattern.permute.xlu0 0
  %367 = vperm.xlu0 %366, %v305
  %v368 = vpop.permute.xlu0 %367
  %371 = vset.pattern.permute.xlu0 0
  %372 = vperm.xlu0 %371, %v306
  %v373 = vpop.permute.xlu0 %372
  %376 = vset.pattern.permute.xlu0 0
  %377 = vperm.xlu0 %376, %v307
  %v378 = vpop.permute.xlu0 %377
  %381 = vset.pattern.permute.xlu0 0
  %382 = vperm.xlu0 %381, %v308
  %v383 = vpop.permute.xlu0 %382
  %386 = vset.pattern.permute.xlu0 0
  %387 = vperm.xlu0 %386, %v309
  %v388 = vpop.permute.xlu0 %387
  %v390 = vmul.f32 %v278, %v313
  %v391 = vmul.f32 %v279, %v318
  %v392 = vmul.f32 %v280, %v323
  %v393 = vmul.f32 %v281, %v328
  %v394 = vmul.f32 %v282, %v333
  %v395 = vmul.f32 %v283, %v338
  %v396 = vmul.f32 %v284, %v343
  %v397 = vmul.f32 %v285, %v348
  %v398 = vmul.f32 %v286, %v353
  %v399 = vmul.f32 %v287, %v358
  %v400 = vmul.f32 %v288, %v363
  %v401 = vmul.f32 %v289, %v368
  %v402 = vmul.f32 %v290, %v373
  %v403 = vmul.f32 %v291, %v378
  %v404 = vmul.f32 %v292, %v383
  %v405 = vmul.f32 %v293, %v388
  %v406 = vadd.f32 %v390, %v391
  %v407 = vadd.f32 %v406, %v392
  %v408 = vadd.f32 %v407, %v393
  %v409 = vadd.f32 %v408, %v394
  %v410 = vadd.f32 %v409, %v395
  %v411 = vadd.f32 %v410, %v396
  %v412 = vadd.f32 %v411, %v397
  %v413 = vadd.f32 %v412, %v398
  %v414 = vadd.f32 %v413, %v399
  %v415 = vadd.f32 %v414, %v400
  %v416 = vadd.f32 %v415, %v401
  %v417 = vadd.f32 %v416, %v402
  %v418 = vadd.f32 %v417, %v403
  %v419 = vadd.f32 %v418, %v404
  %v420 = vadd.f32 %v419, %v405
  %v421 = vrot.slane %v420, 4
  %v422 = vadd.f32 %v420, %v421
  %v423 = vrot.slane %v422, 2
  %v424 = vadd.f32 %v422, %v423
  %v425 = vrot.slane %v424, 1
  %v426 = vadd.f32 %v424, %v425
  %v427 = vld [vmem:[#allocation2] sm:$0x1]
  %429 = vset.pattern.permute.xlu0 0
  %430 = vperm.xlu0 %429, %v427
  %v431 = vpop.permute.xlu0 %430
  %v433 = vlaneseq
  %v434 = vshrl.u32 %v433, 7
  %v435 = vsub.s32 0, %v434
  %v436 = vrot.slane %v431, %v435
  %v437 = vadd.f32 %v426, %v436
  %v438 = vsub.f32 0.0, %v437
  %v439 = vmul.f32 %v438, 1.442695
  %v440 = vpow.pop %v439
  %v441 = vadd.f32 %v440, 1.0
  %v442 = vrcp.pop %v441
  %v443 = vmul.f32 1.0, %v442
  %444 = vst [vmem:[%s5] sm:$0x1] %v443
  // Predicated region
  $region22: #{gd_forward.3} parent=0 // pred_check
    _
  $region23: #{gd_forward.3} parent=0 // pred_check_branch
    %446 = sbr.rel (0) target = $region25
  $region24: #{gd_forward.3} parent=0 // pred_region
    _
  $region25: #{gd_forward.3} parent=0 // pred_fallthru
    _
  // Predicated region
  $region26: #{gd_forward.3} parent=0 // pred_check
    _
  $region27: #{gd_forward.3} parent=0 // pred_check_branch
    %448 = sbr.rel (0) target = $region29
  $region28: #{gd_forward.3} parent=0 // pred_region
    _
  $region29: #{gd_forward.3} parent=0 // pred_fallthru
    _

// kernel: gd_forward.2
$region0: #{gd_forward.2}
  #allocation0 [shape = 'u32[]', space=smem, size = 0x4, offset = 0x4, fixed_abs, tag = 'smem constant byte address 0x4 - core index']
  #allocation1 [shape = 'u32[144,128]{1,0:T(1,128)}', space=vmem, size = 0x12000, scoped, tag = 'internal scratch']
  %s0 = inlined_call_operand.vmem [shape: f32[8,3200], index: 0, kind: input, shape index: {}]
  %s1 = inlined_call_operand.vmem [shape: bf16[3200,128], index: 1, kind: input, shape index: {}]
  %s2 = inlined_call_operand.vmem [shape: f32[1,128], index: 2, kind: input, shape index: {}]
  %s3 = inlined_call_operand.vmem [shape: bf16[128,128], index: 3, kind: output, shape index: {0}]
  %s4 = inlined_call_operand.vmem [shape: f32[1,1,128], index: 4, kind: output, shape index: {1}]
  %s5 = inlined_call_operand.vmem [shape: f32[1,1,128], index: 5, kind: output, shape index: {2}]
  %6 = xla_tuple %s3, %s4, %s5
  %s7 = sld [smem:[#allocation0]]
  $region38: #{gd_forward.2} parent=0
    _
  %s9 = ssub.s32 1, %s7
  %s10 = scalar_select 0, %s9, %s7
  // Predicated region
  $region2: #{gd_forward.2} parent=0 // pred_check
    _
  $region3: #{gd_forward.2} parent=0 // pred_check_branch
    %12 = sbr.rel (0) target = $region5
  $region4: #{gd_forward.2} parent=0 // pred_region
    _
  $region5: #{gd_forward.2} parent=0 // pred_fallthru
    _
  // Predicated region
  $region6: #{gd_forward.2} parent=0 // pred_check
    _
  $region7: #{gd_forward.2} parent=0 // pred_check_branch
    %14 = sbr.rel (0) target = $region9
  $region8: #{gd_forward.2} parent=0 // pred_region
    _
  $region9: #{gd_forward.2} parent=0 // pred_fallthru
    _
  // Predicated region
  $region10: #{gd_forward.2} parent=0 // pred_check
    _
  $region11: #{gd_forward.2} parent=0 // pred_check_branch
    %16 = sbr.rel (0) target = $region13
  $region12: #{gd_forward.2} parent=0 // pred_region
    _
  $region13: #{gd_forward.2} parent=0 // pred_fallthru
    _
  %v18 = vld [vmem:[%s0] sm:$0xff]
  %v19 = vld [vmem:[%s0 + $0x8] sm:$0xff]
  %v20 = vld [vmem:[%s0 + $0x10] sm:$0xff]
  %v21 = vld [vmem:[%s0 + $0x18] sm:$0xff]
  %v22 = vld [vmem:[%s0 + $0x20] sm:$0xff]
  %v23 = vld [vmem:[%s0 + $0x28] sm:$0xff]
  %v24 = vld [vmem:[%s0 + $0x30] sm:$0xff]
  %v25 = vld [vmem:[%s0 + $0x38] sm:$0xff]
  %v26 = vld [vmem:[%s0 + $0x40] sm:$0xff]
  %v27 = vld [vmem:[%s0 + $0x48] sm:$0xff]
  %v28 = vld [vmem:[%s0 + $0x50] sm:$0xff]
  %v29 = vld [vmem:[%s0 + $0x58] sm:$0xff]
  %v30 = vld [vmem:[%s0 + $0x60] sm:$0xff]
  %v31 = vld [vmem:[%s0 + $0x68] sm:$0xff]
  %v32 = vld [vmem:[%s0 + $0x70] sm:$0xff]
  %v33 = vld [vmem:[%s0 + $0x78] sm:$0xff]
  %v34 = vld [vmem:[%s0 + $0x80] sm:$0xff]
  %v35 = vld [vmem:[%s0 + $0x88] sm:$0xff]
  %v36 = vld [vmem:[%s0 + $0x90] sm:$0xff]
  %v37 = vld [vmem:[%s0 + $0x98] sm:$0xff]
  %v38 = vld [vmem:[%s0 + $0xa0] sm:$0xff]
  %v39 = vld [vmem:[%s0 + $0xa8] sm:$0xff]
  %v40 = vld [vmem:[%s0 + $0xb0] sm:$0xff]
  %v41 = vld [vmem:[%s0 + $0xb8] sm:$0xff]
  %v42 = vld [vmem:[%s0 + $0xc0] sm:$0xff]
  %v43 = vld [vmem:[%s0 + $0xc8] sm:$0xff]
  %v44 = vld [vmem:[%s0 + $0xd0] sm:$0xff]
  %v45 = vld [vmem:[%s0 + $0xd8] sm:$0xff]
  %v46 = vld [vmem:[%s0 + $0xe0] sm:$0xff]
  %v47 = vld [vmem:[%s0 + $0xe8] sm:$0xff]
  %v48 = vld [vmem:[%s0 + $0xf0] sm:$0xff]
  %v49 = vld [vmem:[%s0 + $0xf8] sm:$0xff]
  %v50 = vld [vmem:[%s0 + $0x100] sm:$0xff]
  %v51 = vld [vmem:[%s0 + $0x108] sm:$0xff]
  %v52 = vld [vmem:[%s0 + $0x110] sm:$0xff]
  %v53 = vld [vmem:[%s0 + $0x118] sm:$0xff]
  %v54 = vld [vmem:[%s0 + $0x120] sm:$0xff]
  %v55 = vld [vmem:[%s0 + $0x128] sm:$0xff]
  %v56 = vld [vmem:[%s0 + $0x130] sm:$0xff]
  %v57 = vld [vmem:[%s0 + $0x138] sm:$0xff]
  %v58 = vld [vmem:[%s0 + $0x140] sm:$0xff]
  %v59 = vld [vmem:[%s0 + $0x148] sm:$0xff]
  %v60 = vld [vmem:[%s0 + $0x150] sm:$0xff]
  %v61 = vld [vmem:[%s0 + $0x158] sm:$0xff]
  %v62 = vld [vmem:[%s0 + $0x160] sm:$0xff]
  %v63 = vld [vmem:[%s0 + $0x168] sm:$0xff]
  %v64 = vld [vmem:[%s0 + $0x170] sm:$0xff]
  %v65 = vld [vmem:[%s0 + $0x178] sm:$0xff]
  %v66 = vld [vmem:[%s0 + $0x180] sm:$0xff]
  %v67 = vld [vmem:[%s0 + $0x188] sm:$0xff]
  %v68 = vld [vmem:[%s0 + $0x190] sm:$0xff]
  %v69 = vld [vmem:[%s0 + $0x198] sm:$0xff]
  %v70 = vld [vmem:[%s0 + $0x1a0] sm:$0xff]
  %v71 = vld [vmem:[%s0 + $0x1a8] sm:$0xff]
  %v72 = vld [vmem:[%s0 + $0x1b0] sm:$0xff]
  %v73 = vld [vmem:[%s0 + $0x1b8] sm:$0xff]
  %v74 = vld [vmem:[%s0 + $0x1c0] sm:$0xff]
  %v75 = vld [vmem:[%s0 + $0x1c8] sm:$0xff]
  %v76 = vld [vmem:[%s0 + $0x1d0] sm:$0xff]
  %v77 = vld [vmem:[%s0 + $0x1d8] sm:$0xff]
  %v78 = vld [vmem:[%s0 + $0x1e0] sm:$0xff]
  %v79 = vld [vmem:[%s0 + $0x1e8] sm:$0xff]
  %v80 = vld [vmem:[%s0 + $0x1f0] sm:$0xff]
  %v81 = vld [vmem:[%s0 + $0x1f8] sm:$0xff]
  %v82 = vld [vmem:[%s0 + $0x200] sm:$0xff]
  %v83 = vld [vmem:[%s0 + $0x208] sm:$0xff]
  %v84 = vld [vmem:[%s0 + $0x210] sm:$0xff]
  %v85 = vld [vmem:[%s0 + $0x218] sm:$0xff]
  %v86 = vld [vmem:[%s0 + $0x220] sm:$0xff]
  %v87 = vld [vmem:[%s0 + $0x228] sm:$0xff]
  %v88 = vld [vmem:[%s0 + $0x230] sm:$0xff]
  %v89 = vld [vmem:[%s0 + $0x238] sm:$0xff]
  %v90 = vld [vmem:[%s0 + $0x240] sm:$0xff]
  %v91 = vld [vmem:[%s0 + $0x248] sm:$0xff]
  %v92 = vld [vmem:[%s0 + $0x250] sm:$0xff]
  %v93 = vld [vmem:[%s0 + $0x258] sm:$0xff]
  %v94 = vld [vmem:[%s0 + $0x260] sm:$0xff]
  %v95 = vld [vmem:[%s0 + $0x268] sm:$0xff]
  %v96 = vld [vmem:[%s0 + $0x270] sm:$0xff]
  %v97 = vld [vmem:[%s0 + $0x278] sm:$0xff]
  %v98 = vld [vmem:[%s0 + $0x280] sm:$0xff]
  %v99 = vld [vmem:[%s0 + $0x288] sm:$0xff]
  %v100 = vld [vmem:[%s0 + $0x290] sm:$0xff]
  %v101 = vld [vmem:[%s0 + $0x298] sm:$0xff]
  %v102 = vld [vmem:[%s0 + $0x2a0] sm:$0xff]
  %v103 = vld [vmem:[%s0 + $0x2a8] sm:$0xff]
  %v104 = vld [vmem:[%s0 + $0x2b0] sm:$0xff]
  %v105 = vld [vmem:[%s0 + $0x2b8] sm:$0xff]
  %v106 = vld [vmem:[%s0 + $0x2c0] sm:$0xff]
  %v107 = vld [vmem:[%s0 + $0x2c8] sm:$0xff]
  %v108 = vld [vmem:[%s0 + $0x2d0] sm:$0xff]
  %v109 = vld [vmem:[%s0 + $0x2d8] sm:$0xff]
  %v110 = vld [vmem:[%s0 + $0x2e0] sm:$0xff]
  %v111 = vld [vmem:[%s0 + $0x2e8] sm:$0xff]
  %v112 = vld [vmem:[%s0 + $0x2f0] sm:$0xff]
  %v113 = vld [vmem:[%s0 + $0x2f8] sm:$0xff]
  %v114 = vld [vmem:[%s0 + $0x300] sm:$0xff]
  %v115 = vld [vmem:[%s0 + $0x308] sm:$0xff]
  %v116 = vld [vmem:[%s0 + $0x310] sm:$0xff]
  %v117 = vld [vmem:[%s0 + $0x318] sm:$0xff]
  %v118 = vld [vmem:[%s0 + $0x320] sm:$0xff]
  %v119 = vld [vmem:[%s0 + $0x328] sm:$0xff]
  %v120 = vld [vmem:[%s0 + $0x330] sm:$0xff]
  %v121 = vld [vmem:[%s0 + $0x338] sm:$0xff]
  %v122 = vld [vmem:[%s0 + $0x340] sm:$0xff]
  %v123 = vld [vmem:[%s0 + $0x348] sm:$0xff]
  %v124 = vld [vmem:[%s0 + $0x350] sm:$0xff]
  %v125 = vld [vmem:[%s0 + $0x358] sm:$0xff]
  %v126 = vld [vmem:[%s0 + $0x360] sm:$0xff]
  %v127 = vld [vmem:[%s0 + $0x368] sm:$0xff]
  %v128 = vld [vmem:[%s0 + $0x370] sm:$0xff]
  %v129 = vld [vmem:[%s0 + $0x378] sm:$0xff]
  %v130 = vld [vmem:[%s0 + $0x380] sm:$0xff]
  %v131 = vld [vmem:[%s0 + $0x388] sm:$0xff]
  %v132 = vld [vmem:[%s0 + $0x390] sm:$0xff]
  %v133 = vld [vmem:[%s0 + $0x398] sm:$0xff]
  %v134 = vld [vmem:[%s0 + $0x3a0] sm:$0xff]
  %v135 = vld [vmem:[%s0 + $0x3a8] sm:$0xff]
  %v136 = vld [vmem:[%s0 + $0x3b0] sm:$0xff]
  %v137 = vld [vmem:[%s0 + $0x3b8] sm:$0xff]
  %v138 = vld [vmem:[%s0 + $0x3c0] sm:$0xff]
  %v139 = vld [vmem:[%s0 + $0x3c8] sm:$0xff]
  %v140 = vld [vmem:[%s0 + $0x3d0] sm:$0xff]
  %v141 = vld [vmem:[%s0 + $0x3d8] sm:$0xff]
  %v142 = vld [vmem:[%s0 + $0x3e0] sm:$0xff]
  %v143 = vld [vmem:[%s0 + $0x3e8] sm:$0xff]
  %v144 = vld [vmem:[%s0 + $0x3f0] sm:$0xff]
  %v145 = vld [vmem:[%s0 + $0x3f8] sm:$0xff]
  %v146 = vld [vmem:[%s0 + $0x400] sm:$0xff]
  %v147 = vld [vmem:[%s0 + $0x408] sm:$0xff]
  %v148 = vld [vmem:[%s0 + $0x410] sm:$0xff]
  %v149 = vld [vmem:[%s0 + $0x418] sm:$0xff]
  %v150 = vld [vmem:[%s0 + $0x420] sm:$0xff]
  %v151 = vld [vmem:[%s0 + $0x428] sm:$0xff]
  %v152 = vld [vmem:[%s0 + $0x430] sm:$0xff]
  %v153 = vld [vmem:[%s0 + $0x438] sm:$0xff]
  %v154 = vld [vmem:[%s0 + $0x440] sm:$0xff]
  %v155 = vld [vmem:[%s0 + $0x448] sm:$0xff]
  %v156 = vld [vmem:[%s0 + $0x450] sm:$0xff]
  %v157 = vld [vmem:[%s0 + $0x458] sm:$0xff]
  %v158 = vld [vmem:[%s0 + $0x460] sm:$0xff]
  %v159 = vld [vmem:[%s0 + $0x468] sm:$0xff]
  %v160 = vld [vmem:[%s0 + $0x470] sm:$0xff]
  %v161 = vld [vmem:[%s0 + $0x478] sm:$0xff]
  %v162 = vld [vmem:[%s0 + $0x480] sm:$0xff]
  %v163 = vld [vmem:[%s0 + $0x488] sm:$0xff]
  %v164 = vld [vmem:[%s0 + $0x490] sm:$0xff]
  %v165 = vld [vmem:[%s0 + $0x498] sm:$0xff]
  %v166 = vld [vmem:[%s0 + $0x4a0] sm:$0xff]
  %v167 = vld [vmem:[%s0 + $0x4a8] sm:$0xff]
  %v168 = vld [vmem:[%s0 + $0x4b0] sm:$0xff]
  %v169 = vld [vmem:[%s0 + $0x4b8] sm:$0xff]
  %v170 = vld [vmem:[%s0 + $0x4c0] sm:$0xff]
  %v171 = vld [vmem:[%s0 + $0x4c8] sm:$0xff]
  %v172 = vld [vmem:[%s0 + $0x4d0] sm:$0xff]
  %v173 = vld [vmem:[%s0 + $0x4d8] sm:$0xff]
  %v174 = vld [vmem:[%s0 + $0x4e0] sm:$0xff]
  %v175 = vld [vmem:[%s0 + $0x4e8] sm:$0xff]
  %v176 = vld [vmem:[%s0 + $0x4f0] sm:$0xff]
  %v177 = vld [vmem:[%s0 + $0x4f8] sm:$0xff]
  %v178 = vld [vmem:[%s0 + $0x500] sm:$0xff]
  %v179 = vld [vmem:[%s0 + $0x508] sm:$0xff]
  %v180 = vld [vmem:[%s0 + $0x510] sm:$0xff]
  %v181 = vld [vmem:[%s0 + $0x518] sm:$0xff]
  %v182 = vld [vmem:[%s0 + $0x520] sm:$0xff]
  %v183 = vld [vmem:[%s0 + $0x528] sm:$0xff]
  %v184 = vld [vmem:[%s0 + $0x530] sm:$0xff]
  %v185 = vld [vmem:[%s0 + $0x538] sm:$0xff]
  %v186 = vld [vmem:[%s0 + $0x540] sm:$0xff]
  %v187 = vld [vmem:[%s0 + $0x548] sm:$0xff]
  %v188 = vld [vmem:[%s0 + $0x550] sm:$0xff]
  %v189 = vld [vmem:[%s0 + $0x558] sm:$0xff]
  %v190 = vld [vmem:[%s0 + $0x560] sm:$0xff]
  %v191 = vld [vmem:[%s0 + $0x568] sm:$0xff]
  %v192 = vld [vmem:[%s0 + $0x570] sm:$0xff]
  %v193 = vld [vmem:[%s0 + $0x578] sm:$0xff]
  %v194 = vld [vmem:[%s0 + $0x580] sm:$0xff]
  %v195 = vld [vmem:[%s0 + $0x588] sm:$0xff]
  %v196 = vld [vmem:[%s0 + $0x590] sm:$0xff]
  %v197 = vld [vmem:[%s0 + $0x598] sm:$0xff]
  %v198 = vld [vmem:[%s0 + $0x5a0] sm:$0xff]
  %v199 = vld [vmem:[%s0 + $0x5a8] sm:$0xff]
  %v200 = vld [vmem:[%s0 + $0x5b0] sm:$0xff]
  %v201 = vld [vmem:[%s0 + $0x5b8] sm:$0xff]
  %v202 = vld [vmem:[%s0 + $0x5c0] sm:$0xff]
  %v203 = vld [vmem:[%s0 + $0x5c8] sm:$0xff]
  %v204 = vld [vmem:[%s0 + $0x5d0] sm:$0xff]
  %v205 = vld [vmem:[%s0 + $0x5d8] sm:$0xff]
  %v206 = vld [vmem:[%s0 + $0x5e0] sm:$0xff]
  %v207 = vld [vmem:[%s0 + $0x5e8] sm:$0xff]
  %v208 = vld [vmem:[%s0 + $0x5f0] sm:$0xff]
  %v209 = vld [vmem:[%s0 + $0x5f8] sm:$0xff]
  %v210 = vld [vmem:[%s0 + $0x600] sm:$0xff]
  %v211 = vld [vmem:[%s0 + $0x608] sm:$0xff]
  %v212 = vld [vmem:[%s0 + $0x610] sm:$0xff]
  %v213 = vld [vmem:[%s0 + $0x618] sm:$0xff]
  %v214 = vld [vmem:[%s0 + $0x620] sm:$0xff]
  %v215 = vld [vmem:[%s0 + $0x628] sm:$0xff]
  %v216 = vld [vmem:[%s0 + $0x630] sm:$0xff]
  %v217 = vld [vmem:[%s0 + $0x638] sm:$0xff]
  %v218 = vld [vmem:[%s0 + $0x640] sm:$0xff]
  %v219 = vld [vmem:[%s0 + $0x648] sm:$0xff]
  %v220 = vld [vmem:[%s0 + $0x650] sm:$0xff]
  %v221 = vld [vmem:[%s0 + $0x658] sm:$0xff]
  %v222 = vld [vmem:[%s0 + $0x660] sm:$0xff]
  %v223 = vld [vmem:[%s0 + $0x668] sm:$0xff]
  %v224 = vld [vmem:[%s0 + $0x670] sm:$0xff]
  %v225 = vld [vmem:[%s0 + $0x678] sm:$0xff]
  %v226 = vld [vmem:[%s0 + $0x680] sm:$0xff]
  %v227 = vld [vmem:[%s0 + $0x688] sm:$0xff]
  %v228 = vld [vmem:[%s0 + $0x690] sm:$0xff]
  %v229 = vld [vmem:[%s0 + $0x698] sm:$0xff]
  %v230 = vld [vmem:[%s0 + $0x6a0] sm:$0xff]
  %v231 = vld [vmem:[%s0 + $0x6a8] sm:$0xff]
  %v232 = vld [vmem:[%s0 + $0x6b0] sm:$0xff]
  %v233 = vld [vmem:[%s0 + $0x6b8] sm:$0xff]
  %v234 = vld [vmem:[%s0 + $0x6c0] sm:$0xff]
  %v235 = vld [vmem:[%s0 + $0x6c8] sm:$0xff]
  %v236 = vld [vmem:[%s0 + $0x6d0] sm:$0xff]
  %v237 = vld [vmem:[%s0 + $0x6d8] sm:$0xff]
  %v238 = vld [vmem:[%s0 + $0x6e0] sm:$0xff]
  %v239 = vld [vmem:[%s0 + $0x6e8] sm:$0xff]
  %v240 = vld [vmem:[%s0 + $0x6f0] sm:$0xff]
  %v241 = vld [vmem:[%s0 + $0x6f8] sm:$0xff]
  %v242 = vld [vmem:[%s0 + $0x700] sm:$0xff]
  %v243 = vld [vmem:[%s0 + $0x708] sm:$0xff]
  %v244 = vld [vmem:[%s0 + $0x710] sm:$0xff]
  %v245 = vld [vmem:[%s0 + $0x718] sm:$0xff]
  %v246 = vld [vmem:[%s0 + $0x720] sm:$0xff]
  %v247 = vld [vmem:[%s0 + $0x728] sm:$0xff]
  %v248 = vld [vmem:[%s0 + $0x730] sm:$0xff]
  %v249 = vld [vmem:[%s0 + $0x738] sm:$0xff]
  %v250 = vld [vmem:[%s0 + $0x740] sm:$0xff]
  %v251 = vld [vmem:[%s0 + $0x748] sm:$0xff]
  %v252 = vld [vmem:[%s0 + $0x750] sm:$0xff]
  %v253 = vld [vmem:[%s0 + $0x758] sm:$0xff]
  %v254 = vld [vmem:[%s0 + $0x760] sm:$0xff]
  %v255 = vld [vmem:[%s0 + $0x768] sm:$0xff]
  %v256 = vld [vmem:[%s0 + $0x770] sm:$0xff]
  %v257 = vld [vmem:[%s0 + $0x778] sm:$0xff]
  %v258 = vld [vmem:[%s0 + $0x780] sm:$0xff]
  %v259 = vld [vmem:[%s0 + $0x788] sm:$0xff]
  %v260 = vld [vmem:[%s0 + $0x790] sm:$0xff]
  %v261 = vld [vmem:[%s0 + $0x798] sm:$0xff]
  %v262 = vld [vmem:[%s0 + $0x7a0] sm:$0xff]
  %v263 = vld [vmem:[%s0 + $0x7a8] sm:$0xff]
  %v264 = vld [vmem:[%s0 + $0x7b0] sm:$0xff]
  %v265 = vld [vmem:[%s0 + $0x7b8] sm:$0xff]
  %v266 = vld [vmem:[%s0 + $0x7c0] sm:$0xff]
  %v267 = vld [vmem:[%s0 + $0x7c8] sm:$0xff]
  %v268 = vld [vmem:[%s0 + $0x7d0] sm:$0xff]
  %v269 = vld [vmem:[%s0 + $0x7d8] sm:$0xff]
  %v270 = vld [vmem:[%s0 + $0x7e0] sm:$0xff]
  %v271 = vld [vmem:[%s0 + $0x7e8] sm:$0xff]
  %v272 = vld [vmem:[%s0 + $0x7f0] sm:$0xff]
  %v273 = vld [vmem:[%s0 + $0x7f8] sm:$0xff]
  %v274 = vld [vmem:[%s0 + $0x800] sm:$0xff]
  %v275 = vld [vmem:[%s0 + $0x808] sm:$0xff]
  %v276 = vld [vmem:[%s0 + $0x810] sm:$0xff]
  %v277 = vld [vmem:[%s0 + $0x818] sm:$0xff]
  %v278 = vld [vmem:[%s0 + $0x820] sm:$0xff]
  %v279 = vld [vmem:[%s0 + $0x828] sm:$0xff]
  %v280 = vld [vmem:[%s0 + $0x830] sm:$0xff]
  %v281 = vld [vmem:[%s0 + $0x838] sm:$0xff]
  %v282 = vld [vmem:[%s0 + $0x840] sm:$0xff]
  %v283 = vld [vmem:[%s0 + $0x848] sm:$0xff]
  %v284 = vld [vmem:[%s0 + $0x850] sm:$0xff]
  %v285 = vld [vmem:[%s0 + $0x858] sm:$0xff]
  %v286 = vld [vmem:[%s0 + $0x860] sm:$0xff]
  %v287 = vld [vmem:[%s0 + $0x868] sm:$0xff]
  %v288 = vld [vmem:[%s0 + $0x870] sm:$0xff]
  %v289 = vld [vmem:[%s0 + $0x878] sm:$0xff]
  %v290 = vld [vmem:[%s0 + $0x880] sm:$0xff]
  %v291 = vld [vmem:[%s0 + $0x888] sm:$0xff]
  %v292 = vld [vmem:[%s0 + $0x890] sm:$0xff]
  %v293 = vld [vmem:[%s0 + $0x898] sm:$0xff]
  %v294 = vld [vmem:[%s0 + $0x8a0] sm:$0xff]
  %v295 = vld [vmem:[%s0 + $0x8a8] sm:$0xff]
  %v296 = vld [vmem:[%s0 + $0x8b0] sm:$0xff]
  %v297 = vld [vmem:[%s0 + $0x8b8] sm:$0xff]
  %v298 = vld [vmem:[%s0 + $0x8c0] sm:$0xff]
  %v299 = vld [vmem:[%s0 + $0x8c8] sm:$0xff]
  %v300 = vld [vmem:[%s0 + $0x8d0] sm:$0xff]
  %v301 = vld [vmem:[%s0 + $0x8d8] sm:$0xff]
  %v302 = vld [vmem:[%s0 + $0x8e0] sm:$0xff]
  %v303 = vld [vmem:[%s0 + $0x8e8] sm:$0xff]
  %v304 = vld [vmem:[%s0 + $0x8f0] sm:$0xff]
  %v305 = vld [vmem:[%s0 + $0x8f8] sm:$0xff]
  %v306 = vld [vmem:[%s0 + $0x900] sm:$0xff]
  %v307 = vld [vmem:[%s0 + $0x908] sm:$0xff]
  %v308 = vld [vmem:[%s0 + $0x910] sm:$0xff]
  %v309 = vld [vmem:[%s0 + $0x918] sm:$0xff]
  %v310 = vld [vmem:[%s0 + $0x920] sm:$0xff]
  %v311 = vld [vmem:[%s0 + $0x928] sm:$0xff]
  %v312 = vld [vmem:[%s0 + $0x930] sm:$0xff]
  %v313 = vld [vmem:[%s0 + $0x938] sm:$0xff]
  %v314 = vld [vmem:[%s0 + $0x940] sm:$0xff]
  %v315 = vld [vmem:[%s0 + $0x948] sm:$0xff]
  %v316 = vld [vmem:[%s0 + $0x950] sm:$0xff]
  %v317 = vld [vmem:[%s0 + $0x958] sm:$0xff]
  %v318 = vld [vmem:[%s0 + $0x960] sm:$0xff]
  %v319 = vld [vmem:[%s0 + $0x968] sm:$0xff]
  %v320 = vld [vmem:[%s0 + $0x970] sm:$0xff]
  %v321 = vld [vmem:[%s0 + $0x978] sm:$0xff]
  %v322 = vld [vmem:[%s0 + $0x980] sm:$0xff]
  %v323 = vld [vmem:[%s0 + $0x988] sm:$0xff]
  %v324 = vld [vmem:[%s0 + $0x990] sm:$0xff]
  %v325 = vld [vmem:[%s0 + $0x998] sm:$0xff]
  %v326 = vld [vmem:[%s0 + $0x9a0] sm:$0xff]
  %v327 = vld [vmem:[%s0 + $0x9a8] sm:$0xff]
  %v328 = vld [vmem:[%s0 + $0x9b0] sm:$0xff]
  %v329 = vld [vmem:[%s0 + $0x9b8] sm:$0xff]
  %v330 = vld [vmem:[%s0 + $0x9c0] sm:$0xff]
  %v331 = vld [vmem:[%s0 + $0x9c8] sm:$0xff]
  %v332 = vld [vmem:[%s0 + $0x9d0] sm:$0xff]
  %v333 = vld [vmem:[%s0 + $0x9d8] sm:$0xff]
  %v334 = vld [vmem:[%s0 + $0x9e0] sm:$0xff]
  %v335 = vld [vmem:[%s0 + $0x9e8] sm:$0xff]
  %v336 = vld [vmem:[%s0 + $0x9f0] sm:$0xff]
  %v337 = vld [vmem:[%s0 + $0x9f8] sm:$0xff]
  %v338 = vld [vmem:[%s0 + $0xa00] sm:$0xff]
  %v339 = vld [vmem:[%s0 + $0xa08] sm:$0xff]
  %v340 = vld [vmem:[%s0 + $0xa10] sm:$0xff]
  %v341 = vld [vmem:[%s0 + $0xa18] sm:$0xff]
  %v342 = vld [vmem:[%s0 + $0xa20] sm:$0xff]
  %v343 = vld [vmem:[%s0 + $0xa28] sm:$0xff]
  %v344 = vld [vmem:[%s0 + $0xa30] sm:$0xff]
  %v345 = vld [vmem:[%s0 + $0xa38] sm:$0xff]
  %v346 = vld [vmem:[%s0 + $0xa40] sm:$0xff]
  %v347 = vld [vmem:[%s0 + $0xa48] sm:$0xff]
  %v348 = vld [vmem:[%s0 + $0xa50] sm:$0xff]
  %v349 = vld [vmem:[%s0 + $0xa58] sm:$0xff]
  %v350 = vld [vmem:[%s0 + $0xa60] sm:$0xff]
  %v351 = vld [vmem:[%s0 + $0xa68] sm:$0xff]
  %v352 = vld [vmem:[%s0 + $0xa70] sm:$0xff]
  %v353 = vld [vmem:[%s0 + $0xa78] sm:$0xff]
  %v354 = vld [vmem:[%s0 + $0xa80] sm:$0xff]
  %v355 = vld [vmem:[%s0 + $0xa88] sm:$0xff]
  %v356 = vld [vmem:[%s0 + $0xa90] sm:$0xff]
  %v357 = vld [vmem:[%s0 + $0xa98] sm:$0xff]
  %v358 = vld [vmem:[%s0 + $0xaa0] sm:$0xff]
  %v359 = vld [vmem:[%s0 + $0xaa8] sm:$0xff]
  %v360 = vld [vmem:[%s0 + $0xab0] sm:$0xff]
  %v361 = vld [vmem:[%s0 + $0xab8] sm:$0xff]
  %v362 = vld [vmem:[%s0 + $0xac0] sm:$0xff]
  %v363 = vld [vmem:[%s0 + $0xac8] sm:$0xff]
  %v364 = vld [vmem:[%s0 + $0xad0] sm:$0xff]
  %v365 = vld [vmem:[%s0 + $0xad8] sm:$0xff]
  %v366 = vld [vmem:[%s0 + $0xae0] sm:$0xff]
  %v367 = vld [vmem:[%s0 + $0xae8] sm:$0xff]
  %v368 = vld [vmem:[%s0 + $0xaf0] sm:$0xff]
  %v369 = vld [vmem:[%s0 + $0xaf8] sm:$0xff]
  %v370 = vld [vmem:[%s0 + $0xb00] sm:$0xff]
  %v371 = vld [vmem:[%s0 + $0xb08] sm:$0xff]
  %v372 = vld [vmem:[%s0 + $0xb10] sm:$0xff]
  %v373 = vld [vmem:[%s0 + $0xb18] sm:$0xff]
  %v374 = vld [vmem:[%s0 + $0xb20] sm:$0xff]
  %v375 = vld [vmem:[%s0 + $0xb28] sm:$0xff]
  %v376 = vld [vmem:[%s0 + $0xb30] sm:$0xff]
  %v377 = vld [vmem:[%s0 + $0xb38] sm:$0xff]
  %v378 = vld [vmem:[%s0 + $0xb40] sm:$0xff]
  %v379 = vld [vmem:[%s0 + $0xb48] sm:$0xff]
  %v380 = vld [vmem:[%s0 + $0xb50] sm:$0xff]
  %v381 = vld [vmem:[%s0 + $0xb58] sm:$0xff]
  %v382 = vld [vmem:[%s0 + $0xb60] sm:$0xff]
  %v383 = vld [vmem:[%s0 + $0xb68] sm:$0xff]
  %v384 = vld [vmem:[%s0 + $0xb70] sm:$0xff]
  %v385 = vld [vmem:[%s0 + $0xb78] sm:$0xff]
  %v386 = vld [vmem:[%s0 + $0xb80] sm:$0xff]
  %v387 = vld [vmem:[%s0 + $0xb88] sm:$0xff]
  %v388 = vld [vmem:[%s0 + $0xb90] sm:$0xff]
  %v389 = vld [vmem:[%s0 + $0xb98] sm:$0xff]
  %v390 = vld [vmem:[%s0 + $0xba0] sm:$0xff]
  %v391 = vld [vmem:[%s0 + $0xba8] sm:$0xff]
  %v392 = vld [vmem:[%s0 + $0xbb0] sm:$0xff]
  %v393 = vld [vmem:[%s0 + $0xbb8] sm:$0xff]
  %v394 = vld [vmem:[%s0 + $0xbc0] sm:$0xff]
  %v395 = vld [vmem:[%s0 + $0xbc8] sm:$0xff]
  %v396 = vld [vmem:[%s0 + $0xbd0] sm:$0xff]
  %v397 = vld [vmem:[%s0 + $0xbd8] sm:$0xff]
  %v398 = vld [vmem:[%s0 + $0xbe0] sm:$0xff]
  %v399 = vld [vmem:[%s0 + $0xbe8] sm:$0xff]
  %v400 = vld [vmem:[%s0 + $0xbf0] sm:$0xff]
  %v401 = vld [vmem:[%s0 + $0xbf8] sm:$0xff]
  %v402 = vld [vmem:[%s0 + $0xc00] sm:$0xff]
  %v403 = vld [vmem:[%s0 + $0xc08] sm:$0xff]
  %v404 = vld [vmem:[%s0 + $0xc10] sm:$0xff]
  %v405 = vld [vmem:[%s0 + $0xc18] sm:$0xff]
  %v406 = vld [vmem:[%s0 + $0xc20] sm:$0xff]
  %v407 = vld [vmem:[%s0 + $0xc28] sm:$0xff]
  %v408 = vld [vmem:[%s0 + $0xc30] sm:$0xff]
  %v409 = vld [vmem:[%s0 + $0xc38] sm:$0xff]
  %v410 = vld [vmem:[%s0 + $0xc40] sm:$0xff]
  %v411 = vld [vmem:[%s0 + $0xc48] sm:$0xff]
  %v412 = vld [vmem:[%s0 + $0xc50] sm:$0xff]
  %v413 = vld [vmem:[%s0 + $0xc58] sm:$0xff]
  %v414 = vld [vmem:[%s0 + $0xc60] sm:$0xff]
  %v415 = vld [vmem:[%s0 + $0xc68] sm:$0xff]
  %v416 = vld [vmem:[%s0 + $0xc70] sm:$0xff]
  %v417 = vld [vmem:[%s0 + $0xc78] sm:$0xff]
  %v418 = vpack.c.bf16 %v43, %v18
  %v419 = vpack.c.bf16 %v44, %v19
  %v420 = vpack.c.bf16 %v45, %v20
  %v421 = vpack.c.bf16 %v46, %v21
  %v422 = vpack.c.bf16 %v47, %v22
  %v423 = vpack.c.bf16 %v48, %v23
  %v424 = vpack.c.bf16 %v49, %v24
  %v425 = vpack.c.bf16 %v50, %v25
  %v426 = vpack.c.bf16 %v51, %v26
  %v427 = vpack.c.bf16 %v52, %v27
  %v428 = vpack.c.bf16 %v53, %v28
  %v429 = vpack.c.bf16 %v54, %v29
  %v430 = vpack.c.bf16 %v55, %v30
  %v431 = vpack.c.bf16 %v56, %v31
  %v432 = vpack.c.bf16 %v57, %v32
  %v433 = vpack.c.bf16 %v58, %v33
  %v434 = vpack.c.bf16 %v59, %v34
  %v435 = vpack.c.bf16 %v60, %v35
  %v436 = vpack.c.bf16 %v61, %v36
  %v437 = vpack.c.bf16 %v62, %v37
  %v438 = vpack.c.bf16 %v63, %v38
  %v439 = vpack.c.bf16 %v64, %v39
  %v440 = vpack.c.bf16 %v65, %v40
  %v441 = vpack.c.bf16 %v66, %v41
  %v442 = vpack.c.bf16 %v67, %v42
  %v443 = vpack.c.bf16 %v93, %v68
  %v444 = vpack.c.bf16 %v94, %v69
  %v445 = vpack.c.bf16 %v95, %v70
  %v446 = vpack.c.bf16 %v96, %v71
  %v447 = vpack.c.bf16 %v97, %v72
  %v448 = vpack.c.bf16 %v98, %v73
  %v449 = vpack.c.bf16 %v99, %v74
  %v450 = vpack.c.bf16 %v100, %v75
  %v451 = vpack.c.bf16 %v101, %v76
  %v452 = vpack.c.bf16 %v102, %v77
  %v453 = vpack.c.bf16 %v103, %v78
  %v454 = vpack.c.bf16 %v104, %v79
  %v455 = vpack.c.bf16 %v105, %v80
  %v456 = vpack.c.bf16 %v106, %v81
  %v457 = vpack.c.bf16 %v107, %v82
  %v458 = vpack.c.bf16 %v108, %v83
  %v459 = vpack.c.bf16 %v109, %v84
  %v460 = vpack.c.bf16 %v110, %v85
  %v461 = vpack.c.bf16 %v111, %v86
  %v462 = vpack.c.bf16 %v112, %v87
  %v463 = vpack.c.bf16 %v113, %v88
  %v464 = vpack.c.bf16 %v114, %v89
  %v465 = vpack.c.bf16 %v115, %v90
  %v466 = vpack.c.bf16 %v116, %v91
  %v467 = vpack.c.bf16 %v117, %v92
  %v468 = vpack.c.bf16 %v143, %v118
  %v469 = vpack.c.bf16 %v144, %v119
  %v470 = vpack.c.bf16 %v145, %v120
  %v471 = vpack.c.bf16 %v146, %v121
  %v472 = vpack.c.bf16 %v147, %v122
  %v473 = vpack.c.bf16 %v148, %v123
  %v474 = vpack.c.bf16 %v149, %v124
  %v475 = vpack.c.bf16 %v150, %v125
  %v476 = vpack.c.bf16 %v151, %v126
  %v477 = vpack.c.bf16 %v152, %v127
  %v478 = vpack.c.bf16 %v153, %v128
  %v479 = vpack.c.bf16 %v154, %v129
  %v480 = vpack.c.bf16 %v155, %v130
  %v481 = vpack.c.bf16 %v156, %v131
  %v482 = vpack.c.bf16 %v157, %v132
  %v483 = vpack.c.bf16 %v158, %v133
  %v484 = vpack.c.bf16 %v159, %v134
  %v485 = vpack.c.bf16 %v160, %v135
  %v486 = vpack.c.bf16 %v161, %v136
  %v487 = vpack.c.bf16 %v162, %v137
  %v488 = vpack.c.bf16 %v163, %v138
  %v489 = vpack.c.bf16 %v164, %v139
  %v490 = vpack.c.bf16 %v165, %v140
  %v491 = vpack.c.bf16 %v166, %v141
  %v492 = vpack.c.bf16 %v167, %v142
  %v493 = vpack.c.bf16 %v193, %v168
  %v494 = vpack.c.bf16 %v194, %v169
  %v495 = vpack.c.bf16 %v195, %v170
  %v496 = vpack.c.bf16 %v196, %v171
  %v497 = vpack.c.bf16 %v197, %v172
  %v498 = vpack.c.bf16 %v198, %v173
  %v499 = vpack.c.bf16 %v199, %v174
  %v500 = vpack.c.bf16 %v200, %v175
  %v501 = vpack.c.bf16 %v201, %v176
  %v502 = vpack.c.bf16 %v202, %v177
  %v503 = vpack.c.bf16 %v203, %v178
  %v504 = vpack.c.bf16 %v204, %v179
  %v505 = vpack.c.bf16 %v205, %v180
  %v506 = vpack.c.bf16 %v206, %v181
  %v507 = vpack.c.bf16 %v207, %v182
  %v508 = vpack.c.bf16 %v208, %v183
  %v509 = vpack.c.bf16 %v209, %v184
  %v510 = vpack.c.bf16 %v210, %v185
  %v511 = vpack.c.bf16 %v211, %v186
  %v512 = vpack.c.bf16 %v212, %v187
  %v513 = vpack.c.bf16 %v213, %v188
  %v514 = vpack.c.bf16 %v214, %v189
  %v515 = vpack.c.bf16 %v215, %v190
  %v516 = vpack.c.bf16 %v216, %v191
  %v517 = vpack.c.bf16 %v217, %v192
  %v518 = vpack.c.bf16 %v243, %v218
  %v519 = vpack.c.bf16 %v244, %v219
  %v520 = vpack.c.bf16 %v245, %v220
  %v521 = vpack.c.bf16 %v246, %v221
  %v522 = vpack.c.bf16 %v247, %v222
  %v523 = vpack.c.bf16 %v248, %v223
  %v524 = vpack.c.bf16 %v249, %v224
  %v525 = vpack.c.bf16 %v250, %v225
  %v526 = vpack.c.bf16 %v251, %v226
  %v527 = vpack.c.bf16 %v252, %v227
  %v528 = vpack.c.bf16 %v253, %v228
  %v529 = vpack.c.bf16 %v254, %v229
  %v530 = vpack.c.bf16 %v255, %v230
  %v531 = vpack.c.bf16 %v256, %v231
  %v532 = vpack.c.bf16 %v257, %v232
  %v533 = vpack.c.bf16 %v258, %v233
  %v534 = vpack.c.bf16 %v259, %v234
  %v535 = vpack.c.bf16 %v260, %v235
  %v536 = vpack.c.bf16 %v261, %v236
  %v537 = vpack.c.bf16 %v262, %v237
  %v538 = vpack.c.bf16 %v263, %v238
  %v539 = vpack.c.bf16 %v264, %v239
  %v540 = vpack.c.bf16 %v265, %v240
  %v541 = vpack.c.bf16 %v266, %v241
  %v542 = vpack.c.bf16 %v267, %v242
  %v543 = vpack.c.bf16 %v293, %v268
  %v544 = vpack.c.bf16 %v294, %v269
  %v545 = vpack.c.bf16 %v295, %v270
  %v546 = vpack.c.bf16 %v296, %v271
  %v547 = vpack.c.bf16 %v297, %v272
  %v548 = vpack.c.bf16 %v298, %v273
  %v549 = vpack.c.bf16 %v299, %v274
  %v550 = vpack.c.bf16 %v300, %v275
  %v551 = vpack.c.bf16 %v301, %v276
  %v552 = vpack.c.bf16 %v302, %v277
  %v553 = vpack.c.bf16 %v303, %v278
  %v554 = vpack.c.bf16 %v304, %v279
  %v555 = vpack.c.bf16 %v305, %v280
  %v556 = vpack.c.bf16 %v306, %v281
  %v557 = vpack.c.bf16 %v307, %v282
  %v558 = vpack.c.bf16 %v308, %v283
  %v559 = vpack.c.bf16 %v309, %v284
  %v560 = vpack.c.bf16 %v310, %v285
  %v561 = vpack.c.bf16 %v311, %v286
  %v562 = vpack.c.bf16 %v312, %v287
  %v563 = vpack.c.bf16 %v313, %v288
  %v564 = vpack.c.bf16 %v314, %v289
  %v565 = vpack.c.bf16 %v315, %v290
  %v566 = vpack.c.bf16 %v316, %v291
  %v567 = vpack.c.bf16 %v317, %v292
  %v568 = vpack.c.bf16 %v343, %v318
  %v569 = vpack.c.bf16 %v344, %v319
  %v570 = vpack.c.bf16 %v345, %v320
  %v571 = vpack.c.bf16 %v346, %v321
  %v572 = vpack.c.bf16 %v347, %v322
  %v573 = vpack.c.bf16 %v348, %v323
  %v574 = vpack.c.bf16 %v349, %v324
  %v575 = vpack.c.bf16 %v350, %v325
  %v576 = vpack.c.bf16 %v351, %v326
  %v577 = vpack.c.bf16 %v352, %v327
  %v578 = vpack.c.bf16 %v353, %v328
  %v579 = vpack.c.bf16 %v354, %v329
  %v580 = vpack.c.bf16 %v355, %v330
  %v581 = vpack.c.bf16 %v356, %v331
  %v582 = vpack.c.bf16 %v357, %v332
  %v583 = vpack.c.bf16 %v358, %v333
  %v584 = vpack.c.bf16 %v359, %v334
  %v585 = vpack.c.bf16 %v360, %v335
  %v586 = vpack.c.bf16 %v361, %v336
  %v587 = vpack.c.bf16 %v362, %v337
  %v588 = vpack.c.bf16 %v363, %v338
  %v589 = vpack.c.bf16 %v364, %v339
  %v590 = vpack.c.bf16 %v365, %v340
  %v591 = vpack.c.bf16 %v366, %v341
  %v592 = vpack.c.bf16 %v367, %v342
  %v593 = vpack.c.bf16 %v393, %v368
  %v594 = vpack.c.bf16 %v394, %v369
  %v595 = vpack.c.bf16 %v395, %v370
  %v596 = vpack.c.bf16 %v396, %v371
  %v597 = vpack.c.bf16 %v397, %v372
  %v598 = vpack.c.bf16 %v398, %v373
  %v599 = vpack.c.bf16 %v399, %v374
  %v600 = vpack.c.bf16 %v400, %v375
  %v601 = vpack.c.bf16 %v401, %v376
  %v602 = vpack.c.bf16 %v402, %v377
  %v603 = vpack.c.bf16 %v403, %v378
  %v604 = vpack.c.bf16 %v404, %v379
  %v605 = vpack.c.bf16 %v405, %v380
  %v606 = vpack.c.bf16 %v406, %v381
  %v607 = vpack.c.bf16 %v407, %v382
  %v608 = vpack.c.bf16 %v408, %v383
  %v609 = vpack.c.bf16 %v409, %v384
  %v610 = vpack.c.bf16 %v410, %v385
  %v611 = vpack.c.bf16 %v411, %v386
  %v612 = vpack.c.bf16 %v412, %v387
  %v613 = vpack.c.bf16 %v413, %v388
  %v614 = vpack.c.bf16 %v414, %v389
  %v615 = vpack.c.bf16 %v415, %v390
  %v616 = vpack.c.bf16 %v416, %v391
  %v617 = vpack.c.bf16 %v417, %v392
  %v618 = vld [vmem:[%s1] sm:$0xf]
  %v619 = vld [vmem:[%s1 + $0x4] sm:$0xf]
  %v620 = vld [vmem:[%s1 + $0x8] sm:$0xf]
  %v621 = vld [vmem:[%s1 + $0xc] sm:$0xf]
  %v622 = vld [vmem:[%s1 + $0x10] sm:$0xf]
  %v623 = vld [vmem:[%s1 + $0x14] sm:$0xf]
  %v624 = vld [vmem:[%s1 + $0x18] sm:$0xf]
  %v625 = vld [vmem:[%s1 + $0x1c] sm:$0xf]
  %v626 = vld [vmem:[%s1 + $0x20] sm:$0xf]
  %v627 = vld [vmem:[%s1 + $0x24] sm:$0xf]
  %v628 = vld [vmem:[%s1 + $0x28] sm:$0xf]
  %v629 = vld [vmem:[%s1 + $0x2c] sm:$0xf]
  %v630 = vld [vmem:[%s1 + $0x30] sm:$0xf]
  %v631 = vld [vmem:[%s1 + $0x34] sm:$0xf]
  %v632 = vld [vmem:[%s1 + $0x38] sm:$0xf]
  %v633 = vld [vmem:[%s1 + $0x3c] sm:$0xf]
  %v634 = vld [vmem:[%s1 + $0x40] sm:$0xf]
  %v635 = vld [vmem:[%s1 + $0x44] sm:$0xf]
  %v636 = vld [vmem:[%s1 + $0x48] sm:$0xf]
  %v637 = vld [vmem:[%s1 + $0x4c] sm:$0xf]
  %v638 = vld [vmem:[%s1 + $0x50] sm:$0xf]
  %v639 = vld [vmem:[%s1 + $0x54] sm:$0xf]
  %v640 = vld [vmem:[%s1 + $0x58] sm:$0xf]
  %v641 = vld [vmem:[%s1 + $0x5c] sm:$0xf]
  %v642 = vld [vmem:[%s1 + $0x60] sm:$0xf]
  %v643 = vld [vmem:[%s1 + $0x64] sm:$0xf]
  %v644 = vld [vmem:[%s1 + $0x68] sm:$0xf]
  %v645 = vld [vmem:[%s1 + $0x6c] sm:$0xf]
  %v646 = vld [vmem:[%s1 + $0x70] sm:$0xf]
  %v647 = vld [vmem:[%s1 + $0x74] sm:$0xf]
  %v648 = vld [vmem:[%s1 + $0x78] sm:$0xf]
  %v649 = vld [vmem:[%s1 + $0x7c] sm:$0xf]
  %v650 = vld [vmem:[%s1 + $0x80] sm:$0xf]
  %v651 = vld [vmem:[%s1 + $0x84] sm:$0xf]
  %v652 = vld [vmem:[%s1 + $0x88] sm:$0xf]
  %v653 = vld [vmem:[%s1 + $0x8c] sm:$0xf]
  %v654 = vld [vmem:[%s1 + $0x90] sm:$0xf]
  %v655 = vld [vmem:[%s1 + $0x94] sm:$0xf]
  %v656 = vld [vmem:[%s1 + $0x98] sm:$0xf]
  %v657 = vld [vmem:[%s1 + $0x9c] sm:$0xf]
  %v658 = vld [vmem:[%s1 + $0xa0] sm:$0xf]
  %v659 = vld [vmem:[%s1 + $0xa4] sm:$0xf]
  %v660 = vld [vmem:[%s1 + $0xa8] sm:$0xf]
  %v661 = vld [vmem:[%s1 + $0xac] sm:$0xf]
  %v662 = vld [vmem:[%s1 + $0xb0] sm:$0xf]
  %v663 = vld [vmem:[%s1 + $0xb4] sm:$0xf]
  %v664 = vld [vmem:[%s1 + $0xb8] sm:$0xf]
  %v665 = vld [vmem:[%s1 + $0xbc] sm:$0xf]
  %v666 = vld [vmem:[%s1 + $0xc0] sm:$0xf]
  %v667 = vld [vmem:[%s1 + $0xc4] sm:$0xf]
  %v668 = vld [vmem:[%s1 + $0xc8] sm:$0xf]
  %v669 = vld [vmem:[%s1 + $0xcc] sm:$0xf]
  %v670 = vld [vmem:[%s1 + $0xd0] sm:$0xf]
  %v671 = vld [vmem:[%s1 + $0xd4] sm:$0xf]
  %v672 = vld [vmem:[%s1 + $0xd8] sm:$0xf]
  %v673 = vld [vmem:[%s1 + $0xdc] sm:$0xf]
  %v674 = vld [vmem:[%s1 + $0xe0] sm:$0xf]
  %v675 = vld [vmem:[%s1 + $0xe4] sm:$0xf]
  %v676 = vld [vmem:[%s1 + $0xe8] sm:$0xf]
  %v677 = vld [vmem:[%s1 + $0xec] sm:$0xf]
  %v678 = vld [vmem:[%s1 + $0xf0] sm:$0xf]
  %v679 = vld [vmem:[%s1 + $0xf4] sm:$0xf]
  %v680 = vld [vmem:[%s1 + $0xf8] sm:$0xf]
  %v681 = vld [vmem:[%s1 + $0xfc] sm:$0xf]
  %v682 = vld [vmem:[%s1 + $0x100] sm:$0xf]
  %v683 = vld [vmem:[%s1 + $0x104] sm:$0xf]
  %v684 = vld [vmem:[%s1 + $0x108] sm:$0xf]
  %v685 = vld [vmem:[%s1 + $0x10c] sm:$0xf]
  %v686 = vld [vmem:[%s1 + $0x110] sm:$0xf]
  %v687 = vld [vmem:[%s1 + $0x114] sm:$0xf]
  %v688 = vld [vmem:[%s1 + $0x118] sm:$0xf]
  %v689 = vld [vmem:[%s1 + $0x11c] sm:$0xf]
  %v690 = vld [vmem:[%s1 + $0x120] sm:$0xf]
  %v691 = vld [vmem:[%s1 + $0x124] sm:$0xf]
  %v692 = vld [vmem:[%s1 + $0x128] sm:$0xf]
  %v693 = vld [vmem:[%s1 + $0x12c] sm:$0xf]
  %v694 = vld [vmem:[%s1 + $0x130] sm:$0xf]
  %v695 = vld [vmem:[%s1 + $0x134] sm:$0xf]
  %v696 = vld [vmem:[%s1 + $0x138] sm:$0xf]
  %v697 = vld [vmem:[%s1 + $0x13c] sm:$0xf]
  %v698 = vld [vmem:[%s1 + $0x140] sm:$0xf]
  %v699 = vld [vmem:[%s1 + $0x144] sm:$0xf]
  %v700 = vld [vmem:[%s1 + $0x148] sm:$0xf]
  %v701 = vld [vmem:[%s1 + $0x14c] sm:$0xf]
  %v702 = vld [vmem:[%s1 + $0x150] sm:$0xf]
  %v703 = vld [vmem:[%s1 + $0x154] sm:$0xf]
  %v704 = vld [vmem:[%s1 + $0x158] sm:$0xf]
  %v705 = vld [vmem:[%s1 + $0x15c] sm:$0xf]
  %v706 = vld [vmem:[%s1 + $0x160] sm:$0xf]
  %v707 = vld [vmem:[%s1 + $0x164] sm:$0xf]
  %v708 = vld [vmem:[%s1 + $0x168] sm:$0xf]
  %v709 = vld [vmem:[%s1 + $0x16c] sm:$0xf]
  %v710 = vld [vmem:[%s1 + $0x170] sm:$0xf]
  %v711 = vld [vmem:[%s1 + $0x174] sm:$0xf]
  %v712 = vld [vmem:[%s1 + $0x178] sm:$0xf]
  %v713 = vld [vmem:[%s1 + $0x17c] sm:$0xf]
  %v714 = vld [vmem:[%s1 + $0x180] sm:$0xf]
  %v715 = vld [vmem:[%s1 + $0x184] sm:$0xf]
  %v716 = vld [vmem:[%s1 + $0x188] sm:$0xf]
  %v717 = vld [vmem:[%s1 + $0x18c] sm:$0xf]
  %v718 = vld [vmem:[%s1 + $0x190] sm:$0xf]
  %v719 = vld [vmem:[%s1 + $0x194] sm:$0xf]
  %v720 = vld [vmem:[%s1 + $0x198] sm:$0xf]
  %v721 = vld [vmem:[%s1 + $0x19c] sm:$0xf]
  %v722 = vld [vmem:[%s1 + $0x1a0] sm:$0xf]
  %v723 = vld [vmem:[%s1 + $0x1a4] sm:$0xf]
  %v724 = vld [vmem:[%s1 + $0x1a8] sm:$0xf]
  %v725 = vld [vmem:[%s1 + $0x1ac] sm:$0xf]
  %v726 = vld [vmem:[%s1 + $0x1b0] sm:$0xf]
  %v727 = vld [vmem:[%s1 + $0x1b4] sm:$0xf]
  %v728 = vld [vmem:[%s1 + $0x1b8] sm:$0xf]
  %v729 = vld [vmem:[%s1 + $0x1bc] sm:$0xf]
  %v730 = vld [vmem:[%s1 + $0x1c0] sm:$0xf]
  %v731 = vld [vmem:[%s1 + $0x1c4] sm:$0xf]
  %v732 = vld [vmem:[%s1 + $0x1c8] sm:$0xf]
  %v733 = vld [vmem:[%s1 + $0x1cc] sm:$0xf]
  %v734 = vld [vmem:[%s1 + $0x1d0] sm:$0xf]
  %v735 = vld [vmem:[%s1 + $0x1d4] sm:$0xf]
  %v736 = vld [vmem:[%s1 + $0x1d8] sm:$0xf]
  %v737 = vld [vmem:[%s1 + $0x1dc] sm:$0xf]
  %v738 = vld [vmem:[%s1 + $0x1e0] sm:$0xf]
  %v739 = vld [vmem:[%s1 + $0x1e4] sm:$0xf]
  %v740 = vld [vmem:[%s1 + $0x1e8] sm:$0xf]
  %v741 = vld [vmem:[%s1 + $0x1ec] sm:$0xf]
  %v742 = vld [vmem:[%s1 + $0x1f0] sm:$0xf]
  %v743 = vld [vmem:[%s1 + $0x1f4] sm:$0xf]
  %v744 = vld [vmem:[%s1 + $0x1f8] sm:$0xf]
  %v745 = vld [vmem:[%s1 + $0x1fc] sm:$0xf]
  %v746 = vld [vmem:[%s1 + $0x200] sm:$0xf]
  %v747 = vld [vmem:[%s1 + $0x204] sm:$0xf]
  %v748 = vld [vmem:[%s1 + $0x208] sm:$0xf]
  %v749 = vld [vmem:[%s1 + $0x20c] sm:$0xf]
  %v750 = vld [vmem:[%s1 + $0x210] sm:$0xf]
  %v751 = vld [vmem:[%s1 + $0x214] sm:$0xf]
  %v752 = vld [vmem:[%s1 + $0x218] sm:$0xf]
  %v753 = vld [vmem:[%s1 + $0x21c] sm:$0xf]
  %v754 = vld [vmem:[%s1 + $0x220] sm:$0xf]
  %v755 = vld [vmem:[%s1 + $0x224] sm:$0xf]
  %v756 = vld [vmem:[%s1 + $0x228] sm:$0xf]
  %v757 = vld [vmem:[%s1 + $0x22c] sm:$0xf]
  %v758 = vld [vmem:[%s1 + $0x230] sm:$0xf]
  %v759 = vld [vmem:[%s1 + $0x234] sm:$0xf]
  %v760 = vld [vmem:[%s1 + $0x238] sm:$0xf]
  %v761 = vld [vmem:[%s1 + $0x23c] sm:$0xf]
  %v762 = vld [vmem:[%s1 + $0x240] sm:$0xf]
  %v763 = vld [vmem:[%s1 + $0x244] sm:$0xf]
  %v764 = vld [vmem:[%s1 + $0x248] sm:$0xf]
  %v765 = vld [vmem:[%s1 + $0x24c] sm:$0xf]
  %v766 = vld [vmem:[%s1 + $0x250] sm:$0xf]
  %v767 = vld [vmem:[%s1 + $0x254] sm:$0xf]
  %v768 = vld [vmem:[%s1 + $0x258] sm:$0xf]
  %v769 = vld [vmem:[%s1 + $0x25c] sm:$0xf]
  %v770 = vld [vmem:[%s1 + $0x260] sm:$0xf]
  %v771 = vld [vmem:[%s1 + $0x264] sm:$0xf]
  %v772 = vld [vmem:[%s1 + $0x268] sm:$0xf]
  %v773 = vld [vmem:[%s1 + $0x26c] sm:$0xf]
  %v774 = vld [vmem:[%s1 + $0x270] sm:$0xf]
  %v775 = vld [vmem:[%s1 + $0x274] sm:$0xf]
  %v776 = vld [vmem:[%s1 + $0x278] sm:$0xf]
  %v777 = vld [vmem:[%s1 + $0x27c] sm:$0xf]
  %v778 = vld [vmem:[%s1 + $0x280] sm:$0xf]
  %v779 = vld [vmem:[%s1 + $0x284] sm:$0xf]
  %v780 = vld [vmem:[%s1 + $0x288] sm:$0xf]
  %v781 = vld [vmem:[%s1 + $0x28c] sm:$0xf]
  %v782 = vld [vmem:[%s1 + $0x290] sm:$0xf]
  %v783 = vld [vmem:[%s1 + $0x294] sm:$0xf]
  %v784 = vld [vmem:[%s1 + $0x298] sm:$0xf]
  %v785 = vld [vmem:[%s1 + $0x29c] sm:$0xf]
  %v786 = vld [vmem:[%s1 + $0x2a0] sm:$0xf]
  %v787 = vld [vmem:[%s1 + $0x2a4] sm:$0xf]
  %v788 = vld [vmem:[%s1 + $0x2a8] sm:$0xf]
  %v789 = vld [vmem:[%s1 + $0x2ac] sm:$0xf]
  %v790 = vld [vmem:[%s1 + $0x2b0] sm:$0xf]
  %v791 = vld [vmem:[%s1 + $0x2b4] sm:$0xf]
  %v792 = vld [vmem:[%s1 + $0x2b8] sm:$0xf]
  %v793 = vld [vmem:[%s1 + $0x2bc] sm:$0xf]
  %v794 = vld [vmem:[%s1 + $0x2c0] sm:$0xf]
  %v795 = vld [vmem:[%s1 + $0x2c4] sm:$0xf]
  %v796 = vld [vmem:[%s1 + $0x2c8] sm:$0xf]
  %v797 = vld [vmem:[%s1 + $0x2cc] sm:$0xf]
  %v798 = vld [vmem:[%s1 + $0x2d0] sm:$0xf]
  %v799 = vld [vmem:[%s1 + $0x2d4] sm:$0xf]
  %v800 = vld [vmem:[%s1 + $0x2d8] sm:$0xf]
  %v801 = vld [vmem:[%s1 + $0x2dc] sm:$0xf]
  %v802 = vld [vmem:[%s1 + $0x2e0] sm:$0xf]
  %v803 = vld [vmem:[%s1 + $0x2e4] sm:$0xf]
  %v804 = vld [vmem:[%s1 + $0x2e8] sm:$0xf]
  %v805 = vld [vmem:[%s1 + $0x2ec] sm:$0xf]
  %v806 = vld [vmem:[%s1 + $0x2f0] sm:$0xf]
  %v807 = vld [vmem:[%s1 + $0x2f4] sm:$0xf]
  %v808 = vld [vmem:[%s1 + $0x2f8] sm:$0xf]
  %v809 = vld [vmem:[%s1 + $0x2fc] sm:$0xf]
  %v810 = vld [vmem:[%s1 + $0x300] sm:$0xf]
  %v811 = vld [vmem:[%s1 + $0x304] sm:$0xf]
  %v812 = vld [vmem:[%s1 + $0x308] sm:$0xf]
  %v813 = vld [vmem:[%s1 + $0x30c] sm:$0xf]
  %v814 = vld [vmem:[%s1 + $0x310] sm:$0xf]
  %v815 = vld [vmem:[%s1 + $0x314] sm:$0xf]
  %v816 = vld [vmem:[%s1 + $0x318] sm:$0xf]
  %v817 = vld [vmem:[%s1 + $0x31c] sm:$0xf]
  %v818 = vld [vmem:[%s1 + $0x320] sm:$0xf]
  %v819 = vld [vmem:[%s1 + $0x324] sm:$0xf]
  %v820 = vld [vmem:[%s1 + $0x328] sm:$0xf]
  %v821 = vld [vmem:[%s1 + $0x32c] sm:$0xf]
  %v822 = vld [vmem:[%s1 + $0x330] sm:$0xf]
  %v823 = vld [vmem:[%s1 + $0x334] sm:$0xf]
  %v824 = vld [vmem:[%s1 + $0x338] sm:$0xf]
  %v825 = vld [vmem:[%s1 + $0x33c] sm:$0xf]
  %v826 = vld [vmem:[%s1 + $0x340] sm:$0xf]
  %v827 = vld [vmem:[%s1 + $0x344] sm:$0xf]
  %v828 = vld [vmem:[%s1 + $0x348] sm:$0xf]
  %v829 = vld [vmem:[%s1 + $0x34c] sm:$0xf]
  %v830 = vld [vmem:[%s1 + $0x350] sm:$0xf]
  %v831 = vld [vmem:[%s1 + $0x354] sm:$0xf]
  %v832 = vld [vmem:[%s1 + $0x358] sm:$0xf]
  %v833 = vld [vmem:[%s1 + $0x35c] sm:$0xf]
  %v834 = vld [vmem:[%s1 + $0x360] sm:$0xf]
  %v835 = vld [vmem:[%s1 + $0x364] sm:$0xf]
  %v836 = vld [vmem:[%s1 + $0x368] sm:$0xf]
  %v837 = vld [vmem:[%s1 + $0x36c] sm:$0xf]
  %v838 = vld [vmem:[%s1 + $0x370] sm:$0xf]
  %v839 = vld [vmem:[%s1 + $0x374] sm:$0xf]
  %v840 = vld [vmem:[%s1 + $0x378] sm:$0xf]
  %v841 = vld [vmem:[%s1 + $0x37c] sm:$0xf]
  %v842 = vld [vmem:[%s1 + $0x380] sm:$0xf]
  %v843 = vld [vmem:[%s1 + $0x384] sm:$0xf]
  %v844 = vld [vmem:[%s1 + $0x388] sm:$0xf]
  %v845 = vld [vmem:[%s1 + $0x38c] sm:$0xf]
  %v846 = vld [vmem:[%s1 + $0x390] sm:$0xf]
  %v847 = vld [vmem:[%s1 + $0x394] sm:$0xf]
  %v848 = vld [vmem:[%s1 + $0x398] sm:$0xf]
  %v849 = vld [vmem:[%s1 + $0x39c] sm:$0xf]
  %v850 = vld [vmem:[%s1 + $0x3a0] sm:$0xf]
  %v851 = vld [vmem:[%s1 + $0x3a4] sm:$0xf]
  %v852 = vld [vmem:[%s1 + $0x3a8] sm:$0xf]
  %v853 = vld [vmem:[%s1 + $0x3ac] sm:$0xf]
  %v854 = vld [vmem:[%s1 + $0x3b0] sm:$0xf]
  %v855 = vld [vmem:[%s1 + $0x3b4] sm:$0xf]
  %v856 = vld [vmem:[%s1 + $0x3b8] sm:$0xf]
  %v857 = vld [vmem:[%s1 + $0x3bc] sm:$0xf]
  %v858 = vld [vmem:[%s1 + $0x3c0] sm:$0xf]
  %v859 = vld [vmem:[%s1 + $0x3c4] sm:$0xf]
  %v860 = vld [vmem:[%s1 + $0x3c8] sm:$0xf]
  %v861 = vld [vmem:[%s1 + $0x3cc] sm:$0xf]
  %v862 = vld [vmem:[%s1 + $0x3d0] sm:$0xf]
  %v863 = vld [vmem:[%s1 + $0x3d4] sm:$0xf]
  %v864 = vld [vmem:[%s1 + $0x3d8] sm:$0xf]
  %v865 = vld [vmem:[%s1 + $0x3dc] sm:$0xf]
  %v866 = vld [vmem:[%s1 + $0x3e0] sm:$0xf]
  %v867 = vld [vmem:[%s1 + $0x3e4] sm:$0xf]
  %v868 = vld [vmem:[%s1 + $0x3e8] sm:$0xf]
  %v869 = vld [vmem:[%s1 + $0x3ec] sm:$0xf]
  %v870 = vld [vmem:[%s1 + $0x3f0] sm:$0xf]
  %v871 = vld [vmem:[%s1 + $0x3f4] sm:$0xf]
  %v872 = vld [vmem:[%s1 + $0x3f8] sm:$0xf]
  %v873 = vld [vmem:[%s1 + $0x3fc] sm:$0xf]
  %v874 = vld [vmem:[%s1 + $0x400] sm:$0xf]
  %v875 = vld [vmem:[%s1 + $0x404] sm:$0xf]
  %v876 = vld [vmem:[%s1 + $0x408] sm:$0xf]
  %v877 = vld [vmem:[%s1 + $0x40c] sm:$0xf]
  %v878 = vld [vmem:[%s1 + $0x410] sm:$0xf]
  %v879 = vld [vmem:[%s1 + $0x414] sm:$0xf]
  %v880 = vld [vmem:[%s1 + $0x418] sm:$0xf]
  %v881 = vld [vmem:[%s1 + $0x41c] sm:$0xf]
  %v882 = vld [vmem:[%s1 + $0x420] sm:$0xf]
  %v883 = vld [vmem:[%s1 + $0x424] sm:$0xf]
  %v884 = vld [vmem:[%s1 + $0x428] sm:$0xf]
  %v885 = vld [vmem:[%s1 + $0x42c] sm:$0xf]
  %v886 = vld [vmem:[%s1 + $0x430] sm:$0xf]
  %v887 = vld [vmem:[%s1 + $0x434] sm:$0xf]
  %v888 = vld [vmem:[%s1 + $0x438] sm:$0xf]
  %v889 = vld [vmem:[%s1 + $0x43c] sm:$0xf]
  %v890 = vld [vmem:[%s1 + $0x440] sm:$0xf]
  %v891 = vld [vmem:[%s1 + $0x444] sm:$0xf]
  %v892 = vld [vmem:[%s1 + $0x448] sm:$0xf]
  %v893 = vld [vmem:[%s1 + $0x44c] sm:$0xf]
  %v894 = vld [vmem:[%s1 + $0x450] sm:$0xf]
  %v895 = vld [vmem:[%s1 + $0x454] sm:$0xf]
  %v896 = vld [vmem:[%s1 + $0x458] sm:$0xf]
  %v897 = vld [vmem:[%s1 + $0x45c] sm:$0xf]
  %v898 = vld [vmem:[%s1 + $0x460] sm:$0xf]
  %v899 = vld [vmem:[%s1 + $0x464] sm:$0xf]
  %v900 = vld [vmem:[%s1 + $0x468] sm:$0xf]
  %v901 = vld [vmem:[%s1 + $0x46c] sm:$0xf]
  %v902 = vld [vmem:[%s1 + $0x470] sm:$0xf]
  %v903 = vld [vmem:[%s1 + $0x474] sm:$0xf]
  %v904 = vld [vmem:[%s1 + $0x478] sm:$0xf]
  %v905 = vld [vmem:[%s1 + $0x47c] sm:$0xf]
  %v906 = vld [vmem:[%s1 + $0x480] sm:$0xf]
  %v907 = vld [vmem:[%s1 + $0x484] sm:$0xf]
  %v908 = vld [vmem:[%s1 + $0x488] sm:$0xf]
  %v909 = vld [vmem:[%s1 + $0x48c] sm:$0xf]
  %v910 = vld [vmem:[%s1 + $0x490] sm:$0xf]
  %v911 = vld [vmem:[%s1 + $0x494] sm:$0xf]
  %v912 = vld [vmem:[%s1 + $0x498] sm:$0xf]
  %v913 = vld [vmem:[%s1 + $0x49c] sm:$0xf]
  %v914 = vld [vmem:[%s1 + $0x4a0] sm:$0xf]
  %v915 = vld [vmem:[%s1 + $0x4a4] sm:$0xf]
  %v916 = vld [vmem:[%s1 + $0x4a8] sm:$0xf]
  %v917 = vld [vmem:[%s1 + $0x4ac] sm:$0xf]
  %v918 = vld [vmem:[%s1 + $0x4b0] sm:$0xf]
  %v919 = vld [vmem:[%s1 + $0x4b4] sm:$0xf]
  %v920 = vld [vmem:[%s1 + $0x4b8] sm:$0xf]
  %v921 = vld [vmem:[%s1 + $0x4bc] sm:$0xf]
  %v922 = vld [vmem:[%s1 + $0x4c0] sm:$0xf]
  %v923 = vld [vmem:[%s1 + $0x4c4] sm:$0xf]
  %v924 = vld [vmem:[%s1 + $0x4c8] sm:$0xf]
  %v925 = vld [vmem:[%s1 + $0x4cc] sm:$0xf]
  %v926 = vld [vmem:[%s1 + $0x4d0] sm:$0xf]
  %v927 = vld [vmem:[%s1 + $0x4d4] sm:$0xf]
  %v928 = vld [vmem:[%s1 + $0x4d8] sm:$0xf]
  %v929 = vld [vmem:[%s1 + $0x4dc] sm:$0xf]
  %v930 = vld [vmem:[%s1 + $0x4e0] sm:$0xf]
  %v931 = vld [vmem:[%s1 + $0x4e4] sm:$0xf]
  %v932 = vld [vmem:[%s1 + $0x4e8] sm:$0xf]
  %v933 = vld [vmem:[%s1 + $0x4ec] sm:$0xf]
  %v934 = vld [vmem:[%s1 + $0x4f0] sm:$0xf]
  %v935 = vld [vmem:[%s1 + $0x4f4] sm:$0xf]
  %v936 = vld [vmem:[%s1 + $0x4f8] sm:$0xf]
  %v937 = vld [vmem:[%s1 + $0x4fc] sm:$0xf]
  %v938 = vld [vmem:[%s1 + $0x500] sm:$0xf]
  %v939 = vld [vmem:[%s1 + $0x504] sm:$0xf]
  %v940 = vld [vmem:[%s1 + $0x508] sm:$0xf]
  %v941 = vld [vmem:[%s1 + $0x50c] sm:$0xf]
  %v942 = vld [vmem:[%s1 + $0x510] sm:$0xf]
  %v943 = vld [vmem:[%s1 + $0x514] sm:$0xf]
  %v944 = vld [vmem:[%s1 + $0x518] sm:$0xf]
  %v945 = vld [vmem:[%s1 + $0x51c] sm:$0xf]
  %v946 = vld [vmem:[%s1 + $0x520] sm:$0xf]
  %v947 = vld [vmem:[%s1 + $0x524] sm:$0xf]
  %v948 = vld [vmem:[%s1 + $0x528] sm:$0xf]
  %v949 = vld [vmem:[%s1 + $0x52c] sm:$0xf]
  %v950 = vld [vmem:[%s1 + $0x530] sm:$0xf]
  %v951 = vld [vmem:[%s1 + $0x534] sm:$0xf]
  %v952 = vld [vmem:[%s1 + $0x538] sm:$0xf]
  %v953 = vld [vmem:[%s1 + $0x53c] sm:$0xf]
  %v954 = vld [vmem:[%s1 + $0x540] sm:$0xf]
  %v955 = vld [vmem:[%s1 + $0x544] sm:$0xf]
  %v956 = vld [vmem:[%s1 + $0x548] sm:$0xf]
  %v957 = vld [vmem:[%s1 + $0x54c] sm:$0xf]
  %v958 = vld [vmem:[%s1 + $0x550] sm:$0xf]
  %v959 = vld [vmem:[%s1 + $0x554] sm:$0xf]
  %v960 = vld [vmem:[%s1 + $0x558] sm:$0xf]
  %v961 = vld [vmem:[%s1 + $0x55c] sm:$0xf]
  %v962 = vld [vmem:[%s1 + $0x560] sm:$0xf]
  %v963 = vld [vmem:[%s1 + $0x564] sm:$0xf]
  %v964 = vld [vmem:[%s1 + $0x568] sm:$0xf]
  %v965 = vld [vmem:[%s1 + $0x56c] sm:$0xf]
  %v966 = vld [vmem:[%s1 + $0x570] sm:$0xf]
  %v967 = vld [vmem:[%s1 + $0x574] sm:$0xf]
  %v968 = vld [vmem:[%s1 + $0x578] sm:$0xf]
  %v969 = vld [vmem:[%s1 + $0x57c] sm:$0xf]
  %v970 = vld [vmem:[%s1 + $0x580] sm:$0xf]
  %v971 = vld [vmem:[%s1 + $0x584] sm:$0xf]
  %v972 = vld [vmem:[%s1 + $0x588] sm:$0xf]
  %v973 = vld [vmem:[%s1 + $0x58c] sm:$0xf]
  %v974 = vld [vmem:[%s1 + $0x590] sm:$0xf]
  %v975 = vld [vmem:[%s1 + $0x594] sm:$0xf]
  %v976 = vld [vmem:[%s1 + $0x598] sm:$0xf]
  %v977 = vld [vmem:[%s1 + $0x59c] sm:$0xf]
  %v978 = vld [vmem:[%s1 + $0x5a0] sm:$0xf]
  %v979 = vld [vmem:[%s1 + $0x5a4] sm:$0xf]
  %v980 = vld [vmem:[%s1 + $0x5a8] sm:$0xf]
  %v981 = vld [vmem:[%s1 + $0x5ac] sm:$0xf]
  %v982 = vld [vmem:[%s1 + $0x5b0] sm:$0xf]
  %v983 = vld [vmem:[%s1 + $0x5b4] sm:$0xf]
  %v984 = vld [vmem:[%s1 + $0x5b8] sm:$0xf]
  %v985 = vld [vmem:[%s1 + $0x5bc] sm:$0xf]
  %v986 = vld [vmem:[%s1 + $0x5c0] sm:$0xf]
  %v987 = vld [vmem:[%s1 + $0x5c4] sm:$0xf]
  %v988 = vld [vmem:[%s1 + $0x5c8] sm:$0xf]
  %v989 = vld [vmem:[%s1 + $0x5cc] sm:$0xf]
  %v990 = vld [vmem:[%s1 + $0x5d0] sm:$0xf]
  %v991 = vld [vmem:[%s1 + $0x5d4] sm:$0xf]
  %v992 = vld [vmem:[%s1 + $0x5d8] sm:$0xf]
  %v993 = vld [vmem:[%s1 + $0x5dc] sm:$0xf]
  %v994 = vld [vmem:[%s1 + $0x5e0] sm:$0xf]
  %v995 = vld [vmem:[%s1 + $0x5e4] sm:$0xf]
  %v996 = vld [vmem:[%s1 + $0x5e8] sm:$0xf]
  %v997 = vld [vmem:[%s1 + $0x5ec] sm:$0xf]
  %v998 = vld [vmem:[%s1 + $0x5f0] sm:$0xf]
  %v999 = vld [vmem:[%s1 + $0x5f4] sm:$0xf]
  %v1000 = vld [vmem:[%s1 + $0x5f8] sm:$0xf]
  %v1001 = vld [vmem:[%s1 + $0x5fc] sm:$0xf]
  %v1002 = vld [vmem:[%s1 + $0x600] sm:$0xf]
  %v1003 = vld [vmem:[%s1 + $0x604] sm:$0xf]
  %v1004 = vld [vmem:[%s1 + $0x608] sm:$0xf]
  %v1005 = vld [vmem:[%s1 + $0x60c] sm:$0xf]
  %v1006 = vld [vmem:[%s1 + $0x610] sm:$0xf]
  %v1007 = vld [vmem:[%s1 + $0x614] sm:$0xf]
  %v1008 = vld [vmem:[%s1 + $0x618] sm:$0xf]
  %v1009 = vld [vmem:[%s1 + $0x61c] sm:$0xf]
  %v1010 = vld [vmem:[%s1 + $0x620] sm:$0xf]
  %v1011 = vld [vmem:[%s1 + $0x624] sm:$0xf]
  %v1012 = vld [vmem:[%s1 + $0x628] sm:$0xf]
  %v1013 = vld [vmem:[%s1 + $0x62c] sm:$0xf]
  %v1014 = vld [vmem:[%s1 + $0x630] sm:$0xf]
  %v1015 = vld [vmem:[%s1 + $0x634] sm:$0xf]
  %v1016 = vld [vmem:[%s1 + $0x638] sm:$0xf]
  %v1017 = vld [vmem:[%s1 + $0x63c] sm:$0xf]
  %v1018 = vld [vmem:[%s2] sm:$0x1]
  %v1020 = vlaneseq
  %v1021 = vshrl.u32 %v1020, 7
  %v1022 = vsub.s32 0, %v1021
  %v1023 = vrot.slane %v1018, %v1022
  %v1425 = vunpack.c.l.b16 %v618
  %v1426 = vunpack.c.l.b16 %v619
  %v1427 = vunpack.c.l.b16 %v620
  %v1428 = vunpack.c.l.b16 %v621
  %v1429 = vunpack.c.l.b16 %v622
  %v1430 = vunpack.c.l.b16 %v623
  %v1431 = vunpack.c.l.b16 %v624
  %v1432 = vunpack.c.l.b16 %v625
  %v1433 = vunpack.c.l.b16 %v626
  %v1434 = vunpack.c.l.b16 %v627
  %v1435 = vunpack.c.l.b16 %v628
  %v1436 = vunpack.c.l.b16 %v629
  %v1437 = vunpack.c.l.b16 %v630
  %v1438 = vunpack.c.l.b16 %v631
  %v1439 = vunpack.c.l.b16 %v632
  %v1440 = vunpack.c.l.b16 %v633
  %v1441 = vunpack.c.l.b16 %v634
  %v1442 = vunpack.c.l.b16 %v635
  %v1443 = vunpack.c.l.b16 %v636
  %v1444 = vunpack.c.l.b16 %v637
  %v1445 = vunpack.c.l.b16 %v638
  %v1446 = vunpack.c.l.b16 %v639
  %v1447 = vunpack.c.l.b16 %v640
  %v1448 = vunpack.c.l.b16 %v641
  %v1449 = vunpack.c.l.b16 %v642
  %v1450 = vunpack.c.l.b16 %v643
  %v1451 = vunpack.c.l.b16 %v644
  %v1452 = vunpack.c.l.b16 %v645
  %v1453 = vunpack.c.l.b16 %v646
  %v1454 = vunpack.c.l.b16 %v647
  %v1455 = vunpack.c.l.b16 %v648
  %v1456 = vunpack.c.l.b16 %v649
  %v1457 = vunpack.c.l.b16 %v650
  %v1458 = vunpack.c.l.b16 %v651
  %v1459 = vunpack.c.l.b16 %v652
  %v1460 = vunpack.c.l.b16 %v653
  %v1461 = vunpack.c.l.b16 %v654
  %v1462 = vunpack.c.l.b16 %v655
  %v1463 = vunpack.c.l.b16 %v656
  %v1464 = vunpack.c.l.b16 %v657
  %v1465 = vunpack.c.l.b16 %v658
  %v1466 = vunpack.c.l.b16 %v659
  %v1467 = vunpack.c.l.b16 %v660
  %v1468 = vunpack.c.l.b16 %v661
  %v1469 = vunpack.c.l.b16 %v662
  %v1470 = vunpack.c.l.b16 %v663
  %v1471 = vunpack.c.l.b16 %v664
  %v1472 = vunpack.c.l.b16 %v665
  %v1473 = vunpack.c.l.b16 %v666
  %v1474 = vunpack.c.l.b16 %v667
  %v1475 = vunpack.c.l.b16 %v668
  %v1476 = vunpack.c.l.b16 %v669
  %v1477 = vunpack.c.l.b16 %v670
  %v1478 = vunpack.c.l.b16 %v671
  %v1479 = vunpack.c.l.b16 %v672
  %v1480 = vunpack.c.l.b16 %v673
  %v1481 = vunpack.c.l.b16 %v674
  %v1482 = vunpack.c.l.b16 %v675
  %v1483 = vunpack.c.l.b16 %v676
  %v1484 = vunpack.c.l.b16 %v677
  %v1485 = vunpack.c.l.b16 %v678
  %v1486 = vunpack.c.l.b16 %v679
  %v1487 = vunpack.c.l.b16 %v680
  %v1488 = vunpack.c.l.b16 %v681
  %v1489 = vunpack.c.l.b16 %v682
  %v1490 = vunpack.c.l.b16 %v683
  %v1491 = vunpack.c.l.b16 %v684
  %v1492 = vunpack.c.l.b16 %v685
  %v1493 = vunpack.c.l.b16 %v686
  %v1494 = vunpack.c.l.b16 %v687
  %v1495 = vunpack.c.l.b16 %v688
  %v1496 = vunpack.c.l.b16 %v689
  %v1497 = vunpack.c.l.b16 %v690
  %v1498 = vunpack.c.l.b16 %v691
  %v1499 = vunpack.c.l.b16 %v692
  %v1500 = vunpack.c.l.b16 %v693
  %v1501 = vunpack.c.l.b16 %v694
  %v1502 = vunpack.c.l.b16 %v695
  %v1503 = vunpack.c.l.b16 %v696
  %v1504 = vunpack.c.l.b16 %v697
  %v1505 = vunpack.c.l.b16 %v698
  %v1506 = vunpack.c.l.b16 %v699
  %v1507 = vunpack.c.l.b16 %v700
  %v1508 = vunpack.c.l.b16 %v701
  %v1509 = vunpack.c.l.b16 %v702
  %v1510 = vunpack.c.l.b16 %v703
  %v1511 = vunpack.c.l.b16 %v704
  %v1512 = vunpack.c.l.b16 %v705
  %v1513 = vunpack.c.l.b16 %v706
  %v1514 = vunpack.c.l.b16 %v707
  %v1515 = vunpack.c.l.b16 %v708
  %v1516 = vunpack.c.l.b16 %v709
  %v1517 = vunpack.c.l.b16 %v710
  %v1518 = vunpack.c.l.b16 %v711
  %v1519 = vunpack.c.l.b16 %v712
  %v1520 = vunpack.c.l.b16 %v713
  %v1521 = vunpack.c.l.b16 %v714
  %v1522 = vunpack.c.l.b16 %v715
  %v1523 = vunpack.c.l.b16 %v716
  %v1524 = vunpack.c.l.b16 %v717
  %v1525 = vunpack.c.l.b16 %v718
  %v1526 = vunpack.c.l.b16 %v719
  %v1527 = vunpack.c.l.b16 %v720
  %v1528 = vunpack.c.l.b16 %v721
  %v1529 = vunpack.c.l.b16 %v722
  %v1530 = vunpack.c.l.b16 %v723
  %v1531 = vunpack.c.l.b16 %v724
  %v1532 = vunpack.c.l.b16 %v725
  %v1533 = vunpack.c.l.b16 %v726
  %v1534 = vunpack.c.l.b16 %v727
  %v1535 = vunpack.c.l.b16 %v728
  %v1536 = vunpack.c.l.b16 %v729
  %v1537 = vunpack.c.l.b16 %v730
  %v1538 = vunpack.c.l.b16 %v731
  %v1539 = vunpack.c.l.b16 %v732
  %v1540 = vunpack.c.l.b16 %v733
  %v1541 = vunpack.c.l.b16 %v734
  %v1542 = vunpack.c.l.b16 %v735
  %v1543 = vunpack.c.l.b16 %v736
  %v1544 = vunpack.c.l.b16 %v737
  %v1545 = vunpack.c.l.b16 %v738
  %v1546 = vunpack.c.l.b16 %v739
  %v1547 = vunpack.c.l.b16 %v740
  %v1548 = vunpack.c.l.b16 %v741
  %v1549 = vunpack.c.l.b16 %v742
  %v1550 = vunpack.c.l.b16 %v743
  %v1551 = vunpack.c.l.b16 %v744
  %v1552 = vunpack.c.l.b16 %v745
  %v1553 = vunpack.c.l.b16 %v746
  %v1554 = vunpack.c.l.b16 %v747
  %v1555 = vunpack.c.l.b16 %v748
  %v1556 = vunpack.c.l.b16 %v749
  %v1557 = vunpack.c.l.b16 %v750
  %v1558 = vunpack.c.l.b16 %v751
  %v1559 = vunpack.c.l.b16 %v752
  %v1560 = vunpack.c.l.b16 %v753
  %v1561 = vunpack.c.l.b16 %v754
  %v1562 = vunpack.c.l.b16 %v755
  %v1563 = vunpack.c.l.b16 %v756
  %v1564 = vunpack.c.l.b16 %v757
  %v1565 = vunpack.c.l.b16 %v758
  %v1566 = vunpack.c.l.b16 %v759
  %v1567 = vunpack.c.l.b16 %v760
  %v1568 = vunpack.c.l.b16 %v761
  %v1569 = vunpack.c.l.b16 %v762
  %v1570 = vunpack.c.l.b16 %v763
  %v1571 = vunpack.c.l.b16 %v764
  %v1572 = vunpack.c.l.b16 %v765
  %v1573 = vunpack.c.l.b16 %v766
  %v1574 = vunpack.c.l.b16 %v767
  %v1575 = vunpack.c.l.b16 %v768
  %v1576 = vunpack.c.l.b16 %v769
  %v1577 = vunpack.c.l.b16 %v770
  %v1578 = vunpack.c.l.b16 %v771
  %v1579 = vunpack.c.l.b16 %v772
  %v1580 = vunpack.c.l.b16 %v773
  %v1581 = vunpack.c.l.b16 %v774
  %v1582 = vunpack.c.l.b16 %v775
  %v1583 = vunpack.c.l.b16 %v776
  %v1584 = vunpack.c.l.b16 %v777
  %v1585 = vunpack.c.l.b16 %v778
  %v1586 = vunpack.c.l.b16 %v779
  %v1587 = vunpack.c.l.b16 %v780
  %v1588 = vunpack.c.l.b16 %v781
  %v1589 = vunpack.c.l.b16 %v782
  %v1590 = vunpack.c.l.b16 %v783
  %v1591 = vunpack.c.l.b16 %v784
  %v1592 = vunpack.c.l.b16 %v785
  %v1593 = vunpack.c.l.b16 %v786
  %v1594 = vunpack.c.l.b16 %v787
  %v1595 = vunpack.c.l.b16 %v788
  %v1596 = vunpack.c.l.b16 %v789
  %v1597 = vunpack.c.l.b16 %v790
  %v1598 = vunpack.c.l.b16 %v791
  %v1599 = vunpack.c.l.b16 %v792
  %v1600 = vunpack.c.l.b16 %v793
  %v1601 = vunpack.c.l.b16 %v794
  %v1602 = vunpack.c.l.b16 %v795
  %v1603 = vunpack.c.l.b16 %v796
  %v1604 = vunpack.c.l.b16 %v797
  %v1605 = vunpack.c.l.b16 %v798
  %v1606 = vunpack.c.l.b16 %v799
  %v1607 = vunpack.c.l.b16 %v800
  %v1608 = vunpack.c.l.b16 %v801
  %v1609 = vunpack.c.l.b16 %v802
  %v1610 = vunpack.c.l.b16 %v803
  %v1611 = vunpack.c.l.b16 %v804
  %v1612 = vunpack.c.l.b16 %v805
  %v1613 = vunpack.c.l.b16 %v806
  %v1614 = vunpack.c.l.b16 %v807
  %v1615 = vunpack.c.l.b16 %v808
  %v1616 = vunpack.c.l.b16 %v809
  %v1617 = vunpack.c.l.b16 %v810
  %v1618 = vunpack.c.l.b16 %v811
  %v1619 = vunpack.c.l.b16 %v812
  %v1620 = vunpack.c.l.b16 %v813
  %v1621 = vunpack.c.l.b16 %v814
  %v1622 = vunpack.c.l.b16 %v815
  %v1623 = vunpack.c.l.b16 %v816
  %v1624 = vunpack.c.l.b16 %v817
  %v1625 = vunpack.c.l.b16 %v818
  %v1626 = vunpack.c.l.b16 %v819
  %v1627 = vunpack.c.l.b16 %v820
  %v1628 = vunpack.c.l.b16 %v821
  %v1629 = vunpack.c.l.b16 %v822
  %v1630 = vunpack.c.l.b16 %v823
  %v1631 = vunpack.c.l.b16 %v824
  %v1632 = vunpack.c.l.b16 %v825
  %v1633 = vunpack.c.l.b16 %v826
  %v1634 = vunpack.c.l.b16 %v827
  %v1635 = vunpack.c.l.b16 %v828
  %v1636 = vunpack.c.l.b16 %v829
  %v1637 = vunpack.c.l.b16 %v830
  %v1638 = vunpack.c.l.b16 %v831
  %v1639 = vunpack.c.l.b16 %v832
  %v1640 = vunpack.c.l.b16 %v833
  %v1641 = vunpack.c.l.b16 %v834
  %v1642 = vunpack.c.l.b16 %v835
  %v1643 = vunpack.c.l.b16 %v836
  %v1644 = vunpack.c.l.b16 %v837
  %v1645 = vunpack.c.l.b16 %v838
  %v1646 = vunpack.c.l.b16 %v839
  %v1647 = vunpack.c.l.b16 %v840
  %v1648 = vunpack.c.l.b16 %v841
  %v1649 = vunpack.c.l.b16 %v842
  %v1650 = vunpack.c.l.b16 %v843
  %v1651 = vunpack.c.l.b16 %v844
  %v1652 = vunpack.c.l.b16 %v845
  %v1653 = vunpack.c.l.b16 %v846
  %v1654 = vunpack.c.l.b16 %v847
  %v1655 = vunpack.c.l.b16 %v848
  %v1656 = vunpack.c.l.b16 %v849
  %v1657 = vunpack.c.l.b16 %v850
  %v1658 = vunpack.c.l.b16 %v851
  %v1659 = vunpack.c.l.b16 %v852
  %v1660 = vunpack.c.l.b16 %v853
  %v1661 = vunpack.c.l.b16 %v854
  %v1662 = vunpack.c.l.b16 %v855
  %v1663 = vunpack.c.l.b16 %v856
  %v1664 = vunpack.c.l.b16 %v857
  %v1665 = vunpack.c.l.b16 %v858
  %v1666 = vunpack.c.l.b16 %v859
  %v1667 = vunpack.c.l.b16 %v860
  %v1668 = vunpack.c.l.b16 %v861
  %v1669 = vunpack.c.l.b16 %v862
  %v1670 = vunpack.c.l.b16 %v863
  %v1671 = vunpack.c.l.b16 %v864
  %v1672 = vunpack.c.l.b16 %v865
  %v1673 = vunpack.c.l.b16 %v866
  %v1674 = vunpack.c.l.b16 %v867
  %v1675 = vunpack.c.l.b16 %v868
  %v1676 = vunpack.c.l.b16 %v869
  %v1677 = vunpack.c.l.b16 %v870
  %v1678 = vunpack.c.l.b16 %v871
  %v1679 = vunpack.c.l.b16 %v872
  %v1680 = vunpack.c.l.b16 %v873
  %v1681 = vunpack.c.l.b16 %v874
  %v1682 = vunpack.c.l.b16 %v875
  %v1683 = vunpack.c.l.b16 %v876
  %v1684 = vunpack.c.l.b16 %v877
  %v1685 = vunpack.c.l.b16 %v878
  %v1686 = vunpack.c.l.b16 %v879
  %v1687 = vunpack.c.l.b16 %v880
  %v1688 = vunpack.c.l.b16 %v881
  %v1689 = vunpack.c.l.b16 %v882
  %v1690 = vunpack.c.l.b16 %v883
  %v1691 = vunpack.c.l.b16 %v884
  %v1692 = vunpack.c.l.b16 %v885
  %v1693 = vunpack.c.l.b16 %v886
  %v1694 = vunpack.c.l.b16 %v887
  %v1695 = vunpack.c.l.b16 %v888
  %v1696 = vunpack.c.l.b16 %v889
  %v1697 = vunpack.c.l.b16 %v890
  %v1698 = vunpack.c.l.b16 %v891
  %v1699 = vunpack.c.l.b16 %v892
  %v1700 = vunpack.c.l.b16 %v893
  %v1701 = vunpack.c.l.b16 %v894
  %v1702 = vunpack.c.l.b16 %v895
  %v1703 = vunpack.c.l.b16 %v896
  %v1704 = vunpack.c.l.b16 %v897
  %v1705 = vunpack.c.l.b16 %v898
  %v1706 = vunpack.c.l.b16 %v899
  %v1707 = vunpack.c.l.b16 %v900
  %v1708 = vunpack.c.l.b16 %v901
  %v1709 = vunpack.c.l.b16 %v902
  %v1710 = vunpack.c.l.b16 %v903
  %v1711 = vunpack.c.l.b16 %v904
  %v1712 = vunpack.c.l.b16 %v905
  %v1713 = vunpack.c.l.b16 %v906
  %v1714 = vunpack.c.l.b16 %v907
  %v1715 = vunpack.c.l.b16 %v908
  %v1716 = vunpack.c.l.b16 %v909
  %v1717 = vunpack.c.l.b16 %v910
  %v1718 = vunpack.c.l.b16 %v911
  %v1719 = vunpack.c.l.b16 %v912
  %v1720 = vunpack.c.l.b16 %v913
  %v1721 = vunpack.c.l.b16 %v914
  %v1722 = vunpack.c.l.b16 %v915
  %v1723 = vunpack.c.l.b16 %v916
  %v1724 = vunpack.c.l.b16 %v917
  %v1725 = vunpack.c.l.b16 %v918
  %v1726 = vunpack.c.l.b16 %v919
  %v1727 = vunpack.c.l.b16 %v920
  %v1728 = vunpack.c.l.b16 %v921
  %v1729 = vunpack.c.l.b16 %v922
  %v1730 = vunpack.c.l.b16 %v923
  %v1731 = vunpack.c.l.b16 %v924
  %v1732 = vunpack.c.l.b16 %v925
  %v1733 = vunpack.c.l.b16 %v926
  %v1734 = vunpack.c.l.b16 %v927
  %v1735 = vunpack.c.l.b16 %v928
  %v1736 = vunpack.c.l.b16 %v929
  %v1737 = vunpack.c.l.b16 %v930
  %v1738 = vunpack.c.l.b16 %v931
  %v1739 = vunpack.c.l.b16 %v932
  %v1740 = vunpack.c.l.b16 %v933
  %v1741 = vunpack.c.l.b16 %v934
  %v1742 = vunpack.c.l.b16 %v935
  %v1743 = vunpack.c.l.b16 %v936
  %v1744 = vunpack.c.l.b16 %v937
  %v1745 = vunpack.c.l.b16 %v938
  %v1746 = vunpack.c.l.b16 %v939
  %v1747 = vunpack.c.l.b16 %v940
  %v1748 = vunpack.c.l.b16 %v941
  %v1749 = vunpack.c.l.b16 %v942
  %v1750 = vunpack.c.l.b16 %v943
  %v1751 = vunpack.c.l.b16 %v944
  %v1752 = vunpack.c.l.b16 %v945
  %v1753 = vunpack.c.l.b16 %v946
  %v1754 = vunpack.c.l.b16 %v947
  %v1755 = vunpack.c.l.b16 %v948
  %v1756 = vunpack.c.l.b16 %v949
  %v1757 = vunpack.c.l.b16 %v950
  %v1758 = vunpack.c.l.b16 %v951
  %v1759 = vunpack.c.l.b16 %v952
  %v1760 = vunpack.c.l.b16 %v953
  %v1761 = vunpack.c.l.b16 %v954
  %v1762 = vunpack.c.l.b16 %v955
  %v1763 = vunpack.c.l.b16 %v956
  %v1764 = vunpack.c.l.b16 %v957
  %v1765 = vunpack.c.l.b16 %v958
  %v1766 = vunpack.c.l.b16 %v959
  %v1767 = vunpack.c.l.b16 %v960
  %v1768 = vunpack.c.l.b16 %v961
  %v1769 = vunpack.c.l.b16 %v962
  %v1770 = vunpack.c.l.b16 %v963
  %v1771 = vunpack.c.l.b16 %v964
  %v1772 = vunpack.c.l.b16 %v965
  %v1773 = vunpack.c.l.b16 %v966
  %v1774 = vunpack.c.l.b16 %v967
  %v1775 = vunpack.c.l.b16 %v968
  %v1776 = vunpack.c.l.b16 %v969
  %v1777 = vunpack.c.l.b16 %v970
  %v1778 = vunpack.c.l.b16 %v971
  %v1779 = vunpack.c.l.b16 %v972
  %v1780 = vunpack.c.l.b16 %v973
  %v1781 = vunpack.c.l.b16 %v974
  %v1782 = vunpack.c.l.b16 %v975
  %v1783 = vunpack.c.l.b16 %v976
  %v1784 = vunpack.c.l.b16 %v977
  %v1785 = vunpack.c.l.b16 %v978
  %v1786 = vunpack.c.l.b16 %v979
  %v1787 = vunpack.c.l.b16 %v980
  %v1788 = vunpack.c.l.b16 %v981
  %v1789 = vunpack.c.l.b16 %v982
  %v1790 = vunpack.c.l.b16 %v983
  %v1791 = vunpack.c.l.b16 %v984
  %v1792 = vunpack.c.l.b16 %v985
  %v1793 = vunpack.c.l.b16 %v986
  %v1794 = vunpack.c.l.b16 %v987
  %v1795 = vunpack.c.l.b16 %v988
  %v1796 = vunpack.c.l.b16 %v989
  %v1797 = vunpack.c.l.b16 %v990
  %v1798 = vunpack.c.l.b16 %v991
  %v1799 = vunpack.c.l.b16 %v992
  %v1800 = vunpack.c.l.b16 %v993
  %v1801 = vunpack.c.l.b16 %v994
  %v1802 = vunpack.c.l.b16 %v995
  %v1803 = vunpack.c.l.b16 %v996
  %v1804 = vunpack.c.l.b16 %v997
  %v1805 = vunpack.c.l.b16 %v998
  %v1806 = vunpack.c.l.b16 %v999
  %v1807 = vunpack.c.l.b16 %v1000
  %v1808 = vunpack.c.l.b16 %v1001
  %v1809 = vunpack.c.l.b16 %v1002
  %v1810 = vunpack.c.l.b16 %v1003
  %v1811 = vunpack.c.l.b16 %v1004
  %v1812 = vunpack.c.l.b16 %v1005
  %v1813 = vunpack.c.l.b16 %v1006
  %v1814 = vunpack.c.l.b16 %v1007
  %v1815 = vunpack.c.l.b16 %v1008
  %v1816 = vunpack.c.l.b16 %v1009
  %v1817 = vunpack.c.l.b16 %v1010
  %v1818 = vunpack.c.l.b16 %v1011
  %v1819 = vunpack.c.l.b16 %v1012
  %v1820 = vunpack.c.l.b16 %v1013
  %v1821 = vunpack.c.l.b16 %v1014
  %v1822 = vunpack.c.l.b16 %v1015
  %v1823 = vunpack.c.l.b16 %v1016
  %v1824 = vunpack.c.l.b16 %v1017
  %v1825 = vpack.c.b16 %v1426, %v1425
  %v1826 = vpack.c.b16 %v1428, %v1427
  %v1827 = vpack.c.b16 %v1430, %v1429
  %v1828 = vpack.c.b16 %v1432, %v1431
  %v1829 = vpack.c.b16 %v1434, %v1433
  %v1830 = vpack.c.b16 %v1436, %v1435
  %v1831 = vpack.c.b16 %v1438, %v1437
  %v1832 = vpack.c.b16 %v1440, %v1439
  %v1833 = vpack.c.b16 %v1442, %v1441
  %v1834 = vpack.c.b16 %v1444, %v1443
  %v1835 = vpack.c.b16 %v1446, %v1445
  %v1836 = vpack.c.b16 %v1448, %v1447
  %v1837 = vpack.c.b16 %v1450, %v1449
  %v1838 = vpack.c.b16 %v1452, %v1451
  %v1839 = vpack.c.b16 %v1454, %v1453
  %v1840 = vpack.c.b16 %v1456, %v1455
  %v1841 = vpack.c.b16 %v1458, %v1457
  %v1842 = vpack.c.b16 %v1460, %v1459
  %v1843 = vpack.c.b16 %v1462, %v1461
  %v1844 = vpack.c.b16 %v1464, %v1463
  %v1845 = vpack.c.b16 %v1466, %v1465
  %v1846 = vpack.c.b16 %v1468, %v1467
  %v1847 = vpack.c.b16 %v1470, %v1469
  %v1848 = vpack.c.b16 %v1472, %v1471
  %v1849 = vpack.c.b16 %v1474, %v1473
  %v1850 = vpack.c.b16 %v1476, %v1475
  %v1851 = vpack.c.b16 %v1478, %v1477
  %v1852 = vpack.c.b16 %v1480, %v1479
  %v1853 = vpack.c.b16 %v1482, %v1481
  %v1854 = vpack.c.b16 %v1484, %v1483
  %v1855 = vpack.c.b16 %v1486, %v1485
  %v1856 = vpack.c.b16 %v1488, %v1487
  %v1857 = vpack.c.b16 %v1490, %v1489
  %v1858 = vpack.c.b16 %v1492, %v1491
  %v1859 = vpack.c.b16 %v1494, %v1493
  %v1860 = vpack.c.b16 %v1496, %v1495
  %v1861 = vpack.c.b16 %v1498, %v1497
  %v1862 = vpack.c.b16 %v1500, %v1499
  %v1863 = vpack.c.b16 %v1502, %v1501
  %v1864 = vpack.c.b16 %v1504, %v1503
  %v1865 = vpack.c.b16 %v1506, %v1505
  %v1866 = vpack.c.b16 %v1508, %v1507
  %v1867 = vpack.c.b16 %v1510, %v1509
  %v1868 = vpack.c.b16 %v1512, %v1511
  %v1869 = vpack.c.b16 %v1514, %v1513
  %v1870 = vpack.c.b16 %v1516, %v1515
  %v1871 = vpack.c.b16 %v1518, %v1517
  %v1872 = vpack.c.b16 %v1520, %v1519
  %v1873 = vpack.c.b16 %v1522, %v1521
  %v1874 = vpack.c.b16 %v1524, %v1523
  %v1875 = vpack.c.b16 %v1526, %v1525
  %v1876 = vpack.c.b16 %v1528, %v1527
  %v1877 = vpack.c.b16 %v1530, %v1529
  %v1878 = vpack.c.b16 %v1532, %v1531
  %v1879 = vpack.c.b16 %v1534, %v1533
  %v1880 = vpack.c.b16 %v1536, %v1535
  %v1881 = vpack.c.b16 %v1538, %v1537
  %v1882 = vpack.c.b16 %v1540, %v1539
  %v1883 = vpack.c.b16 %v1542, %v1541
  %v1884 = vpack.c.b16 %v1544, %v1543
  %v1885 = vpack.c.b16 %v1546, %v1545
  %v1886 = vpack.c.b16 %v1548, %v1547
  %v1887 = vpack.c.b16 %v1550, %v1549
  %v1888 = vpack.c.b16 %v1552, %v1551
  %v1889 = vpack.c.b16 %v1554, %v1553
  %v1890 = vpack.c.b16 %v1556, %v1555
  %v1891 = vpack.c.b16 %v1558, %v1557
  %v1892 = vpack.c.b16 %v1560, %v1559
  %v1893 = vpack.c.b16 %v1562, %v1561
  %v1894 = vpack.c.b16 %v1564, %v1563
  %v1895 = vpack.c.b16 %v1566, %v1565
  %v1896 = vpack.c.b16 %v1568, %v1567
  %v1897 = vpack.c.b16 %v1570, %v1569
  %v1898 = vpack.c.b16 %v1572, %v1571
  %v1899 = vpack.c.b16 %v1574, %v1573
  %v1900 = vpack.c.b16 %v1576, %v1575
  %v1901 = vpack.c.b16 %v1578, %v1577
  %v1902 = vpack.c.b16 %v1580, %v1579
  %v1903 = vpack.c.b16 %v1582, %v1581
  %v1904 = vpack.c.b16 %v1584, %v1583
  %v1905 = vpack.c.b16 %v1586, %v1585
  %v1906 = vpack.c.b16 %v1588, %v1587
  %v1907 = vpack.c.b16 %v1590, %v1589
  %v1908 = vpack.c.b16 %v1592, %v1591
  %v1909 = vpack.c.b16 %v1594, %v1593
  %v1910 = vpack.c.b16 %v1596, %v1595
  %v1911 = vpack.c.b16 %v1598, %v1597
  %v1912 = vpack.c.b16 %v1600, %v1599
  %v1913 = vpack.c.b16 %v1602, %v1601
  %v1914 = vpack.c.b16 %v1604, %v1603
  %v1915 = vpack.c.b16 %v1606, %v1605
  %v1916 = vpack.c.b16 %v1608, %v1607
  %v1917 = vpack.c.b16 %v1610, %v1609
  %v1918 = vpack.c.b16 %v1612, %v1611
  %v1919 = vpack.c.b16 %v1614, %v1613
  %v1920 = vpack.c.b16 %v1616, %v1615
  %v1921 = vpack.c.b16 %v1618, %v1617
  %v1922 = vpack.c.b16 %v1620, %v1619
  %v1923 = vpack.c.b16 %v1622, %v1621
  %v1924 = vpack.c.b16 %v1624, %v1623
  %v1925 = vpack.c.b16 %v1626, %v1625
  %v1926 = vpack.c.b16 %v1628, %v1627
  %v1927 = vpack.c.b16 %v1630, %v1629
  %v1928 = vpack.c.b16 %v1632, %v1631
  %v1929 = vpack.c.b16 %v1634, %v1633
  %v1930 = vpack.c.b16 %v1636, %v1635
  %v1931 = vpack.c.b16 %v1638, %v1637
  %v1932 = vpack.c.b16 %v1640, %v1639
  %v1933 = vpack.c.b16 %v1642, %v1641
  %v1934 = vpack.c.b16 %v1644, %v1643
  %v1935 = vpack.c.b16 %v1646, %v1645
  %v1936 = vpack.c.b16 %v1648, %v1647
  %v1937 = vpack.c.b16 %v1650, %v1649
  %v1938 = vpack.c.b16 %v1652, %v1651
  %v1939 = vpack.c.b16 %v1654, %v1653
  %v1940 = vpack.c.b16 %v1656, %v1655
  %v1941 = vpack.c.b16 %v1658, %v1657
  %v1942 = vpack.c.b16 %v1660, %v1659
  %v1943 = vpack.c.b16 %v1662, %v1661
  %v1944 = vpack.c.b16 %v1664, %v1663
  %v1945 = vpack.c.b16 %v1666, %v1665
  %v1946 = vpack.c.b16 %v1668, %v1667
  %v1947 = vpack.c.b16 %v1670, %v1669
  %v1948 = vpack.c.b16 %v1672, %v1671
  %v1949 = vpack.c.b16 %v1674, %v1673
  %v1950 = vpack.c.b16 %v1676, %v1675
  %v1951 = vpack.c.b16 %v1678, %v1677
  %v1952 = vpack.c.b16 %v1680, %v1679
  %v1953 = vpack.c.b16 %v1682, %v1681
  %v1954 = vpack.c.b16 %v1684, %v1683
  %v1955 = vpack.c.b16 %v1686, %v1685
  %v1956 = vpack.c.b16 %v1688, %v1687
  %v1957 = vpack.c.b16 %v1690, %v1689
  %v1958 = vpack.c.b16 %v1692, %v1691
  %v1959 = vpack.c.b16 %v1694, %v1693
  %v1960 = vpack.c.b16 %v1696, %v1695
  %v1961 = vpack.c.b16 %v1698, %v1697
  %v1962 = vpack.c.b16 %v1700, %v1699
  %v1963 = vpack.c.b16 %v1702, %v1701
  %v1964 = vpack.c.b16 %v1704, %v1703
  %v1965 = vpack.c.b16 %v1706, %v1705
  %v1966 = vpack.c.b16 %v1708, %v1707
  %v1967 = vpack.c.b16 %v1710, %v1709
  %v1968 = vpack.c.b16 %v1712, %v1711
  %v1969 = vpack.c.b16 %v1714, %v1713
  %v1970 = vpack.c.b16 %v1716, %v1715
  %v1971 = vpack.c.b16 %v1718, %v1717
  %v1972 = vpack.c.b16 %v1720, %v1719
  %v1973 = vpack.c.b16 %v1722, %v1721
  %v1974 = vpack.c.b16 %v1724, %v1723
  %v1975 = vpack.c.b16 %v1726, %v1725
  %v1976 = vpack.c.b16 %v1728, %v1727
  %v1977 = vpack.c.b16 %v1730, %v1729
  %v1978 = vpack.c.b16 %v1732, %v1731
  %v1979 = vpack.c.b16 %v1734, %v1733
  %v1980 = vpack.c.b16 %v1736, %v1735
  %v1981 = vpack.c.b16 %v1738, %v1737
  %v1982 = vpack.c.b16 %v1740, %v1739
  %v1983 = vpack.c.b16 %v1742, %v1741
  %v1984 = vpack.c.b16 %v1744, %v1743
  %v1985 = vpack.c.b16 %v1746, %v1745
  %v1986 = vpack.c.b16 %v1748, %v1747
  %v1987 = vpack.c.b16 %v1750, %v1749
  %v1988 = vpack.c.b16 %v1752, %v1751
  %v1989 = vpack.c.b16 %v1754, %v1753
  %v1990 = vpack.c.b16 %v1756, %v1755
  %v1991 = vpack.c.b16 %v1758, %v1757
  %v1992 = vpack.c.b16 %v1760, %v1759
  %v1993 = vpack.c.b16 %v1762, %v1761
  %v1994 = vpack.c.b16 %v1764, %v1763
  %v1995 = vpack.c.b16 %v1766, %v1765
  %v1996 = vpack.c.b16 %v1768, %v1767
  %v1997 = vpack.c.b16 %v1770, %v1769
  %v1998 = vpack.c.b16 %v1772, %v1771
  %v1999 = vpack.c.b16 %v1774, %v1773
  %v2000 = vpack.c.b16 %v1776, %v1775
  %v2001 = vpack.c.b16 %v1778, %v1777
  %v2002 = vpack.c.b16 %v1780, %v1779
  %v2003 = vpack.c.b16 %v1782, %v1781
  %v2004 = vpack.c.b16 %v1784, %v1783
  %v2005 = vpack.c.b16 %v1786, %v1785
  %v2006 = vpack.c.b16 %v1788, %v1787
  %v2007 = vpack.c.b16 %v1790, %v1789
  %v2008 = vpack.c.b16 %v1792, %v1791
  %v2009 = vpack.c.b16 %v1794, %v1793
  %v2010 = vpack.c.b16 %v1796, %v1795
  %v2011 = vpack.c.b16 %v1798, %v1797
  %v2012 = vpack.c.b16 %v1800, %v1799
  %v2013 = vpack.c.b16 %v1802, %v1801
  %v2014 = vpack.c.b16 %v1804, %v1803
  %v2015 = vpack.c.b16 %v1806, %v1805
  %v2016 = vpack.c.b16 %v1808, %v1807
  %v2017 = vpack.c.b16 %v1810, %v1809
  %v2018 = vpack.c.b16 %v1812, %v1811
  %v2019 = vpack.c.b16 %v1814, %v1813
  %v2020 = vpack.c.b16 %v1816, %v1815
  %v2021 = vpack.c.b16 %v1818, %v1817
  %v2022 = vpack.c.b16 %v1820, %v1819
  %v2023 = vpack.c.b16 %v1822, %v1821
  %v2024 = vpack.c.b16 %v1824, %v1823
  %2225 = vmatprep.subr.bf16.mxu0 0
  %2226 = vmatpush1.bf16.msra.mxu0 %v1825
  %2227 = vmatprep.subr.bf16.mxu0 0
  %2228 = vmatpush1.bf16.msra.mxu0 %v1826
  %2229 = vmatprep.subr.bf16.mxu0 0
  %2230 = vmatpush1.bf16.msra.mxu0 %v1827
  %2231 = vmatprep.subr.bf16.mxu0 0
  %2232 = vmatpush1.bf16.msra.mxu0 %v1828
  %2233 = vmatprep.subr.bf16.mxu0 0
  %2234 = vmatpush1.bf16.msra.mxu0 %v1829
  %2235 = vmatprep.subr.bf16.mxu0 0
  %2236 = vmatpush1.bf16.msra.mxu0 %v1830
  %2237 = vmatprep.subr.bf16.mxu0 0
  %2238 = vmatpush1.bf16.msra.mxu0 %v1831
  %2239 = vmatprep.subr.bf16.mxu0 0
  %2240 = vmatpush1.bf16.msra.mxu0 %v1832
  %2241 = vmatprep.subr.bf16.mxu0 0
  %2242 = vmatpush1.bf16.msra.mxu0 %v1833
  %2243 = vmatprep.subr.bf16.mxu0 0
  %2244 = vmatpush1.bf16.msra.mxu0 %v1834
  %2245 = vmatprep.subr.bf16.mxu0 0
  %2246 = vmatpush1.bf16.msra.mxu0 %v1835
  %2247 = vmatprep.subr.bf16.mxu0 0
  %2248 = vmatpush1.bf16.msra.mxu0 %v1836
  %2249 = vmatprep.subr.bf16.mxu0 0
  %2250 = vmatpush1.bf16.msra.mxu0 %v1837
  %2251 = vmatprep.subr.bf16.mxu0 0
  %2252 = vmatpush1.bf16.msra.mxu0 %v1838
  %2253 = vmatprep.subr.bf16.mxu0 0
  %2254 = vmatpush1.bf16.msra.mxu0 %v1839
  %2255 = vmatprep.subr.bf16.mxu0 0
  %2256 = vmatpush1.bf16.msra.mxu0 %v1840
  %2257 = vmatprep.mubr.bf16.mxu0 %v419
  %2258 = vmatmul.mubr.bf16.gmra.mrb[0].mxu0 %v418
  %v2259 = vpop.f32.mrb[0].mxu0
  %v2260 = vadd.f32 %v1023, %v2259
  %v2261 = vpop.f32.mrb[0].mxu0
  %v2262 = vpop.f32.mrb[0].mxu0
  %v2263 = vadd.f32 %v1023, %v2262
  %v2264 = vpop.f32.mrb[0].mxu0
  %2265 = vmatprep.mubr.bf16.mxu0 %v444
  %2266 = vmatmul.mubr.bf16.gmra.mrb[0].mxu0 %v443
  %v2267 = vpop.f32.mrb[0].mxu0
  %v2268 = vadd.f32 %v1023, %v2267
  %v2269 = vpop.f32.mrb[0].mxu0
  %v2270 = vpop.f32.mrb[0].mxu0
  %v2271 = vadd.f32 %v1023, %v2270
  %v2272 = vpop.f32.mrb[0].mxu0
  %2273 = vmatprep.mubr.bf16.mxu0 %v469
  %2274 = vmatmul.mubr.bf16.gmra.mrb[0].mxu0 %v468
  %v2275 = vpop.f32.mrb[0].mxu0
  %v2276 = vadd.f32 %v1023, %v2275
  %v2277 = vpop.f32.mrb[0].mxu0
  %v2278 = vpop.f32.mrb[0].mxu0
  %v2279 = vadd.f32 %v1023, %v2278
  %v2280 = vpop.f32.mrb[0].mxu0
  %2281 = vmatprep.mubr.bf16.mxu0 %v494
  %2282 = vmatmul.mubr.bf16.gmra.mrb[0].mxu0 %v493
  %v2283 = vpop.f32.mrb[0].mxu0
  %v2284 = vadd.f32 %v1023, %v2283
  %v2285 = vpop.f32.mrb[0].mxu0
  %v2286 = vpop.f32.mrb[0].mxu0
  %v2287 = vadd.f32 %v1023, %v2286
  %v2288 = vpop.f32.mrb[0].mxu0
  %2289 = vmatprep.mubr.bf16.mxu0 %v519
  %2290 = vmatmul.mubr.bf16.gmra.mrb[0].mxu0 %v518
  %v2291 = vpop.f32.mrb[0].mxu0
  %v2292 = vadd.f32 %v1023, %v2291
  %v2293 = vpop.f32.mrb[0].mxu0
  %v2294 = vpop.f32.mrb[0].mxu0
  %v2295 = vadd.f32 %v1023, %v2294
  %v2296 = vpop.f32.mrb[0].mxu0
  %2297 = vmatprep.mubr.bf16.mxu0 %v544
  %2298 = vmatmul.mubr.bf16.gmra.mrb[0].mxu0 %v543
  %v2299 = vpop.f32.mrb[0].mxu0
  %v2300 = vadd.f32 %v1023, %v2299
  %v2301 = vpop.f32.mrb[0].mxu0
  %v2302 = vpop.f32.mrb[0].mxu0
  %v2303 = vadd.f32 %v1023, %v2302
  %v2304 = vpop.f32.mrb[0].mxu0
  %2305 = vmatprep.mubr.bf16.mxu0 %v569
  %2306 = vmatmul.mubr.bf16.gmra.mrb[0].mxu0 %v568
  %v2307 = vpop.f32.mrb[0].mxu0
  %v2308 = vadd.f32 %v1023, %v2307
  %v2309 = vpop.f32.mrb[0].mxu0
  %v2310 = vpop.f32.mrb[0].mxu0
  %v2311 = vadd.f32 %v1023, %v2310
  %v2312 = vpop.f32.mrb[0].mxu0
  %2313 = vmatprep.mubr.bf16.mxu0 %v594
  %2314 = vmatmul.mubr.bf16.gmra.mrb[0].mxu0 %v593
  %v2315 = vpop.f32.mrb[0].mxu0
  %v2316 = vadd.f32 %v1023, %v2315
  %v2317 = vpop.f32.mrb[0].mxu0
  %v2318 = vpop.f32.mrb[0].mxu0
  %v2319 = vadd.f32 %v1023, %v2318
  %v2320 = vpop.f32.mrb[0].mxu0
  %2321 = vdwg.mxu0
  %2322 = vmatprep.subr.bf16.mxu0 0
  %2323 = vmatpush1.bf16.msra.mxu0 %v1841
  %2324 = vmatprep.subr.bf16.mxu0 0
  %2325 = vmatpush1.bf16.msra.mxu0 %v1842
  %2326 = vmatprep.subr.bf16.mxu0 0
  %2327 = vmatpush1.bf16.msra.mxu0 %v1843
  %2328 = vmatprep.subr.bf16.mxu0 0
  %2329 = vmatpush1.bf16.msra.mxu0 %v1844
  %2330 = vmatprep.subr.bf16.mxu0 0
  %2331 = vmatpush1.bf16.msra.mxu0 %v1845
  %2332 = vmatprep.subr.bf16.mxu0 0
  %2333 = vmatpush1.bf16.msra.mxu0 %v1846
  %2334 = vmatprep.subr.bf16.mxu0 0
  %2335 = vmatpush1.bf16.msra.mxu0 %v1847
  %2336 = vmatprep.subr.bf16.mxu0 0
  %2337 = vmatpush1.bf16.msra.mxu0 %v1848
  %2338 = vmatprep.subr.bf16.mxu0 0
  %2339 = vmatpush1.bf16.msra.mxu0 %v1849
  %2340 = vmatprep.subr.bf16.mxu0 0
  %2341 = vmatpush1.bf16.msra.mxu0 %v1850
  %2342 = vmatprep.subr.bf16.mxu0 0
  %2343 = vmatpush1.bf16.msra.mxu0 %v1851
  %2344 = vmatprep.subr.bf16.mxu0 0
  %2345 = vmatpush1.bf16.msra.mxu0 %v1852
  %2346 = vmatprep.subr.bf16.mxu0 0
  %2347 = vmatpush1.bf16.msra.mxu0 %v1853
  %2348 = vmatprep.subr.bf16.mxu0 0
  %2349 = vmatpush1.bf16.msra.mxu0 %v1854
  %2350 = vmatprep.subr.bf16.mxu0 0
  %2351 = vmatpush1.bf16.msra.mxu0 %v1855
  %2352 = vmatprep.subr.bf16.mxu0 0
  %2353 = vmatpush1.bf16.msra.mxu0 %v1856
  %2354 = vmatprep.mubr.bf16.mxu0 %v421
  %2355 = vmatmul.mubr.bf16.gmra.mrb[0].mxu0 %v420
  %v2356 = vpop.f32.mrb[0].mxu0
  %v2357 = vadd.f32 %v2260, %v2356
  %v2358 = vpop.f32.mrb[0].mxu0
  %v2359 = vpop.f32.mrb[0].mxu0
  %v2360 = vadd.f32 %v2263, %v2359
  %v2361 = vpop.f32.mrb[0].mxu0
  %2362 = vmatprep.mubr.bf16.mxu0 %v446
  %2363 = vmatmul.mubr.bf16.gmra.mrb[0].mxu0 %v445
  %v2364 = vpop.f32.mrb[0].mxu0
  %v2365 = vadd.f32 %v2268, %v2364
  %v2366 = vpop.f32.mrb[0].mxu0
  %v2367 = vpop.f32.mrb[0].mxu0
  %v2368 = vadd.f32 %v2271, %v2367
  %v2369 = vpop.f32.mrb[0].mxu0
  %2370 = vmatprep.mubr.bf16.mxu0 %v471
  %2371 = vmatmul.mubr.bf16.gmra.mrb[0].mxu0 %v470
  %v2372 = vpop.f32.mrb[0].mxu0
  %v2373 = vadd.f32 %v2276, %v2372
  %v2374 = vpop.f32.mrb[0].mxu0
  %v2375 = vpop.f32.mrb[0].mxu0
  %v2376 = vadd.f32 %v2279, %v2375
  %v2377 = vpop.f32.mrb[0].mxu0
  %2378 = vmatprep.mubr.bf16.mxu0 %v496
  %2379 = vmatmul.mubr.bf16.gmra.mrb[0].mxu0 %v495
  %v2380 = vpop.f32.mrb[0].mxu0
  %v2381 = vadd.f32 %v2284, %v2380
  %v2382 = vpop.f32.mrb[0].mxu0
  %v2383 = vpop.f32.mrb[0].mxu0
  %v2384 = vadd.f32 %v2287, %v2383
  %v2385 = vpop.f32.mrb[0].mxu0
  %2386 = vmatprep.mubr.bf16.mxu0 %v521
  %2387 = vmatmul.mubr.bf16.gmra.mrb[0].mxu0 %v520
  %v2388 = vpop.f32.mrb[0].mxu0
  %v2389 = vadd.f32 %v2292, %v2388
  %v2390 = vpop.f32.mrb[0].mxu0
  %v2391 = vpop.f32.mrb[0].mxu0
  %v2392 = vadd.f32 %v2295, %v2391
  %v2393 = vpop.f32.mrb[0].mxu0
  %2394 = vmatprep.mubr.bf16.mxu0 %v546
  %2395 = vmatmul.mubr.bf16.gmra.mrb[0].mxu0 %v545
  %v2396 = vpop.f32.mrb[0].mxu0
  %v2397 = vadd.f32 %v2300, %v2396
  %v2398 = vpop.f32.mrb[0].mxu0
  %v2399 = vpop.f32.mrb[0].mxu0
  %v2400 = vadd.f32 %v2303, %v2399
  %v2401 = vpop.f32.mrb[0].mxu0
  %2402 = vmatprep.mubr.bf16.mxu0 %v571
  %2403 = vmatmul.mubr.bf16.gmra.mrb[0].mxu0 %v570
  %v2404 = vpop.f32.mrb[0].mxu0
  %v2405 = vadd.f32 %v2308, %v2404
  %v2406 = vpop.f32.mrb[0].mxu0
  %v2407 = vpop.f32.mrb[0].mxu0
  %v2408 = vadd.f32 %v2311, %v2407
  %v2409 = vpop.f32.mrb[0].mxu0
  %2410 = vmatprep.mubr.bf16.mxu0 %v596
  %2411 = vmatmul.mubr.bf16.gmra.mrb[0].mxu0 %v595
  %v2412 = vpop.f32.mrb[0].mxu0
  %v2413 = vadd.f32 %v2316, %v2412
  %v2414 = vpop.f32.mrb[0].mxu0
  %v2415 = vpop.f32.mrb[0].mxu0
  %v2416 = vadd.f32 %v2319, %v2415
  %v2417 = vpop.f32.mrb[0].mxu0
  %2418 = vdwg.mxu0
  %2419 = vmatprep.subr.bf16.mxu0 0
  %2420 = vmatpush1.bf16.msra.mxu0 %v1857
  %2421 = vmatprep.subr.bf16.mxu0 0
  %2422 = vmatpush1.bf16.msra.mxu0 %v1858
  %2423 = vmatprep.subr.bf16.mxu0 0
  %2424 = vmatpush1.bf16.msra.mxu0 %v1859
  %2425 = vmatprep.subr.bf16.mxu0 0
  %2426 = vmatpush1.bf16.msra.mxu0 %v1860
  %2427 = vmatprep.subr.bf16.mxu0 0
  %2428 = vmatpush1.bf16.msra.mxu0 %v1861
  %2429 = vmatprep.subr.bf16.mxu0 0
  %2430 = vmatpush1.bf16.msra.mxu0 %v1862
  %2431 = vmatprep.subr.bf16.mxu0 0
  %2432 = vmatpush1.bf16.msra.mxu0 %v1863
  %2433 = vmatprep.subr.bf16.mxu0 0
  %2434 = vmatpush1.bf16.msra.mxu0 %v1864
  %2435 = vmatprep.subr.bf16.mxu0 0
  %2436 = vmatpush1.bf16.msra.mxu0 %v1865
  %2437 = vmatprep.subr.bf16.mxu0 0
  %2438 = vmatpush1.bf16.msra.mxu0 %v1866
  %2439 = vmatprep.subr.bf16.mxu0 0
  %2440 = vmatpush1.bf16.msra.mxu0 %v1867
  %2441 = vmatprep.subr.bf16.mxu0 0
  %2442 = vmatpush1.bf16.msra.mxu0 %v1868
  %2443 = vmatprep.subr.bf16.mxu0 0
  %2444 = vmatpush1.bf16.msra.mxu0 %v1869
  %2445 = vmatprep.subr.bf16.mxu0 0
  %2446 = vmatpush1.bf16.msra.mxu0 %v1870
  %2447 = vmatprep.subr.bf16.mxu0 0
  %2448 = vmatpush1.bf16.msra.mxu0 %v1871
  %2449 = vmatprep.subr.bf16.mxu0 0
  %2450 = vmatpush1.bf16.msra.mxu0 %v1872
  %2451 = vmatprep.mubr.bf16.mxu0 %v423
  %2452 = vmatmul.mubr.bf16.gmra.mrb[0].mxu0 %v422
  %v2453 = vpop.f32.mrb[0].mxu0
  %v2454 = vadd.f32 %v2357, %v2453
  %v2455 = vpop.f32.mrb[0].mxu0
  %v2456 = vpop.f32.mrb[0].mxu0
  %v2457 = vadd.f32 %v2360, %v2456
  %v2458 = vpop.f32.mrb[0].mxu0
  %2459 = vmatprep.mubr.bf16.mxu0 %v448
  %2460 = vmatmul.mubr.bf16.gmra.mrb[0].mxu0 %v447
  %v2461 = vpop.f32.mrb[0].mxu0
  %v2462 = vadd.f32 %v2365, %v2461
  %v2463 = vpop.f32.mrb[0].mxu0
  %v2464 = vpop.f32.mrb[0].mxu0
  %v2465 = vadd.f32 %v2368, %v2464
  %v2466 = vpop.f32.mrb[0].mxu0
  %2467 = vmatprep.mubr.bf16.mxu0 %v473
  %2468 = vmatmul.mubr.bf16.gmra.mrb[0].mxu0 %v472
  %v2469 = vpop.f32.mrb[0].mxu0
  %v2470 = vadd.f32 %v2373, %v2469
  %v2471 = vpop.f32.mrb[0].mxu0
  %v2472 = vpop.f32.mrb[0].mxu0
  %v2473 = vadd.f32 %v2376, %v2472
  %v2474 = vpop.f32.mrb[0].mxu0
  %2475 = vmatprep.mubr.bf16.mxu0 %v498
  %2476 = vmatmul.mubr.bf16.gmra.mrb[0].mxu0 %v497
  %v2477 = vpop.f32.mrb[0].mxu0
  %v2478 = vadd.f32 %v2381, %v2477
  %v2479 = vpop.f32.mrb[0].mxu0
  %v2480 = vpop.f32.mrb[0].mxu0
  %v2481 = vadd.f32 %v2384, %v2480
  %v2482 = vpop.f32.mrb[0].mxu0
  %2483 = vmatprep.mubr.bf16.mxu0 %v523
  %2484 = vmatmul.mubr.bf16.gmra.mrb[0].mxu0 %v522
  %v2485 = vpop.f32.mrb[0].mxu0
  %v2486 = vadd.f32 %v2389, %v2485
  %v2487 = vpop.f32.mrb[0].mxu0
  %v2488 = vpop.f32.mrb[0].mxu0
  %v2489 = vadd.f32 %v2392, %v2488
  %v2490 = vpop.f32.mrb[0].mxu0
  %2491 = vmatprep.mubr.bf16.mxu0 %v548
  %2492 = vmatmul.mubr.bf16.gmra.mrb[0].mxu0 %v547
  %v2493 = vpop.f32.mrb[0].mxu0
  %v2494 = vadd.f32 %v2397, %v2493
  %v2495 = vpop.f32.mrb[0].mxu0
  %v2496 = vpop.f32.mrb[0].mxu0
  %v2497 = vadd.f32 %v2400, %v2496
  %v2498 = vpop.f32.mrb[0].mxu0
  %2499 = vmatprep.mubr.bf16.mxu0 %v573
  %2500 = vmatmul.mubr.bf16.gmra.mrb[0].mxu0 %v572
  %v2501 = vpop.f32.mrb[0].mxu0
  %v2502 = vadd.f32 %v2405, %v2501
  %v2503 = vpop.f32.mrb[0].mxu0
  %v2504 = vpop.f32.mrb[0].mxu0
  %v2505 = vadd.f32 %v2408, %v2504
  %v2506 = vpop.f32.mrb[0].mxu0
  %2507 = vmatprep.mubr.bf16.mxu0 %v598
  %2508 = vmatmul.mubr.bf16.gmra.mrb[0].mxu0 %v597
  %v2509 = vpop.f32.mrb[0].mxu0
  %v2510 = vadd.f32 %v2413, %v2509
  %v2511 = vpop.f32.mrb[0].mxu0
  %v2512 = vpop.f32.mrb[0].mxu0
  %v2513 = vadd.f32 %v2416, %v2512
  %v2514 = vpop.f32.mrb[0].mxu0
  %2515 = vdwg.mxu0
  %2516 = vmatprep.subr.bf16.mxu0 0
  %2517 = vmatpush1.bf16.msra.mxu0 %v1873
  %2518 = vmatprep.subr.bf16.mxu0 0
  %2519 = vmatpush1.bf16.msra.mxu0 %v1874
  %2520 = vmatprep.subr.bf16.mxu0 0
  %2521 = vmatpush1.bf16.msra.mxu0 %v1875
  %2522 = vmatprep.subr.bf16.mxu0 0
  %2523 = vmatpush1.bf16.msra.mxu0 %v1876
  %2524 = vmatprep.subr.bf16.mxu0 0
  %2525 = vmatpush1.bf16.msra.mxu0 %v1877
  %2526 = vmatprep.subr.bf16.mxu0 0
  %2527 = vmatpush1.bf16.msra.mxu0 %v1878
  %2528 = vmatprep.subr.bf16.mxu0 0
  %2529 = vmatpush1.bf16.msra.mxu0 %v1879
  %2530 = vmatprep.subr.bf16.mxu0 0
  %2531 = vmatpush1.bf16.msra.mxu0 %v1880
  %2532 = vmatprep.subr.bf16.mxu0 0
  %2533 = vmatpush1.bf16.msra.mxu0 %v1881
  %2534 = vmatprep.subr.bf16.mxu0 0
  %2535 = vmatpush1.bf16.msra.mxu0 %v1882
  %2536 = vmatprep.subr.bf16.mxu0 0
  %2537 = vmatpush1.bf16.msra.mxu0 %v1883
  %2538 = vmatprep.subr.bf16.mxu0 0
  %2539 = vmatpush1.bf16.msra.mxu0 %v1884
  %2540 = vmatprep.subr.bf16.mxu0 0
  %2541 = vmatpush1.bf16.msra.mxu0 %v1885
  %2542 = vmatprep.subr.bf16.mxu0 0
  %2543 = vmatpush1.bf16.msra.mxu0 %v1886
  %2544 = vmatprep.subr.bf16.mxu0 0
  %2545 = vmatpush1.bf16.msra.mxu0 %v1887
  %2546 = vmatprep.subr.bf16.mxu0 0
  %2547 = vmatpush1.bf16.msra.mxu0 %v1888
  %2548 = vmatprep.mubr.bf16.mxu0 %v425
  %2549 = vmatmul.mubr.bf16.gmra.mrb[0].mxu0 %v424
  %v2550 = vpop.f32.mrb[0].mxu0
  %v2551 = vadd.f32 %v2454, %v2550
  %v2552 = vpop.f32.mrb[0].mxu0
  %v2553 = vpop.f32.mrb[0].mxu0
  %v2554 = vadd.f32 %v2457, %v2553
  %v2555 = vpop.f32.mrb[0].mxu0
  %2556 = vmatprep.mubr.bf16.mxu0 %v450
  %2557 = vmatmul.mubr.bf16.gmra.mrb[0].mxu0 %v449
  %v2558 = vpop.f32.mrb[0].mxu0
  %v2559 = vadd.f32 %v2462, %v2558
  %v2560 = vpop.f32.mrb[0].mxu0
  %v2561 = vpop.f32.mrb[0].mxu0
  %v2562 = vadd.f32 %v2465, %v2561
  %v2563 = vpop.f32.mrb[0].mxu0
  %2564 = vmatprep.mubr.bf16.mxu0 %v475
  %2565 = vmatmul.mubr.bf16.gmra.mrb[0].mxu0 %v474
  %v2566 = vpop.f32.mrb[0].mxu0
  %v2567 = vadd.f32 %v2470, %v2566
  %v2568 = vpop.f32.mrb[0].mxu0
  %v2569 = vpop.f32.mrb[0].mxu0
  %v2570 = vadd.f32 %v2473, %v2569
  %v2571 = vpop.f32.mrb[0].mxu0
  %2572 = vmatprep.mubr.bf16.mxu0 %v500
  %2573 = vmatmul.mubr.bf16.gmra.mrb[0].mxu0 %v499
  %v2574 = vpop.f32.mrb[0].mxu0
  %v2575 = vadd.f32 %v2478, %v2574
  %v2576 = vpop.f32.mrb[0].mxu0
  %v2577 = vpop.f32.mrb[0].mxu0
  %v2578 = vadd.f32 %v2481, %v2577
  %v2579 = vpop.f32.mrb[0].mxu0
  %2580 = vmatprep.mubr.bf16.mxu0 %v525
  %2581 = vmatmul.mubr.bf16.gmra.mrb[0].mxu0 %v524
  %v2582 = vpop.f32.mrb[0].mxu0
  %v2583 = vadd.f32 %v2486, %v2582
  %v2584 = vpop.f32.mrb[0].mxu0
  %v2585 = vpop.f32.mrb[0].mxu0
  %v2586 = vadd.f32 %v2489, %v2585
  %v2587 = vpop.f32.mrb[0].mxu0
  %2588 = vmatprep.mubr.bf16.mxu0 %v550
  %2589 = vmatmul.mubr.bf16.gmra.mrb[0].mxu0 %v549
  %v2590 = vpop.f32.mrb[0].mxu0
  %v2591 = vadd.f32 %v2494, %v2590
  %v2592 = vpop.f32.mrb[0].mxu0
  %v2593 = vpop.f32.mrb[0].mxu0
  %v2594 = vadd.f32 %v2497, %v2593
  %v2595 = vpop.f32.mrb[0].mxu0
  %2596 = vmatprep.mubr.bf16.mxu0 %v575
  %2597 = vmatmul.mubr.bf16.gmra.mrb[0].mxu0 %v574
  %v2598 = vpop.f32.mrb[0].mxu0
  %v2599 = vadd.f32 %v2502, %v2598
  %v2600 = vpop.f32.mrb[0].mxu0
  %v2601 = vpop.f32.mrb[0].mxu0
  %v2602 = vadd.f32 %v2505, %v2601
  %v2603 = vpop.f32.mrb[0].mxu0
  %2604 = vmatprep.mubr.bf16.mxu0 %v600
  %2605 = vmatmul.mubr.bf16.gmra.mrb[0].mxu0 %v599
  %v2606 = vpop.f32.mrb[0].mxu0
  %v2607 = vadd.f32 %v2510, %v2606
  %v2608 = vpop.f32.mrb[0].mxu0
  %v2609 = vpop.f32.mrb[0].mxu0
  %v2610 = vadd.f32 %v2513, %v2609
  %v2611 = vpop.f32.mrb[0].mxu0
  %2612 = vdwg.mxu0
  %2613 = vmatprep.subr.bf16.mxu0 0
  %2614 = vmatpush1.bf16.msra.mxu0 %v1889
  %2615 = vmatprep.subr.bf16.mxu0 0
  %2616 = vmatpush1.bf16.msra.mxu0 %v1890
  %2617 = vmatprep.subr.bf16.mxu0 0
  %2618 = vmatpush1.bf16.msra.mxu0 %v1891
  %2619 = vmatprep.subr.bf16.mxu0 0
  %2620 = vmatpush1.bf16.msra.mxu0 %v1892
  %2621 = vmatprep.subr.bf16.mxu0 0
  %2622 = vmatpush1.bf16.msra.mxu0 %v1893
  %2623 = vmatprep.subr.bf16.mxu0 0
  %2624 = vmatpush1.bf16.msra.mxu0 %v1894
  %2625 = vmatprep.subr.bf16.mxu0 0
  %2626 = vmatpush1.bf16.msra.mxu0 %v1895
  %2627 = vmatprep.subr.bf16.mxu0 0
  %2628 = vmatpush1.bf16.msra.mxu0 %v1896
  %2629 = vmatprep.subr.bf16.mxu0 0
  %2630 = vmatpush1.bf16.msra.mxu0 %v1897
  %2631 = vmatprep.subr.bf16.mxu0 0
  %2632 = vmatpush1.bf16.msra.mxu0 %v1898
  %2633 = vmatprep.subr.bf16.mxu0 0
  %2634 = vmatpush1.bf16.msra.mxu0 %v1899
  %2635 = vmatprep.subr.bf16.mxu0 0
  %2636 = vmatpush1.bf16.msra.mxu0 %v1900
  %2637 = vmatprep.subr.bf16.mxu0 0
  %2638 = vmatpush1.bf16.msra.mxu0 %v1901
  %2639 = vmatprep.subr.bf16.mxu0 0
  %2640 = vmatpush1.bf16.msra.mxu0 %v1902
  %2641 = vmatprep.subr.bf16.mxu0 0
  %2642 = vmatpush1.bf16.msra.mxu0 %v1903
  %2643 = vmatprep.subr.bf16.mxu0 0
  %2644 = vmatpush1.bf16.msra.mxu0 %v1904
  %2645 = vmatprep.mubr.bf16.mxu0 %v427
  %2646 = vmatmul.mubr.bf16.gmra.mrb[0].mxu0 %v426
  %v2647 = vpop.f32.mrb[0].mxu0
  %v2648 = vadd.f32 %v2551, %v2647
  %v2649 = vpop.f32.mrb[0].mxu0
  %v2650 = vpop.f32.mrb[0].mxu0
  %v2651 = vadd.f32 %v2554, %v2650
  %v2652 = vpop.f32.mrb[0].mxu0
  %2653 = vmatprep.mubr.bf16.mxu0 %v452
  %2654 = vmatmul.mubr.bf16.gmra.mrb[0].mxu0 %v451
  %v2655 = vpop.f32.mrb[0].mxu0
  %v2656 = vadd.f32 %v2559, %v2655
  %v2657 = vpop.f32.mrb[0].mxu0
  %v2658 = vpop.f32.mrb[0].mxu0
  %v2659 = vadd.f32 %v2562, %v2658
  %v2660 = vpop.f32.mrb[0].mxu0
  %2661 = vmatprep.mubr.bf16.mxu0 %v477
  %2662 = vmatmul.mubr.bf16.gmra.mrb[0].mxu0 %v476
  %v2663 = vpop.f32.mrb[0].mxu0
  %v2664 = vadd.f32 %v2567, %v2663
  %v2665 = vpop.f32.mrb[0].mxu0
  %v2666 = vpop.f32.mrb[0].mxu0
  %v2667 = vadd.f32 %v2570, %v2666
  %v2668 = vpop.f32.mrb[0].mxu0
  %2669 = vmatprep.mubr.bf16.mxu0 %v502
  %2670 = vmatmul.mubr.bf16.gmra.mrb[0].mxu0 %v501
  %v2671 = vpop.f32.mrb[0].mxu0
  %v2672 = vadd.f32 %v2575, %v2671
  %v2673 = vpop.f32.mrb[0].mxu0
  %v2674 = vpop.f32.mrb[0].mxu0
  %v2675 = vadd.f32 %v2578, %v2674
  %v2676 = vpop.f32.mrb[0].mxu0
  %2677 = vmatprep.mubr.bf16.mxu0 %v527
  %2678 = vmatmul.mubr.bf16.gmra.mrb[0].mxu0 %v526
  %v2679 = vpop.f32.mrb[0].mxu0
  %v2680 = vadd.f32 %v2583, %v2679
  %v2681 = vpop.f32.mrb[0].mxu0
  %v2682 = vpop.f32.mrb[0].mxu0
  %v2683 = vadd.f32 %v2586, %v2682
  %v2684 = vpop.f32.mrb[0].mxu0
  %2685 = vmatprep.mubr.bf16.mxu0 %v552
  %2686 = vmatmul.mubr.bf16.gmra.mrb[0].mxu0 %v551
  %v2687 = vpop.f32.mrb[0].mxu0
  %v2688 = vadd.f32 %v2591, %v2687
  %v2689 = vpop.f32.mrb[0].mxu0
  %v2690 = vpop.f32.mrb[0].mxu0
  %v2691 = vadd.f32 %v2594, %v2690
  %v2692 = vpop.f32.mrb[0].mxu0
  %2693 = vmatprep.mubr.bf16.mxu0 %v577
  %2694 = vmatmul.mubr.bf16.gmra.mrb[0].mxu0 %v576
  %v2695 = vpop.f32.mrb[0].mxu0
  %v2696 = vadd.f32 %v2599, %v2695
  %v2697 = vpop.f32.mrb[0].mxu0
  %v2698 = vpop.f32.mrb[0].mxu0
  %v2699 = vadd.f32 %v2602, %v2698
  %v2700 = vpop.f32.mrb[0].mxu0
  %2701 = vmatprep.mubr.bf16.mxu0 %v602
  %2702 = vmatmul.mubr.bf16.gmra.mrb[0].mxu0 %v601
  %v2703 = vpop.f32.mrb[0].mxu0
  %v2704 = vadd.f32 %v2607, %v2703
  %v2705 = vpop.f32.mrb[0].mxu0
  %v2706 = vpop.f32.mrb[0].mxu0
  %v2707 = vadd.f32 %v2610, %v2706
  %v2708 = vpop.f32.mrb[0].mxu0
  %2709 = vdwg.mxu0
  %2710 = vmatprep.subr.bf16.mxu0 0
  %2711 = vmatpush1.bf16.msra.mxu0 %v1905
  %2712 = vmatprep.subr.bf16.mxu0 0
  %2713 = vmatpush1.bf16.msra.mxu0 %v1906
  %2714 = vmatprep.subr.bf16.mxu0 0
  %2715 = vmatpush1.bf16.msra.mxu0 %v1907
  %2716 = vmatprep.subr.bf16.mxu0 0
  %2717 = vmatpush1.bf16.msra.mxu0 %v1908
  %2718 = vmatprep.subr.bf16.mxu0 0
  %2719 = vmatpush1.bf16.msra.mxu0 %v1909
  %2720 = vmatprep.subr.bf16.mxu0 0
  %2721 = vmatpush1.bf16.msra.mxu0 %v1910
  %2722 = vmatprep.subr.bf16.mxu0 0
  %2723 = vmatpush1.bf16.msra.mxu0 %v1911
  %2724 = vmatprep.subr.bf16.mxu0 0
  %2725 = vmatpush1.bf16.msra.mxu0 %v1912
  %2726 = vmatprep.subr.bf16.mxu0 0
  %2727 = vmatpush1.bf16.msra.mxu0 %v1913
  %2728 = vmatprep.subr.bf16.mxu0 0
  %2729 = vmatpush1.bf16.msra.mxu0 %v1914
  %2730 = vmatprep.subr.bf16.mxu0 0
  %2731 = vmatpush1.bf16.msra.mxu0 %v1915
  %2732 = vmatprep.subr.bf16.mxu0 0
  %2733 = vmatpush1.bf16.msra.mxu0 %v1916
  %2734 = vmatprep.subr.bf16.mxu0 0
  %2735 = vmatpush1.bf16.msra.mxu0 %v1917
  %2736 = vmatprep.subr.bf16.mxu0 0
  %2737 = vmatpush1.bf16.msra.mxu0 %v1918
  %2738 = vmatprep.subr.bf16.mxu0 0
  %2739 = vmatpush1.bf16.msra.mxu0 %v1919
  %2740 = vmatprep.subr.bf16.mxu0 0
  %2741 = vmatpush1.bf16.msra.mxu0 %v1920
  %2742 = vmatprep.mubr.bf16.mxu0 %v429
  %2743 = vmatmul.mubr.bf16.gmra.mrb[0].mxu0 %v428
  %v2744 = vpop.f32.mrb[0].mxu0
  %v2745 = vadd.f32 %v2648, %v2744
  %v2746 = vpop.f32.mrb[0].mxu0
  %v2747 = vpop.f32.mrb[0].mxu0
  %v2748 = vadd.f32 %v2651, %v2747
  %v2749 = vpop.f32.mrb[0].mxu0
  %2750 = vmatprep.mubr.bf16.mxu0 %v454
  %2751 = vmatmul.mubr.bf16.gmra.mrb[0].mxu0 %v453
  %v2752 = vpop.f32.mrb[0].mxu0
  %v2753 = vadd.f32 %v2656, %v2752
  %v2754 = vpop.f32.mrb[0].mxu0
  %v2755 = vpop.f32.mrb[0].mxu0
  %v2756 = vadd.f32 %v2659, %v2755
  %v2757 = vpop.f32.mrb[0].mxu0
  %2758 = vmatprep.mubr.bf16.mxu0 %v479
  %2759 = vmatmul.mubr.bf16.gmra.mrb[0].mxu0 %v478
  %v2760 = vpop.f32.mrb[0].mxu0
  %v2761 = vadd.f32 %v2664, %v2760
  %v2762 = vpop.f32.mrb[0].mxu0
  %v2763 = vpop.f32.mrb[0].mxu0
  %v2764 = vadd.f32 %v2667, %v2763
  %v2765 = vpop.f32.mrb[0].mxu0
  %2766 = vmatprep.mubr.bf16.mxu0 %v504
  %2767 = vmatmul.mubr.bf16.gmra.mrb[0].mxu0 %v503
  %v2768 = vpop.f32.mrb[0].mxu0
  %v2769 = vadd.f32 %v2672, %v2768
  %v2770 = vpop.f32.mrb[0].mxu0
  %v2771 = vpop.f32.mrb[0].mxu0
  %v2772 = vadd.f32 %v2675, %v2771
  %v2773 = vpop.f32.mrb[0].mxu0
  %2774 = vmatprep.mubr.bf16.mxu0 %v529
  %2775 = vmatmul.mubr.bf16.gmra.mrb[0].mxu0 %v528
  %v2776 = vpop.f32.mrb[0].mxu0
  %v2777 = vadd.f32 %v2680, %v2776
  %v2778 = vpop.f32.mrb[0].mxu0
  %v2779 = vpop.f32.mrb[0].mxu0
  %v2780 = vadd.f32 %v2683, %v2779
  %v2781 = vpop.f32.mrb[0].mxu0
  %2782 = vmatprep.mubr.bf16.mxu0 %v554
  %2783 = vmatmul.mubr.bf16.gmra.mrb[0].mxu0 %v553
  %v2784 = vpop.f32.mrb[0].mxu0
  %v2785 = vadd.f32 %v2688, %v2784
  %v2786 = vpop.f32.mrb[0].mxu0
  %v2787 = vpop.f32.mrb[0].mxu0
  %v2788 = vadd.f32 %v2691, %v2787
  %v2789 = vpop.f32.mrb[0].mxu0
  %2790 = vmatprep.mubr.bf16.mxu0 %v579
  %2791 = vmatmul.mubr.bf16.gmra.mrb[0].mxu0 %v578
  %v2792 = vpop.f32.mrb[0].mxu0
  %v2793 = vadd.f32 %v2696, %v2792
  %v2794 = vpop.f32.mrb[0].mxu0
  %v2795 = vpop.f32.mrb[0].mxu0
  %v2796 = vadd.f32 %v2699, %v2795
  %v2797 = vpop.f32.mrb[0].mxu0
  %2798 = vmatprep.mubr.bf16.mxu0 %v604
  %2799 = vmatmul.mubr.bf16.gmra.mrb[0].mxu0 %v603
  %v2800 = vpop.f32.mrb[0].mxu0
  %v2801 = vadd.f32 %v2704, %v2800
  %v2802 = vpop.f32.mrb[0].mxu0
  %v2803 = vpop.f32.mrb[0].mxu0
  %v2804 = vadd.f32 %v2707, %v2803
  %v2805 = vpop.f32.mrb[0].mxu0
  %2806 = vdwg.mxu0
  %2807 = vmatprep.subr.bf16.mxu0 0
  %2808 = vmatpush1.bf16.msra.mxu0 %v1921
  %2809 = vmatprep.subr.bf16.mxu0 0
  %2810 = vmatpush1.bf16.msra.mxu0 %v1922
  %2811 = vmatprep.subr.bf16.mxu0 0
  %2812 = vmatpush1.bf16.msra.mxu0 %v1923
  %2813 = vmatprep.subr.bf16.mxu0 0
  %2814 = vmatpush1.bf16.msra.mxu0 %v1924
  %2815 = vmatprep.subr.bf16.mxu0 0
  %2816 = vmatpush1.bf16.msra.mxu0 %v1925
  %2817 = vmatprep.subr.bf16.mxu0 0
  %2818 = vmatpush1.bf16.msra.mxu0 %v1926
  %2819 = vmatprep.subr.bf16.mxu0 0
  %2820 = vmatpush1.bf16.msra.mxu0 %v1927
  %2821 = vmatprep.subr.bf16.mxu0 0
  %2822 = vmatpush1.bf16.msra.mxu0 %v1928
  %2823 = vmatprep.subr.bf16.mxu0 0
  %2824 = vmatpush1.bf16.msra.mxu0 %v1929
  %2825 = vmatprep.subr.bf16.mxu0 0
  %2826 = vmatpush1.bf16.msra.mxu0 %v1930
  %2827 = vmatprep.subr.bf16.mxu0 0
  %2828 = vmatpush1.bf16.msra.mxu0 %v1931
  %2829 = vmatprep.subr.bf16.mxu0 0
  %2830 = vmatpush1.bf16.msra.mxu0 %v1932
  %2831 = vmatprep.subr.bf16.mxu0 0
  %2832 = vmatpush1.bf16.msra.mxu0 %v1933
  %2833 = vmatprep.subr.bf16.mxu0 0
  %2834 = vmatpush1.bf16.msra.mxu0 %v1934
  %2835 = vmatprep.subr.bf16.mxu0 0
  %2836 = vmatpush1.bf16.msra.mxu0 %v1935
  %2837 = vmatprep.subr.bf16.mxu0 0
  %2838 = vmatpush1.bf16.msra.mxu0 %v1936
  %2839 = vmatprep.mubr.bf16.mxu0 %v431
  %2840 = vmatmul.mubr.bf16.gmra.mrb[0].mxu0 %v430
  %v2841 = vpop.f32.mrb[0].mxu0
  %v2842 = vadd.f32 %v2745, %v2841
  %v2843 = vpop.f32.mrb[0].mxu0
  %v2844 = vpop.f32.mrb[0].mxu0
  %v2845 = vadd.f32 %v2748, %v2844
  %v2846 = vpop.f32.mrb[0].mxu0
  %2847 = vmatprep.mubr.bf16.mxu0 %v456
  %2848 = vmatmul.mubr.bf16.gmra.mrb[0].mxu0 %v455
  %v2849 = vpop.f32.mrb[0].mxu0
  %v2850 = vadd.f32 %v2753, %v2849
  %v2851 = vpop.f32.mrb[0].mxu0
  %v2852 = vpop.f32.mrb[0].mxu0
  %v2853 = vadd.f32 %v2756, %v2852
  %v2854 = vpop.f32.mrb[0].mxu0
  %2855 = vmatprep.mubr.bf16.mxu0 %v481
  %2856 = vmatmul.mubr.bf16.gmra.mrb[0].mxu0 %v480
  %v2857 = vpop.f32.mrb[0].mxu0
  %v2858 = vadd.f32 %v2761, %v2857
  %v2859 = vpop.f32.mrb[0].mxu0
  %v2860 = vpop.f32.mrb[0].mxu0
  %v2861 = vadd.f32 %v2764, %v2860
  %v2862 = vpop.f32.mrb[0].mxu0
  %2863 = vmatprep.mubr.bf16.mxu0 %v506
  %2864 = vmatmul.mubr.bf16.gmra.mrb[0].mxu0 %v505
  %v2865 = vpop.f32.mrb[0].mxu0
  %v2866 = vadd.f32 %v2769, %v2865
  %v2867 = vpop.f32.mrb[0].mxu0
  %v2868 = vpop.f32.mrb[0].mxu0
  %v2869 = vadd.f32 %v2772, %v2868
  %v2870 = vpop.f32.mrb[0].mxu0
  %2871 = vmatprep.mubr.bf16.mxu0 %v531
  %2872 = vmatmul.mubr.bf16.gmra.mrb[0].mxu0 %v530
  %v2873 = vpop.f32.mrb[0].mxu0
  %v2874 = vadd.f32 %v2777, %v2873
  %v2875 = vpop.f32.mrb[0].mxu0
  %v2876 = vpop.f32.mrb[0].mxu0
  %v2877 = vadd.f32 %v2780, %v2876
  %v2878 = vpop.f32.mrb[0].mxu0
  %2879 = vmatprep.mubr.bf16.mxu0 %v556
  %2880 = vmatmul.mubr.bf16.gmra.mrb[0].mxu0 %v555
  %v2881 = vpop.f32.mrb[0].mxu0
  %v2882 = vadd.f32 %v2785, %v2881
  %v2883 = vpop.f32.mrb[0].mxu0
  %v2884 = vpop.f32.mrb[0].mxu0
  %v2885 = vadd.f32 %v2788, %v2884
  %v2886 = vpop.f32.mrb[0].mxu0
  %2887 = vmatprep.mubr.bf16.mxu0 %v581
  %2888 = vmatmul.mubr.bf16.gmra.mrb[0].mxu0 %v580
  %v2889 = vpop.f32.mrb[0].mxu0
  %v2890 = vadd.f32 %v2793, %v2889
  %v2891 = vpop.f32.mrb[0].mxu0
  %v2892 = vpop.f32.mrb[0].mxu0
  %v2893 = vadd.f32 %v2796, %v2892
  %v2894 = vpop.f32.mrb[0].mxu0
  %2895 = vmatprep.mubr.bf16.mxu0 %v606
  %2896 = vmatmul.mubr.bf16.gmra.mrb[0].mxu0 %v605
  %v2897 = vpop.f32.mrb[0].mxu0
  %v2898 = vadd.f32 %v2801, %v2897
  %v2899 = vpop.f32.mrb[0].mxu0
  %v2900 = vpop.f32.mrb[0].mxu0
  %v2901 = vadd.f32 %v2804, %v2900
  %v2902 = vpop.f32.mrb[0].mxu0
  %2903 = vdwg.mxu0
  %2904 = vmatprep.subr.bf16.mxu0 0
  %2905 = vmatpush1.bf16.msra.mxu0 %v1937
  %2906 = vmatprep.subr.bf16.mxu0 0
  %2907 = vmatpush1.bf16.msra.mxu0 %v1938
  %2908 = vmatprep.subr.bf16.mxu0 0
  %2909 = vmatpush1.bf16.msra.mxu0 %v1939
  %2910 = vmatprep.subr.bf16.mxu0 0
  %2911 = vmatpush1.bf16.msra.mxu0 %v1940
  %2912 = vmatprep.subr.bf16.mxu0 0
  %2913 = vmatpush1.bf16.msra.mxu0 %v1941
  %2914 = vmatprep.subr.bf16.mxu0 0
  %2915 = vmatpush1.bf16.msra.mxu0 %v1942
  %2916 = vmatprep.subr.bf16.mxu0 0
  %2917 = vmatpush1.bf16.msra.mxu0 %v1943
  %2918 = vmatprep.subr.bf16.mxu0 0
  %2919 = vmatpush1.bf16.msra.mxu0 %v1944
  %2920 = vmatprep.subr.bf16.mxu0 0
  %2921 = vmatpush1.bf16.msra.mxu0 %v1945
  %2922 = vmatprep.subr.bf16.mxu0 0
  %2923 = vmatpush1.bf16.msra.mxu0 %v1946
  %2924 = vmatprep.subr.bf16.mxu0 0
  %2925 = vmatpush1.bf16.msra.mxu0 %v1947
  %2926 = vmatprep.subr.bf16.mxu0 0
  %2927 = vmatpush1.bf16.msra.mxu0 %v1948
  %2928 = vmatprep.subr.bf16.mxu0 0
  %2929 = vmatpush1.bf16.msra.mxu0 %v1949
  %2930 = vmatprep.subr.bf16.mxu0 0
  %2931 = vmatpush1.bf16.msra.mxu0 %v1950
  %2932 = vmatprep.subr.bf16.mxu0 0
  %2933 = vmatpush1.bf16.msra.mxu0 %v1951
  %2934 = vmatprep.subr.bf16.mxu0 0
  %2935 = vmatpush1.bf16.msra.mxu0 %v1952
  %2936 = vmatprep.mubr.bf16.mxu0 %v433
  %2937 = vmatmul.mubr.bf16.gmra.mrb[0].mxu0 %v432
  %v2938 = vpop.f32.mrb[0].mxu0
  %v2939 = vadd.f32 %v2842, %v2938
  %v2940 = vpop.f32.mrb[0].mxu0
  %v2941 = vpop.f32.mrb[0].mxu0
  %v2942 = vadd.f32 %v2845, %v2941
  %v2943 = vpop.f32.mrb[0].mxu0
  %2944 = vmatprep.mubr.bf16.mxu0 %v458
  %2945 = vmatmul.mubr.bf16.gmra.mrb[0].mxu0 %v457
  %v2946 = vpop.f32.mrb[0].mxu0
  %v2947 = vadd.f32 %v2850, %v2946
  %v2948 = vpop.f32.mrb[0].mxu0
  %v2949 = vpop.f32.mrb[0].mxu0
  %v2950 = vadd.f32 %v2853, %v2949
  %v2951 = vpop.f32.mrb[0].mxu0
  %2952 = vmatprep.mubr.bf16.mxu0 %v483
  %2953 = vmatmul.mubr.bf16.gmra.mrb[0].mxu0 %v482
  %v2954 = vpop.f32.mrb[0].mxu0
  %v2955 = vadd.f32 %v2858, %v2954
  %v2956 = vpop.f32.mrb[0].mxu0
  %v2957 = vpop.f32.mrb[0].mxu0
  %v2958 = vadd.f32 %v2861, %v2957
  %v2959 = vpop.f32.mrb[0].mxu0
  %2960 = vmatprep.mubr.bf16.mxu0 %v508
  %2961 = vmatmul.mubr.bf16.gmra.mrb[0].mxu0 %v507
  %v2962 = vpop.f32.mrb[0].mxu0
  %v2963 = vadd.f32 %v2866, %v2962
  %v2964 = vpop.f32.mrb[0].mxu0
  %v2965 = vpop.f32.mrb[0].mxu0
  %v2966 = vadd.f32 %v2869, %v2965
  %v2967 = vpop.f32.mrb[0].mxu0
  %2968 = vmatprep.mubr.bf16.mxu0 %v533
  %2969 = vmatmul.mubr.bf16.gmra.mrb[0].mxu0 %v532
  %v2970 = vpop.f32.mrb[0].mxu0
  %v2971 = vadd.f32 %v2874, %v2970
  %v2972 = vpop.f32.mrb[0].mxu0
  %v2973 = vpop.f32.mrb[0].mxu0
  %v2974 = vadd.f32 %v2877, %v2973
  %v2975 = vpop.f32.mrb[0].mxu0
  %2976 = vmatprep.mubr.bf16.mxu0 %v558
  %2977 = vmatmul.mubr.bf16.gmra.mrb[0].mxu0 %v557
  %v2978 = vpop.f32.mrb[0].mxu0
  %v2979 = vadd.f32 %v2882, %v2978
  %v2980 = vpop.f32.mrb[0].mxu0
  %v2981 = vpop.f32.mrb[0].mxu0
  %v2982 = vadd.f32 %v2885, %v2981
  %v2983 = vpop.f32.mrb[0].mxu0
  %2984 = vmatprep.mubr.bf16.mxu0 %v583
  %2985 = vmatmul.mubr.bf16.gmra.mrb[0].mxu0 %v582
  %v2986 = vpop.f32.mrb[0].mxu0
  %v2987 = vadd.f32 %v2890, %v2986
  %v2988 = vpop.f32.mrb[0].mxu0
  %v2989 = vpop.f32.mrb[0].mxu0
  %v2990 = vadd.f32 %v2893, %v2989
  %v2991 = vpop.f32.mrb[0].mxu0
  %2992 = vmatprep.mubr.bf16.mxu0 %v608
  %2993 = vmatmul.mubr.bf16.gmra.mrb[0].mxu0 %v607
  %v2994 = vpop.f32.mrb[0].mxu0
  %v2995 = vadd.f32 %v2898, %v2994
  %v2996 = vpop.f32.mrb[0].mxu0
  %v2997 = vpop.f32.mrb[0].mxu0
  %v2998 = vadd.f32 %v2901, %v2997
  %v2999 = vpop.f32.mrb[0].mxu0
  %3000 = vdwg.mxu0
  %3001 = vmatprep.subr.bf16.mxu0 0
  %3002 = vmatpush1.bf16.msra.mxu0 %v1953
  %3003 = vmatprep.subr.bf16.mxu0 0
  %3004 = vmatpush1.bf16.msra.mxu0 %v1954
  %3005 = vmatprep.subr.bf16.mxu0 0
  %3006 = vmatpush1.bf16.msra.mxu0 %v1955
  %3007 = vmatprep.subr.bf16.mxu0 0
  %3008 = vmatpush1.bf16.msra.mxu0 %v1956
  %3009 = vmatprep.subr.bf16.mxu0 0
  %3010 = vmatpush1.bf16.msra.mxu0 %v1957
  %3011 = vmatprep.subr.bf16.mxu0 0
  %3012 = vmatpush1.bf16.msra.mxu0 %v1958
  %3013 = vmatprep.subr.bf16.mxu0 0
  %3014 = vmatpush1.bf16.msra.mxu0 %v1959
  %3015 = vmatprep.subr.bf16.mxu0 0
  %3016 = vmatpush1.bf16.msra.mxu0 %v1960
  %3017 = vmatprep.subr.bf16.mxu0 0
  %3018 = vmatpush1.bf16.msra.mxu0 %v1961
  %3019 = vmatprep.subr.bf16.mxu0 0
  %3020 = vmatpush1.bf16.msra.mxu0 %v1962
  %3021 = vmatprep.subr.bf16.mxu0 0
  %3022 = vmatpush1.bf16.msra.mxu0 %v1963
  %3023 = vmatprep.subr.bf16.mxu0 0
  %3024 = vmatpush1.bf16.msra.mxu0 %v1964
  %3025 = vmatprep.subr.bf16.mxu0 0
  %3026 = vmatpush1.bf16.msra.mxu0 %v1965
  %3027 = vmatprep.subr.bf16.mxu0 0
  %3028 = vmatpush1.bf16.msra.mxu0 %v1966
  %3029 = vmatprep.subr.bf16.mxu0 0
  %3030 = vmatpush1.bf16.msra.mxu0 %v1967
  %3031 = vmatprep.subr.bf16.mxu0 0
  %3032 = vmatpush1.bf16.msra.mxu0 %v1968
  %3033 = vmatprep.mubr.bf16.mxu0 %v435
  %3034 = vmatmul.mubr.bf16.gmra.mrb[0].mxu0 %v434
  %v3035 = vpop.f32.mrb[0].mxu0
  %v3036 = vadd.f32 %v2939, %v3035
  %v3037 = vpop.f32.mrb[0].mxu0
  %v3038 = vpop.f32.mrb[0].mxu0
  %v3039 = vadd.f32 %v2942, %v3038
  %v3040 = vpop.f32.mrb[0].mxu0
  %3041 = vmatprep.mubr.bf16.mxu0 %v460
  %3042 = vmatmul.mubr.bf16.gmra.mrb[0].mxu0 %v459
  %v3043 = vpop.f32.mrb[0].mxu0
  %v3044 = vadd.f32 %v2947, %v3043
  %v3045 = vpop.f32.mrb[0].mxu0
  %v3046 = vpop.f32.mrb[0].mxu0
  %v3047 = vadd.f32 %v2950, %v3046
  %v3048 = vpop.f32.mrb[0].mxu0
  %3049 = vmatprep.mubr.bf16.mxu0 %v485
  %3050 = vmatmul.mubr.bf16.gmra.mrb[0].mxu0 %v484
  %v3051 = vpop.f32.mrb[0].mxu0
  %v3052 = vadd.f32 %v2955, %v3051
  %v3053 = vpop.f32.mrb[0].mxu0
  %v3054 = vpop.f32.mrb[0].mxu0
  %v3055 = vadd.f32 %v2958, %v3054
  %v3056 = vpop.f32.mrb[0].mxu0
  %3057 = vmatprep.mubr.bf16.mxu0 %v510
  %3058 = vmatmul.mubr.bf16.gmra.mrb[0].mxu0 %v509
  %v3059 = vpop.f32.mrb[0].mxu0
  %v3060 = vadd.f32 %v2963, %v3059
  %v3061 = vpop.f32.mrb[0].mxu0
  %v3062 = vpop.f32.mrb[0].mxu0
  %v3063 = vadd.f32 %v2966, %v3062
  %v3064 = vpop.f32.mrb[0].mxu0
  %3065 = vmatprep.mubr.bf16.mxu0 %v535
  %3066 = vmatmul.mubr.bf16.gmra.mrb[0].mxu0 %v534
  %v3067 = vpop.f32.mrb[0].mxu0
  %v3068 = vadd.f32 %v2971, %v3067
  %v3069 = vpop.f32.mrb[0].mxu0
  %v3070 = vpop.f32.mrb[0].mxu0
  %v3071 = vadd.f32 %v2974, %v3070
  %v3072 = vpop.f32.mrb[0].mxu0
  %3073 = vmatprep.mubr.bf16.mxu0 %v560
  %3074 = vmatmul.mubr.bf16.gmra.mrb[0].mxu0 %v559
  %v3075 = vpop.f32.mrb[0].mxu0
  %v3076 = vadd.f32 %v2979, %v3075
  %v3077 = vpop.f32.mrb[0].mxu0
  %v3078 = vpop.f32.mrb[0].mxu0
  %v3079 = vadd.f32 %v2982, %v3078
  %v3080 = vpop.f32.mrb[0].mxu0
  %3081 = vmatprep.mubr.bf16.mxu0 %v585
  %3082 = vmatmul.mubr.bf16.gmra.mrb[0].mxu0 %v584
  %v3083 = vpop.f32.mrb[0].mxu0
  %v3084 = vadd.f32 %v2987, %v3083
  %v3085 = vpop.f32.mrb[0].mxu0
  %v3086 = vpop.f32.mrb[0].mxu0
  %v3087 = vadd.f32 %v2990, %v3086
  %v3088 = vpop.f32.mrb[0].mxu0
  %3089 = vmatprep.mubr.bf16.mxu0 %v610
  %3090 = vmatmul.mubr.bf16.gmra.mrb[0].mxu0 %v609
  %v3091 = vpop.f32.mrb[0].mxu0
  %v3092 = vadd.f32 %v2995, %v3091
  %v3093 = vpop.f32.mrb[0].mxu0
  %v3094 = vpop.f32.mrb[0].mxu0
  %v3095 = vadd.f32 %v2998, %v3094
  %v3096 = vpop.f32.mrb[0].mxu0
  %3097 = vdwg.mxu0
  %3098 = vmatprep.subr.bf16.mxu0 0
  %3099 = vmatpush1.bf16.msra.mxu0 %v1969
  %3100 = vmatprep.subr.bf16.mxu0 0
  %3101 = vmatpush1.bf16.msra.mxu0 %v1970
  %3102 = vmatprep.subr.bf16.mxu0 0
  %3103 = vmatpush1.bf16.msra.mxu0 %v1971
  %3104 = vmatprep.subr.bf16.mxu0 0
  %3105 = vmatpush1.bf16.msra.mxu0 %v1972
  %3106 = vmatprep.subr.bf16.mxu0 0
  %3107 = vmatpush1.bf16.msra.mxu0 %v1973
  %3108 = vmatprep.subr.bf16.mxu0 0
  %3109 = vmatpush1.bf16.msra.mxu0 %v1974
  %3110 = vmatprep.subr.bf16.mxu0 0
  %3111 = vmatpush1.bf16.msra.mxu0 %v1975
  %3112 = vmatprep.subr.bf16.mxu0 0
  %3113 = vmatpush1.bf16.msra.mxu0 %v1976
  %3114 = vmatprep.subr.bf16.mxu0 0
  %3115 = vmatpush1.bf16.msra.mxu0 %v1977
  %3116 = vmatprep.subr.bf16.mxu0 0
  %3117 = vmatpush1.bf16.msra.mxu0 %v1978
  %3118 = vmatprep.subr.bf16.mxu0 0
  %3119 = vmatpush1.bf16.msra.mxu0 %v1979
  %3120 = vmatprep.subr.bf16.mxu0 0
  %3121 = vmatpush1.bf16.msra.mxu0 %v1980
  %3122 = vmatprep.subr.bf16.mxu0 0
  %3123 = vmatpush1.bf16.msra.mxu0 %v1981
  %3124 = vmatprep.subr.bf16.mxu0 0
  %3125 = vmatpush1.bf16.msra.mxu0 %v1982
  %3126 = vmatprep.subr.bf16.mxu0 0
  %3127 = vmatpush1.bf16.msra.mxu0 %v1983
  %3128 = vmatprep.subr.bf16.mxu0 0
  %3129 = vmatpush1.bf16.msra.mxu0 %v1984
  %3130 = vmatprep.mubr.bf16.mxu0 %v437
  %3131 = vmatmul.mubr.bf16.gmra.mrb[0].mxu0 %v436
  %v3132 = vpop.f32.mrb[0].mxu0
  %v3133 = vadd.f32 %v3036, %v3132
  %v3134 = vpop.f32.mrb[0].mxu0
  %v3135 = vpop.f32.mrb[0].mxu0
  %v3136 = vadd.f32 %v3039, %v3135
  %v3137 = vpop.f32.mrb[0].mxu0
  %3138 = vmatprep.mubr.bf16.mxu0 %v462
  %3139 = vmatmul.mubr.bf16.gmra.mrb[0].mxu0 %v461
  %v3140 = vpop.f32.mrb[0].mxu0
  %v3141 = vadd.f32 %v3044, %v3140
  %v3142 = vpop.f32.mrb[0].mxu0
  %v3143 = vpop.f32.mrb[0].mxu0
  %v3144 = vadd.f32 %v3047, %v3143
  %v3145 = vpop.f32.mrb[0].mxu0
  %3146 = vmatprep.mubr.bf16.mxu0 %v487
  %3147 = vmatmul.mubr.bf16.gmra.mrb[0].mxu0 %v486
  %v3148 = vpop.f32.mrb[0].mxu0
  %v3149 = vadd.f32 %v3052, %v3148
  %v3150 = vpop.f32.mrb[0].mxu0
  %v3151 = vpop.f32.mrb[0].mxu0
  %v3152 = vadd.f32 %v3055, %v3151
  %v3153 = vpop.f32.mrb[0].mxu0
  %3154 = vmatprep.mubr.bf16.mxu0 %v512
  %3155 = vmatmul.mubr.bf16.gmra.mrb[0].mxu0 %v511
  %v3156 = vpop.f32.mrb[0].mxu0
  %v3157 = vadd.f32 %v3060, %v3156
  %v3158 = vpop.f32.mrb[0].mxu0
  %v3159 = vpop.f32.mrb[0].mxu0
  %v3160 = vadd.f32 %v3063, %v3159
  %v3161 = vpop.f32.mrb[0].mxu0
  %3162 = vmatprep.mubr.bf16.mxu0 %v537
  %3163 = vmatmul.mubr.bf16.gmra.mrb[0].mxu0 %v536
  %v3164 = vpop.f32.mrb[0].mxu0
  %v3165 = vadd.f32 %v3068, %v3164
  %v3166 = vpop.f32.mrb[0].mxu0
  %v3167 = vpop.f32.mrb[0].mxu0
  %v3168 = vadd.f32 %v3071, %v3167
  %v3169 = vpop.f32.mrb[0].mxu0
  %3170 = vmatprep.mubr.bf16.mxu0 %v562
  %3171 = vmatmul.mubr.bf16.gmra.mrb[0].mxu0 %v561
  %v3172 = vpop.f32.mrb[0].mxu0
  %v3173 = vadd.f32 %v3076, %v3172
  %v3174 = vpop.f32.mrb[0].mxu0
  %v3175 = vpop.f32.mrb[0].mxu0
  %v3176 = vadd.f32 %v3079, %v3175
  %v3177 = vpop.f32.mrb[0].mxu0
  %3178 = vmatprep.mubr.bf16.mxu0 %v587
  %3179 = vmatmul.mubr.bf16.gmra.mrb[0].mxu0 %v586
  %v3180 = vpop.f32.mrb[0].mxu0
  %v3181 = vadd.f32 %v3084, %v3180
  %v3182 = vpop.f32.mrb[0].mxu0
  %v3183 = vpop.f32.mrb[0].mxu0
  %v3184 = vadd.f32 %v3087, %v3183
  %v3185 = vpop.f32.mrb[0].mxu0
  %3186 = vmatprep.mubr.bf16.mxu0 %v612
  %3187 = vmatmul.mubr.bf16.gmra.mrb[0].mxu0 %v611
  %v3188 = vpop.f32.mrb[0].mxu0
  %v3189 = vadd.f32 %v3092, %v3188
  %v3190 = vpop.f32.mrb[0].mxu0
  %v3191 = vpop.f32.mrb[0].mxu0
  %v3192 = vadd.f32 %v3095, %v3191
  %v3193 = vpop.f32.mrb[0].mxu0
  %3194 = vdwg.mxu0
  %3195 = vmatprep.subr.bf16.mxu0 0
  %3196 = vmatpush1.bf16.msra.mxu0 %v1985
  %3197 = vmatprep.subr.bf16.mxu0 0
  %3198 = vmatpush1.bf16.msra.mxu0 %v1986
  %3199 = vmatprep.subr.bf16.mxu0 0
  %3200 = vmatpush1.bf16.msra.mxu0 %v1987
  %3201 = vmatprep.subr.bf16.mxu0 0
  %3202 = vmatpush1.bf16.msra.mxu0 %v1988
  %3203 = vmatprep.subr.bf16.mxu0 0
  %3204 = vmatpush1.bf16.msra.mxu0 %v1989
  %3205 = vmatprep.subr.bf16.mxu0 0
  %3206 = vmatpush1.bf16.msra.mxu0 %v1990
  %3207 = vmatprep.subr.bf16.mxu0 0
  %3208 = vmatpush1.bf16.msra.mxu0 %v1991
  %3209 = vmatprep.subr.bf16.mxu0 0
  %3210 = vmatpush1.bf16.msra.mxu0 %v1992
  %3211 = vmatprep.subr.bf16.mxu0 0
  %3212 = vmatpush1.bf16.msra.mxu0 %v1993
  %3213 = vmatprep.subr.bf16.mxu0 0
  %3214 = vmatpush1.bf16.msra.mxu0 %v1994
  %3215 = vmatprep.subr.bf16.mxu0 0
  %3216 = vmatpush1.bf16.msra.mxu0 %v1995
  %3217 = vmatprep.subr.bf16.mxu0 0
  %3218 = vmatpush1.bf16.msra.mxu0 %v1996
  %3219 = vmatprep.subr.bf16.mxu0 0
  %3220 = vmatpush1.bf16.msra.mxu0 %v1997
  %3221 = vmatprep.subr.bf16.mxu0 0
  %3222 = vmatpush1.bf16.msra.mxu0 %v1998
  %3223 = vmatprep.subr.bf16.mxu0 0
  %3224 = vmatpush1.bf16.msra.mxu0 %v1999
  %3225 = vmatprep.subr.bf16.mxu0 0
  %3226 = vmatpush1.bf16.msra.mxu0 %v2000
  %3227 = vmatprep.mubr.bf16.mxu0 %v439
  %3228 = vmatmul.mubr.bf16.gmra.mrb[0].mxu0 %v438
  %v3229 = vpop.f32.mrb[0].mxu0
  %v3230 = vadd.f32 %v3133, %v3229
  %v3231 = vpop.f32.mrb[0].mxu0
  %v3232 = vpop.f32.mrb[0].mxu0
  %v3233 = vadd.f32 %v3136, %v3232
  %v3234 = vpop.f32.mrb[0].mxu0
  %3235 = vmatprep.mubr.bf16.mxu0 %v464
  %3236 = vmatmul.mubr.bf16.gmra.mrb[0].mxu0 %v463
  %v3237 = vpop.f32.mrb[0].mxu0
  %v3238 = vadd.f32 %v3141, %v3237
  %v3239 = vpop.f32.mrb[0].mxu0
  %v3240 = vpop.f32.mrb[0].mxu0
  %v3241 = vadd.f32 %v3144, %v3240
  %v3242 = vpop.f32.mrb[0].mxu0
  %3243 = vmatprep.mubr.bf16.mxu0 %v489
  %3244 = vmatmul.mubr.bf16.gmra.mrb[0].mxu0 %v488
  %v3245 = vpop.f32.mrb[0].mxu0
  %v3246 = vadd.f32 %v3149, %v3245
  %v3247 = vpop.f32.mrb[0].mxu0
  %v3248 = vpop.f32.mrb[0].mxu0
  %v3249 = vadd.f32 %v3152, %v3248
  %v3250 = vpop.f32.mrb[0].mxu0
  %3251 = vmatprep.mubr.bf16.mxu0 %v514
  %3252 = vmatmul.mubr.bf16.gmra.mrb[0].mxu0 %v513
  %v3253 = vpop.f32.mrb[0].mxu0
  %v3254 = vadd.f32 %v3157, %v3253
  %v3255 = vpop.f32.mrb[0].mxu0
  %v3256 = vpop.f32.mrb[0].mxu0
  %v3257 = vadd.f32 %v3160, %v3256
  %v3258 = vpop.f32.mrb[0].mxu0
  %3259 = vmatprep.mubr.bf16.mxu0 %v539
  %3260 = vmatmul.mubr.bf16.gmra.mrb[0].mxu0 %v538
  %v3261 = vpop.f32.mrb[0].mxu0
  %v3262 = vadd.f32 %v3165, %v3261
  %v3263 = vpop.f32.mrb[0].mxu0
  %v3264 = vpop.f32.mrb[0].mxu0
  %v3265 = vadd.f32 %v3168, %v3264
  %v3266 = vpop.f32.mrb[0].mxu0
  %3267 = vmatprep.mubr.bf16.mxu0 %v564
  %3268 = vmatmul.mubr.bf16.gmra.mrb[0].mxu0 %v563
  %v3269 = vpop.f32.mrb[0].mxu0
  %v3270 = vadd.f32 %v3173, %v3269
  %v3271 = vpop.f32.mrb[0].mxu0
  %v3272 = vpop.f32.mrb[0].mxu0
  %v3273 = vadd.f32 %v3176, %v3272
  %v3274 = vpop.f32.mrb[0].mxu0
  %3275 = vmatprep.mubr.bf16.mxu0 %v589
  %3276 = vmatmul.mubr.bf16.gmra.mrb[0].mxu0 %v588
  %v3277 = vpop.f32.mrb[0].mxu0
  %v3278 = vadd.f32 %v3181, %v3277
  %v3279 = vpop.f32.mrb[0].mxu0
  %v3280 = vpop.f32.mrb[0].mxu0
  %v3281 = vadd.f32 %v3184, %v3280
  %v3282 = vpop.f32.mrb[0].mxu0
  %3283 = vmatprep.mubr.bf16.mxu0 %v614
  %3284 = vmatmul.mubr.bf16.gmra.mrb[0].mxu0 %v613
  %v3285 = vpop.f32.mrb[0].mxu0
  %v3286 = vadd.f32 %v3189, %v3285
  %v3287 = vpop.f32.mrb[0].mxu0
  %v3288 = vpop.f32.mrb[0].mxu0
  %v3289 = vadd.f32 %v3192, %v3288
  %v3290 = vpop.f32.mrb[0].mxu0
  %3291 = vdwg.mxu0
  %3292 = vmatprep.subr.bf16.mxu0 0
  %3293 = vmatpush1.bf16.msra.mxu0 %v2001
  %3294 = vmatprep.subr.bf16.mxu0 0
  %3295 = vmatpush1.bf16.msra.mxu0 %v2002
  %3296 = vmatprep.subr.bf16.mxu0 0
  %3297 = vmatpush1.bf16.msra.mxu0 %v2003
  %3298 = vmatprep.subr.bf16.mxu0 0
  %3299 = vmatpush1.bf16.msra.mxu0 %v2004
  %3300 = vmatprep.subr.bf16.mxu0 0
  %3301 = vmatpush1.bf16.msra.mxu0 %v2005
  %3302 = vmatprep.subr.bf16.mxu0 0
  %3303 = vmatpush1.bf16.msra.mxu0 %v2006
  %3304 = vmatprep.subr.bf16.mxu0 0
  %3305 = vmatpush1.bf16.msra.mxu0 %v2007
  %3306 = vmatprep.subr.bf16.mxu0 0
  %3307 = vmatpush1.bf16.msra.mxu0 %v2008
  %3308 = vmatprep.subr.bf16.mxu0 0
  %3309 = vmatpush1.bf16.msra.mxu0 %v2009
  %3310 = vmatprep.subr.bf16.mxu0 0
  %3311 = vmatpush1.bf16.msra.mxu0 %v2010
  %3312 = vmatprep.subr.bf16.mxu0 0
  %3313 = vmatpush1.bf16.msra.mxu0 %v2011
  %3314 = vmatprep.subr.bf16.mxu0 0
  %3315 = vmatpush1.bf16.msra.mxu0 %v2012
  %3316 = vmatprep.subr.bf16.mxu0 0
  %3317 = vmatpush1.bf16.msra.mxu0 %v2013
  %3318 = vmatprep.subr.bf16.mxu0 0
  %3319 = vmatpush1.bf16.msra.mxu0 %v2014
  %3320 = vmatprep.subr.bf16.mxu0 0
  %3321 = vmatpush1.bf16.msra.mxu0 %v2015
  %3322 = vmatprep.subr.bf16.mxu0 0
  %3323 = vmatpush1.bf16.msra.mxu0 %v2016
  %3324 = vmatprep.mubr.bf16.mxu0 %v441
  %3325 = vmatmul.mubr.bf16.gmra.mrb[0].mxu0 %v440
  %v3326 = vpop.f32.mrb[0].mxu0
  %v3327 = vadd.f32 %v3230, %v3326
  %v3328 = vpop.f32.mrb[0].mxu0
  %v3329 = vpop.f32.mrb[0].mxu0
  %v3330 = vadd.f32 %v3233, %v3329
  %v3331 = vpop.f32.mrb[0].mxu0
  %3332 = vmatprep.mubr.bf16.mxu0 %v466
  %3333 = vmatmul.mubr.bf16.gmra.mrb[0].mxu0 %v465
  %v3334 = vpop.f32.mrb[0].mxu0
  %v3335 = vadd.f32 %v3238, %v3334
  %v3336 = vpop.f32.mrb[0].mxu0
  %v3337 = vpop.f32.mrb[0].mxu0
  %v3338 = vadd.f32 %v3241, %v3337
  %v3339 = vpop.f32.mrb[0].mxu0
  %3340 = vmatprep.mubr.bf16.mxu0 %v491
  %3341 = vmatmul.mubr.bf16.gmra.mrb[0].mxu0 %v490
  %v3342 = vpop.f32.mrb[0].mxu0
  %v3343 = vadd.f32 %v3246, %v3342
  %v3344 = vpop.f32.mrb[0].mxu0
  %v3345 = vpop.f32.mrb[0].mxu0
  %v3346 = vadd.f32 %v3249, %v3345
  %v3347 = vpop.f32.mrb[0].mxu0
  %3348 = vmatprep.mubr.bf16.mxu0 %v516
  %3349 = vmatmul.mubr.bf16.gmra.mrb[0].mxu0 %v515
  %v3350 = vpop.f32.mrb[0].mxu0
  %v3351 = vadd.f32 %v3254, %v3350
  %v3352 = vpop.f32.mrb[0].mxu0
  %v3353 = vpop.f32.mrb[0].mxu0
  %v3354 = vadd.f32 %v3257, %v3353
  %v3355 = vpop.f32.mrb[0].mxu0
  %3356 = vmatprep.mubr.bf16.mxu0 %v541
  %3357 = vmatmul.mubr.bf16.gmra.mrb[0].mxu0 %v540
  %v3358 = vpop.f32.mrb[0].mxu0
  %v3359 = vadd.f32 %v3262, %v3358
  %v3360 = vpop.f32.mrb[0].mxu0
  %v3361 = vpop.f32.mrb[0].mxu0
  %v3362 = vadd.f32 %v3265, %v3361
  %v3363 = vpop.f32.mrb[0].mxu0
  %3364 = vmatprep.mubr.bf16.mxu0 %v566
  %3365 = vmatmul.mubr.bf16.gmra.mrb[0].mxu0 %v565
  %v3366 = vpop.f32.mrb[0].mxu0
  %v3367 = vadd.f32 %v3270, %v3366
  %v3368 = vpop.f32.mrb[0].mxu0
  %v3369 = vpop.f32.mrb[0].mxu0
  %v3370 = vadd.f32 %v3273, %v3369
  %v3371 = vpop.f32.mrb[0].mxu0
  %3372 = vmatprep.mubr.bf16.mxu0 %v591
  %3373 = vmatmul.mubr.bf16.gmra.mrb[0].mxu0 %v590
  %v3374 = vpop.f32.mrb[0].mxu0
  %v3375 = vadd.f32 %v3278, %v3374
  %v3376 = vpop.f32.mrb[0].mxu0
  %v3377 = vpop.f32.mrb[0].mxu0
  %v3378 = vadd.f32 %v3281, %v3377
  %v3379 = vpop.f32.mrb[0].mxu0
  %3380 = vmatprep.mubr.bf16.mxu0 %v616
  %3381 = vmatmul.mubr.bf16.gmra.mrb[0].mxu0 %v615
  %v3382 = vpop.f32.mrb[0].mxu0
  %v3383 = vadd.f32 %v3286, %v3382
  %v3384 = vpop.f32.mrb[0].mxu0
  %v3385 = vpop.f32.mrb[0].mxu0
  %v3386 = vadd.f32 %v3289, %v3385
  %v3387 = vpop.f32.mrb[0].mxu0
  %3388 = vdwg.mxu0
  %3389 = vmatprep.subr.bf16.mxu0 0
  %3390 = vmatpush1.bf16.msra.mxu0 %v2017
  %3391 = vmatprep.subr.bf16.mxu0 0
  %3392 = vmatpush1.bf16.msra.mxu0 %v2018
  %3393 = vmatprep.subr.bf16.mxu0 0
  %3394 = vmatpush1.bf16.msra.mxu0 %v2019
  %3395 = vmatprep.subr.bf16.mxu0 0
  %3396 = vmatpush1.bf16.msra.mxu0 %v2020
  %3397 = vmatprep.subr.bf16.mxu0 0
  %3398 = vmatpush1.bf16.msra.mxu0 %v2021
  %3399 = vmatprep.subr.bf16.mxu0 0
  %3400 = vmatpush1.bf16.msra.mxu0 %v2022
  %3401 = vmatprep.subr.bf16.mxu0 0
  %3402 = vmatpush1.bf16.msra.mxu0 %v2023
  %3403 = vmatprep.subr.bf16.mxu0 0
  %3404 = vmatpush1.bf16.msra.mxu0 %v2024
  %3405 = vmatprep.subr.bf16.mxu0 0
  %3406 = vmatpush1.bf16.msra.mxu0 0
  %3407 = vmatprep.subr.bf16.mxu0 0
  %3408 = vmatpush1.bf16.msra.mxu0 0
  %3409 = vmatprep.subr.bf16.mxu0 0
  %3410 = vmatpush1.bf16.msra.mxu0 0
  %3411 = vmatprep.subr.bf16.mxu0 0
  %3412 = vmatpush1.bf16.msra.mxu0 0
  %3413 = vmatprep.subr.bf16.mxu0 0
  %3414 = vmatpush1.bf16.msra.mxu0 0
  %3415 = vmatprep.subr.bf16.mxu0 0
  %3416 = vmatpush1.bf16.msra.mxu0 0
  %3417 = vmatprep.subr.bf16.mxu0 0
  %3418 = vmatpush1.bf16.msra.mxu0 0
  %3419 = vmatprep.subr.bf16.mxu0 0
  %3420 = vmatpush1.bf16.msra.mxu0 0
  %3421 = vmatprep.mubr.bf16.mxu0 0
  %3422 = vmatmul.mubr.bf16.gmra.mrb[0].mxu0 %v442
  %v3423 = vpop.f32.mrb[0].mxu0
  %v3424 = vadd.f32 %v3327, %v3423
  %v3425 = vpop.f32.mrb[0].mxu0
  %v3426 = vpop.f32.mrb[0].mxu0
  %v3427 = vadd.f32 %v3330, %v3426
  %v3428 = vpop.f32.mrb[0].mxu0
  %3429 = vmatprep.mubr.bf16.mxu0 0
  %3430 = vmatmul.mubr.bf16.gmra.mrb[0].mxu0 %v467
  %v3431 = vpop.f32.mrb[0].mxu0
  %v3432 = vadd.f32 %v3335, %v3431
  %v3433 = vpop.f32.mrb[0].mxu0
  %v3434 = vpop.f32.mrb[0].mxu0
  %v3435 = vadd.f32 %v3338, %v3434
  %v3436 = vpop.f32.mrb[0].mxu0
  %3437 = vmatprep.mubr.bf16.mxu0 0
  %3438 = vmatmul.mubr.bf16.gmra.mrb[0].mxu0 %v492
  %v3439 = vpop.f32.mrb[0].mxu0
  %v3440 = vadd.f32 %v3343, %v3439
  %v3441 = vpop.f32.mrb[0].mxu0
  %v3442 = vpop.f32.mrb[0].mxu0
  %v3443 = vadd.f32 %v3346, %v3442
  %v3444 = vpop.f32.mrb[0].mxu0
  %3445 = vmatprep.mubr.bf16.mxu0 0
  %3446 = vmatmul.mubr.bf16.gmra.mrb[0].mxu0 %v517
  %v3447 = vpop.f32.mrb[0].mxu0
  %v3448 = vadd.f32 %v3351, %v3447
  %v3449 = vpop.f32.mrb[0].mxu0
  %v3450 = vpop.f32.mrb[0].mxu0
  %v3451 = vadd.f32 %v3354, %v3450
  %v3452 = vpop.f32.mrb[0].mxu0
  %3453 = vmatprep.mubr.bf16.mxu0 0
  %3454 = vmatmul.mubr.bf16.gmra.mrb[0].mxu0 %v542
  %v3455 = vpop.f32.mrb[0].mxu0
  %v3456 = vadd.f32 %v3359, %v3455
  %v3457 = vpop.f32.mrb[0].mxu0
  %v3458 = vpop.f32.mrb[0].mxu0
  %v3459 = vadd.f32 %v3362, %v3458
  %v3460 = vpop.f32.mrb[0].mxu0
  %3461 = vmatprep.mubr.bf16.mxu0 0
  %3462 = vmatmul.mubr.bf16.gmra.mrb[0].mxu0 %v567
  %v3463 = vpop.f32.mrb[0].mxu0
  %v3464 = vadd.f32 %v3367, %v3463
  %v3465 = vpop.f32.mrb[0].mxu0
  %v3466 = vpop.f32.mrb[0].mxu0
  %v3467 = vadd.f32 %v3370, %v3466
  %v3468 = vpop.f32.mrb[0].mxu0
  %3469 = vmatprep.mubr.bf16.mxu0 0
  %3470 = vmatmul.mubr.bf16.gmra.mrb[0].mxu0 %v592
  %v3471 = vpop.f32.mrb[0].mxu0
  %v3472 = vadd.f32 %v3375, %v3471
  %v3473 = vpop.f32.mrb[0].mxu0
  %v3474 = vpop.f32.mrb[0].mxu0
  %v3475 = vadd.f32 %v3378, %v3474
  %v3476 = vpop.f32.mrb[0].mxu0
  %3477 = vmatprep.mubr.bf16.mxu0 0
  %3478 = vmatmul.mubr.bf16.gmra.mrb[0].mxu0 %v617
  %v3479 = vpop.f32.mrb[0].mxu0
  %v3480 = vadd.f32 %v3383, %v3479
  %v3481 = vpop.f32.mrb[0].mxu0
  %v3482 = vpop.f32.mrb[0].mxu0
  %v3483 = vadd.f32 %v3386, %v3482
  %v3484 = vpop.f32.mrb[0].mxu0
  %3485 = vdwg.mxu0
  %3486 = vxpose.xlu0.b32.start [1/16] %v3424, 128
  %3487 = vxpose.xlu0.b32.cont [2/16] %v3427, 128
  %3488 = vxpose.xlu0.b32.cont [3/16] %v3432, 128
  %3489 = vxpose.xlu0.b32.cont [4/16] %v3435, 128
  %3490 = vxpose.xlu0.b32.cont [5/16] %v3440, 128
  %3491 = vxpose.xlu0.b32.cont [6/16] %v3443, 128
  %3492 = vxpose.xlu0.b32.cont [7/16] %v3448, 128
  %3493 = vxpose.xlu0.b32.cont [8/16] %v3451, 128
  %3494 = vxpose.xlu0.b32.cont [9/16] %v3456, 128
  %3495 = vxpose.xlu0.b32.cont [10/16] %v3459, 128
  %3496 = vxpose.xlu0.b32.cont [11/16] %v3464, 128
  %3497 = vxpose.xlu0.b32.cont [12/16] %v3467, 128
  %3498 = vxpose.xlu0.b32.cont [13/16] %v3472, 128
  %3499 = vxpose.xlu0.b32.cont [14/16] %v3475, 128
  %3500 = vxpose.xlu0.b32.cont [15/16] %v3480, 128
  %3501 = vxpose.xlu0.b32.end [16/16] %v3483, 128
  %v3502 = vpop.trf.xlu0
  %v3503 = vpop.trf.xlu0
  %v3504 = vpop.trf.xlu0
  %v3505 = vpop.trf.xlu0
  %v3506 = vpop.trf.xlu0
  %v3507 = vpop.trf.xlu0
  %v3508 = vpop.trf.xlu0
  %v3509 = vpop.trf.xlu0
  %v3510 = vpop.trf.xlu0
  %v3511 = vpop.trf.xlu0
  %v3512 = vpop.trf.xlu0
  %v3513 = vpop.trf.xlu0
  %v3514 = vpop.trf.xlu0
  %v3515 = vpop.trf.xlu0
  %v3516 = vpop.trf.xlu0
  %v3517 = vpop.trf.xlu0
  %v3518 = vpack.c.bf16 %v3503, %v3502
  %v3519 = vpack.c.bf16 %v3505, %v3504
  %v3520 = vpack.c.bf16 %v3507, %v3506
  %v3521 = vpack.c.bf16 %v3509, %v3508
  %v3522 = vpack.c.bf16 %v3511, %v3510
  %v3523 = vpack.c.bf16 %v3513, %v3512
  %v3524 = vpack.c.bf16 %v3515, %v3514
  %v3525 = vpack.c.bf16 %v3517, %v3516
  %v3534 = vunpack.c.l.b16 %v3518
  %v3535 = vunpack.c.h.b16 %v3518
  %v3536 = vunpack.c.l.b16 %v3519
  %v3537 = vunpack.c.h.b16 %v3519
  %v3538 = vunpack.c.l.b16 %v3520
  %v3539 = vunpack.c.h.b16 %v3520
  %v3540 = vunpack.c.l.b16 %v3521
  %v3541 = vunpack.c.h.b16 %v3521
  %v3542 = vunpack.c.l.b16 %v3522
  %v3543 = vunpack.c.h.b16 %v3522
  %v3544 = vunpack.c.l.b16 %v3523
  %v3545 = vunpack.c.h.b16 %v3523
  %v3546 = vunpack.c.l.b16 %v3524
  %v3547 = vunpack.c.h.b16 %v3524
  %v3548 = vunpack.c.l.b16 %v3525
  %v3549 = vunpack.c.h.b16 %v3525
  %v3550 = vpack.c.b16 %v3534, %v3534
  %v3551 = vpack.c.b16 %v3535, %v3535
  %v3552 = vpack.c.b16 %v3536, %v3536
  %v3553 = vpack.c.b16 %v3537, %v3537
  %v3554 = vpack.c.b16 %v3538, %v3538
  %v3555 = vpack.c.b16 %v3539, %v3539
  %v3556 = vpack.c.b16 %v3540, %v3540
  %v3557 = vpack.c.b16 %v3541, %v3541
  %v3558 = vpack.c.b16 %v3542, %v3542
  %v3559 = vpack.c.b16 %v3543, %v3543
  %v3560 = vpack.c.b16 %v3544, %v3544
  %v3561 = vpack.c.b16 %v3545, %v3545
  %v3562 = vpack.c.b16 %v3546, %v3546
  %v3563 = vpack.c.b16 %v3547, %v3547
  %v3564 = vpack.c.b16 %v3548, %v3548
  %v3565 = vpack.c.b16 %v3549, %v3549
  %3582 = vst [vmem:[%s3] sm:$0xf] %v3550
  %3583 = vst [vmem:[%s3 + $0x4] sm:$0xf] %v3551
  %3584 = vst [vmem:[%s3 + $0x8] sm:$0xf] %v3552
  %3585 = vst [vmem:[%s3 + $0xc] sm:$0xf] %v3553
  %3586 = vst [vmem:[%s3 + $0x10] sm:$0xf] %v3554
  %3587 = vst [vmem:[%s3 + $0x14] sm:$0xf] %v3555
  %3588 = vst [vmem:[%s3 + $0x18] sm:$0xf] %v3556
  %3589 = vst [vmem:[%s3 + $0x1c] sm:$0xf] %v3557
  %3590 = vst [vmem:[%s3 + $0x20] sm:$0xf] %v3558
  %3591 = vst [vmem:[%s3 + $0x24] sm:$0xf] %v3559
  %3592 = vst [vmem:[%s3 + $0x28] sm:$0xf] %v3560
  %3593 = vst [vmem:[%s3 + $0x2c] sm:$0xf] %v3561
  %3594 = vst [vmem:[%s3 + $0x30] sm:$0xf] %v3562
  %3595 = vst [vmem:[%s3 + $0x34] sm:$0xf] %v3563
  %3596 = vst [vmem:[%s3 + $0x38] sm:$0xf] %v3564
  %3597 = vst [vmem:[%s3 + $0x3c] sm:$0xf] %v3565
  %s3598 = smul.u32 0, 128
  %v3599 = vlaneseq
  %v3600 = vshrl.u32 %v3599, 7
  %v3601 = vadd.s32 %v3600, 8
  %v3602 = vadd.s32 %v3600, 16
  %v3603 = vadd.s32 %v3600, 24
  %v3604 = vadd.s32 %v3600, 32
  %v3605 = vadd.s32 %v3600, 40
  %v3606 = vadd.s32 %v3600, 48
  %v3607 = vadd.s32 %v3600, 56
  %v3608 = vadd.s32 %v3600, 64
  %v3609 = vadd.s32 %v3600, 72
  %v3610 = vadd.s32 %v3600, 80
  %v3611 = vadd.s32 %v3600, 88
  %v3612 = vadd.s32 %v3600, 96
  %v3613 = vadd.s32 %v3600, 104
  %v3614 = vadd.s32 %v3600, 112
  %v3615 = vadd.s32 %v3600, 120
  %v3616 = vstv %s3598
  %v3617 = vadd.s32 %v3616, %v3600
  %v3618 = vadd.s32 %v3616, %v3601
  %v3619 = vadd.s32 %v3616, %v3602
  %v3620 = vadd.s32 %v3616, %v3603
  %v3621 = vadd.s32 %v3616, %v3604
  %v3622 = vadd.s32 %v3616, %v3605
  %v3623 = vadd.s32 %v3616, %v3606
  %v3624 = vadd.s32 %v3616, %v3607
  %v3625 = vadd.s32 %v3616, %v3608
  %v3626 = vadd.s32 %v3616, %v3609
  %v3627 = vadd.s32 %v3616, %v3610
  %v3628 = vadd.s32 %v3616, %v3611
  %v3629 = vadd.s32 %v3616, %v3612
  %v3630 = vadd.s32 %v3616, %v3613
  %v3631 = vadd.s32 %v3616, %v3614
  %v3632 = vadd.s32 %v3616, %v3615
  %vm3633 = vcmp.lt.s32.totalorder %v3617, 8
  %vm3634 = vcmp.lt.s32.totalorder %v3618, 8
  %vm3635 = vcmp.lt.s32.totalorder %v3619, 8
  %vm3636 = vcmp.lt.s32.totalorder %v3620, 8
  %vm3637 = vcmp.lt.s32.totalorder %v3621, 8
  %vm3638 = vcmp.lt.s32.totalorder %v3622, 8
  %vm3639 = vcmp.lt.s32.totalorder %v3623, 8
  %vm3640 = vcmp.lt.s32.totalorder %v3624, 8
  %vm3641 = vcmp.lt.s32.totalorder %v3625, 8
  %vm3642 = vcmp.lt.s32.totalorder %v3626, 8
  %vm3643 = vcmp.lt.s32.totalorder %v3627, 8
  %vm3644 = vcmp.lt.s32.totalorder %v3628, 8
  %vm3645 = vcmp.lt.s32.totalorder %v3629, 8
  %vm3646 = vcmp.lt.s32.totalorder %v3630, 8
  %vm3647 = vcmp.lt.s32.totalorder %v3631, 8
  %vm3648 = vcmp.lt.s32.totalorder %v3632, 8
  %v3649 = vsel %vm3633, 1, 0
  %v3650 = vsel %vm3634, 1, 0
  %v3651 = vsel %vm3635, 1, 0
  %v3652 = vsel %vm3636, 1, 0
  %v3653 = vsel %vm3637, 1, 0
  %v3654 = vsel %vm3638, 1, 0
  %v3655 = vsel %vm3639, 1, 0
  %v3656 = vsel %vm3640, 1, 0
  %v3657 = vsel %vm3641, 1, 0
  %v3658 = vsel %vm3642, 1, 0
  %v3659 = vsel %vm3643, 1, 0
  %v3660 = vsel %vm3644, 1, 0
  %v3661 = vsel %vm3645, 1, 0
  %v3662 = vsel %vm3646, 1, 0
  %v3663 = vsel %vm3647, 1, 0
  %v3664 = vsel %vm3648, 1, 0
  %vm3665 = vcmp.eq.s32.totalorder %v3649, 1
  %vm3666 = vcmp.eq.s32.totalorder %v3650, 1
  %vm3667 = vcmp.eq.s32.totalorder %v3651, 1
  %vm3668 = vcmp.eq.s32.totalorder %v3652, 1
  %vm3669 = vcmp.eq.s32.totalorder %v3653, 1
  %vm3670 = vcmp.eq.s32.totalorder %v3654, 1
  %vm3671 = vcmp.eq.s32.totalorder %v3655, 1
  %vm3672 = vcmp.eq.s32.totalorder %v3656, 1
  %vm3673 = vcmp.eq.s32.totalorder %v3657, 1
  %vm3674 = vcmp.eq.s32.totalorder %v3658, 1
  %vm3675 = vcmp.eq.s32.totalorder %v3659, 1
  %vm3676 = vcmp.eq.s32.totalorder %v3660, 1
  %vm3677 = vcmp.eq.s32.totalorder %v3661, 1
  %vm3678 = vcmp.eq.s32.totalorder %v3662, 1
  %vm3679 = vcmp.eq.s32.totalorder %v3663, 1
  %vm3680 = vcmp.eq.s32.totalorder %v3664, 1
  %v3681 = vsel %vm3665, %v3424, 0.0
  %v3682 = vsel %vm3666, %v3427, 0.0
  %v3683 = vsel %vm3667, %v3432, 0.0
  %v3684 = vsel %vm3668, %v3435, 0.0
  %v3685 = vsel %vm3669, %v3440, 0.0
  %v3686 = vsel %vm3670, %v3443, 0.0
  %v3687 = vsel %vm3671, %v3448, 0.0
  %v3688 = vsel %vm3672, %v3451, 0.0
  %v3689 = vsel %vm3673, %v3456, 0.0
  %v3690 = vsel %vm3674, %v3459, 0.0
  %v3691 = vsel %vm3675, %v3464, 0.0
  %v3692 = vsel %vm3676, %v3467, 0.0
  %v3693 = vsel %vm3677, %v3472, 0.0
  %v3694 = vsel %vm3678, %v3475, 0.0
  %v3695 = vsel %vm3679, %v3480, 0.0
  %v3696 = vsel %vm3680, %v3483, 0.0
  %v3697 = vadd.f32 %v3681, %v3682
  %v3698 = vadd.f32 %v3697, %v3683
  %v3699 = vadd.f32 %v3698, %v3684
  %v3700 = vadd.f32 %v3699, %v3685
  %v3701 = vadd.f32 %v3700, %v3686
  %v3702 = vadd.f32 %v3701, %v3687
  %v3703 = vadd.f32 %v3702, %v3688
  %v3704 = vadd.f32 %v3703, %v3689
  %v3705 = vadd.f32 %v3704, %v3690
  %v3706 = vadd.f32 %v3705, %v3691
  %v3707 = vadd.f32 %v3706, %v3692
  %v3708 = vadd.f32 %v3707, %v3693
  %v3709 = vadd.f32 %v3708, %v3694
  %v3710 = vadd.f32 %v3709, %v3695
  %v3711 = vadd.f32 %v3710, %v3696
  %v3712 = vrot.slane %v3711, 4
  %v3713 = vadd.f32 %v3711, %v3712
  %v3714 = vrot.slane %v3713, 2
  %v3715 = vadd.f32 %v3713, %v3714
  %v3716 = vrot.slane %v3715, 1
  %v3717 = vadd.f32 %v3715, %v3716
  %3718 = vst [vmem:[%s4] sm:$0x1] %v3717
  %v3719 = vmul.f32 %v3681, %v3681
  %v3720 = vmul.f32 %v3682, %v3682
  %v3721 = vmul.f32 %v3683, %v3683
  %v3722 = vmul.f32 %v3684, %v3684
  %v3723 = vmul.f32 %v3685, %v3685
  %v3724 = vmul.f32 %v3686, %v3686
  %v3725 = vmul.f32 %v3687, %v3687
  %v3726 = vmul.f32 %v3688, %v3688
  %v3727 = vmul.f32 %v3689, %v3689
  %v3728 = vmul.f32 %v3690, %v3690
  %v3729 = vmul.f32 %v3691, %v3691
  %v3730 = vmul.f32 %v3692, %v3692
  %v3731 = vmul.f32 %v3693, %v3693
  %v3732 = vmul.f32 %v3694, %v3694
  %v3733 = vmul.f32 %v3695, %v3695
  %v3734 = vmul.f32 %v3696, %v3696
  %v3735 = vadd.f32 %v3719, %v3720
  %v3736 = vadd.f32 %v3735, %v3721
  %v3737 = vadd.f32 %v3736, %v3722
  %v3738 = vadd.f32 %v3737, %v3723
  %v3739 = vadd.f32 %v3738, %v3724
  %v3740 = vadd.f32 %v3739, %v3725
  %v3741 = vadd.f32 %v3740, %v3726
  %v3742 = vadd.f32 %v3741, %v3727
  %v3743 = vadd.f32 %v3742, %v3728
  %v3744 = vadd.f32 %v3743, %v3729
  %v3745 = vadd.f32 %v3744, %v3730
  %v3746 = vadd.f32 %v3745, %v3731
  %v3747 = vadd.f32 %v3746, %v3732
  %v3748 = vadd.f32 %v3747, %v3733
  %v3749 = vadd.f32 %v3748, %v3734
  %v3750 = vrot.slane %v3749, 4
  %v3751 = vadd.f32 %v3749, %v3750
  %v3752 = vrot.slane %v3751, 2
  %v3753 = vadd.f32 %v3751, %v3752
  %v3754 = vrot.slane %v3753, 1
  %v3755 = vadd.f32 %v3753, %v3754
  %3756 = vst [vmem:[%s5] sm:$0x1] %v3755
  // Predicated region
  $region14: #{gd_forward.2} parent=0 // pred_check
    _
  $region15: #{gd_forward.2} parent=0 // pred_check_branch
    %3758 = sbr.rel (0) target = $region17
  $region16: #{gd_forward.2} parent=0 // pred_region
    _
  $region17: #{gd_forward.2} parent=0 // pred_fallthru
    _
  // Predicated region
  $region18: #{gd_forward.2} parent=0 // pred_check
    _
  $region19: #{gd_forward.2} parent=0 // pred_check_branch
    %3760 = sbr.rel (0) target = $region21
  $region20: #{gd_forward.2} parent=0 // pred_region
    _
  $region21: #{gd_forward.2} parent=0 // pred_fallthru
    _
  // Predicated region
  $region22: #{gd_forward.2} parent=0 // pred_check
    _
  $region23: #{gd_forward.2} parent=0 // pred_check_branch
    %3762 = sbr.rel (0) target = $region25
  $region24: #{gd_forward.2} parent=0 // pred_region
    _
  $region25: #{gd_forward.2} parent=0 // pred_fallthru
    _
  // Predicated region
  $region26: #{gd_forward.2} parent=0 // pred_check
    _
  $region27: #{gd_forward.2} parent=0 // pred_check_branch
    %3764 = sbr.rel (0) target = $region29
  $region28: #{gd_forward.2} parent=0 // pred_region
    _
  $region29: #{gd_forward.2} parent=0 // pred_fallthru
    _
  // Predicated region
  $region30: #{gd_forward.2} parent=0 // pred_check
    _
  $region31: #{gd_forward.2} parent=0 // pred_check_branch
    %3766 = sbr.rel (0) target = $region33
  $region32: #{gd_forward.2} parent=0 // pred_region
    _
  $region33: #{gd_forward.2} parent=0 // pred_fallthru
    _
  // Predicated region
  $region34: #{gd_forward.2} parent=0 // pred_check
    _
  $region35: #{gd_forward.2} parent=0 // pred_check_branch
    %3768 = sbr.rel (0) target = $region37
  $region36: #{gd_forward.2} parent=0 // pred_region
    _
  $region37: #{gd_forward.2} parent=0 // pred_fallthru
    _

</llo_original>
